<compile_context>
chip_gen: v7x
topology: tpu7x:2x2x1
jax: 0.10.0
libtpu: 0.0.40
codegen_flags: <defaults>
</compile_context>

<pallas_src>
import functools
import math

import jax
import jax.numpy as jnp
from jax.experimental import pallas as pl
from jax.experimental.pallas import tpu as pltpu

C = 64        # nb_filters
NF = 32       # fc1 hidden width
K1 = 25       # conv1 taps (5x5, Cin=1)
REAL = 36     # real rows of the 6x6 per-sample spatial plane
PITCH = 40    # per-sample row pitch (36 real + 4 zero pad -> 8-aligned bases)


def _pick_tile(b, cap):
    """Batch tile: the full batch, or the largest multiple of 8 dividing it <= cap."""
    if b <= cap:
        return b
    t = (cap // 8) * 8
    while t >= 8:
        if b % t == 0:
            return t
        t -= 8
    return b


# ----------------------------------------------------------------------------
# Fused kernel: conv1 -> conv2 -> conv3 -> fc1 -> classifier for one batch tile.
# ----------------------------------------------------------------------------
def _fused_kernel(p1_ref, w1_ref, b1_ref, w2_ref, b2_ref, w3_ref, b3_ref,
                  wf1_ref, bf1_ref, wc_ref, bc_ref, o_ref,
                  h1_ref, h2_ref, h3_ref, *, tb):
    rows = tb * PITCH

    # ---- conv1 (k=5, s=2): one MXU matmul per stride-parity plane
    #      [tb*40, 25] x [25, 64] + bias, ReLU.  Output lands directly in the
    #      parity-split layout conv2 consumes (VMEM scratch only).
    for p in range(4):
        a = jnp.dot(p1_ref[p], w1_ref[...], preferred_element_type=jnp.float32)
        h1_ref[p] = jnp.maximum(a + b1_ref[...], 0.0)

    # ---- conv2 (k=3, s=2): 9 shifted sub-matmuls over the 6x6 parity planes,
    #      f32 accumulation; output is a "dilated" pitch-6 plane whose valid
    #      5x5 corner feeds conv3.
    l2 = rows - 7                                   # max shift = 1*6 + 1
    acc2 = jnp.zeros((l2, C), jnp.float32)
    for i in range(3):
        for j in range(3):
            par = (i % 2) * 2 + (j % 2)
            shift = (i // 2) * 6 + (j // 2)
            acc2 = acc2 + jnp.dot(h1_ref[par, shift:shift + l2, :],
                                  w2_ref[i * 3 + j],
                                  preferred_element_type=jnp.float32)
    h2_ref[0:l2, :] = jnp.maximum(acc2 + b2_ref[...], 0.0)
    h2_ref[l2:rows, :] = jnp.zeros((rows - l2, C), jnp.float32)  # defined tail

    # ---- conv3 (k=3, s=1) on the dilated plane (same pitch-6 shift trick).
    l3 = rows - 14                                  # max shift = 2*6 + 2
    acc3 = jnp.zeros((l3, C), jnp.float32)
    for i in range(3):
        for j in range(3):
            sh = i * 6 + j
            acc3 = acc3 + jnp.dot(h2_ref[sh:sh + l3, :],
                                  w3_ref[i * 3 + j],
                                  preferred_element_type=jnp.float32)
    h3_ref[0:l3, :] = jnp.maximum(acc3 + b3_ref[...], 0.0)

    # ---- fc1 over the 9 valid conv3 positions only (K compacted 3200 -> 576):
    #      per position, a stride-PITCH row gather (one row per sample) and a
    #      [tb,64]x[64,32] matmul.  PyTorch's (C,H,W) flatten order is folded
    #      into wf1's packing, so no activation transpose/gather beyond this.
    accf = jnp.zeros((tb, NF), jnp.float32)
    for y in range(3):
        for x in range(3):
            sel = h3_ref[pl.ds(y * 6 + x, tb, stride=PITCH), :]   # [tb, 64]
            accf = accf + jnp.dot(sel, wf1_ref[y * 3 + x],
                                  preferred_element_type=jnp.float32)
    hf = jnp.maximum(accf + bf1_ref[...], 0.0)
    # TODO(synk): nn.Dropout(p=0.5) is an eval-mode identity here; no RNG mask.

    # ---- classifier
    o_ref[...] = (jnp.dot(hf, wc_ref[...], preferred_element_type=jnp.float32)
                  + bc_ref[...])


# ----------------------------------------------------------------------------
# Wrapper-side input layout (only per-call layout work left outside the kernel)
# ----------------------------------------------------------------------------
def _conv1_patches(x):
    """x: [B, 1, 28, 28] -> conv1 im2col patches [4, B*PITCH, 25] (f32).

    Plane p = (y1 % 2)*2 + (x1 % 2) holds conv1-output positions
    (y1, x1) = (2*y2 + py, 2*x2 + px); within a plane, sample b occupies rows
    [b*PITCH, b*PITCH + 36) ordered y2*6 + x2 (4 zero pad rows per sample).
    Lane k = i*5 + j is the tap value x[2*y1 + i, 2*x1 + j].
    """
    b = x.shape[0]
    img = x[:, 0, :, :].astype(jnp.float32)
    planes = []
    for py in range(2):
        for px in range(2):
            taps = []
            for i in range(5):
                for j in range(5):
                    r0, c0 = 2 * py + i, 2 * px + j
                    taps.append(img[:, r0:r0 + 21:4, c0:c0 + 21:4])   # [B, 6, 6]
            planes.append(jnp.stack(taps, axis=-1).reshape(b, REAL, K1))
    p = jnp.stack(planes, axis=0)                           # [4, B, 36, 25]
    p = jnp.pad(p, ((0, 0), (0, 0), (0, PITCH - REAL), (0, 0)))
    return p.reshape(4, b * PITCH, K1)


# ----------------------------------------------------------------------------
# One-time weight packing (hoisted OUT of the jitted forward).
# ----------------------------------------------------------------------------
def pack_params(params):
    def conv_taps(w):   # [Cout, Cin, kh, kw] -> [kh*kw, Cin, Cout]
        co, ci, kh, kw = w.shape
        return jnp.transpose(w, (2, 3, 1, 0)).reshape(kh * kw, ci, co).astype(jnp.float32)

    f32 = lambda a: jnp.asarray(a, jnp.float32)
    fc1_w = f32(params["fc1_w"])                            # [576, 32], flat idx = c*9 + y*3 + x
    return {
        "w1": conv_taps(params["conv1_w"]).reshape(K1, C),  # Cin = 1 squeezed
        "b1": f32(params["conv1_b"]).reshape(1, C),
        "w2": conv_taps(params["conv2_w"]),                 # [9, 64, 64]
        "b2": f32(params["conv2_b"]).reshape(1, C),
        "w3": conv_taps(params["conv3_w"]),                 # [9, 64, 64]
        "b3": f32(params["conv3_b"]).reshape(1, C),
        "wf1": fc1_w.reshape(C, 9, NF).transpose(1, 0, 2),  # [9, 64, 32] per-position
        "bf1": f32(params["fc1_b"]).reshape(1, NF),
        "wc": f32(params["cls_w"]),                         # [32, num_classes]
        "bc": f32(params["cls_b"]).reshape(1, -1),
    }


# ----------------------------------------------------------------------------
# Deterministic parameter init (replicates the reference uniform_scaling_).
# ----------------------------------------------------------------------------
def _uniform_scaling(key, shape):
    input_size = 1.0
    for d in shape[:-1]:
        input_size *= d
    max_val = math.sqrt(3.0 / max(input_size, 1.0))
    return jax.random.uniform(key, shape, jnp.float32, -max_val, max_val)


def init_params(key, num_classes=10):
    ks = jax.random.split(key, 10)
    return {
        "conv1_w": _uniform_scaling(ks[0], (C, 1, 5, 5)),
        "conv1_b": _uniform_scaling(ks[1], (C,)),
        "conv2_w": _uniform_scaling(ks[2], (C, C, 3, 3)),
        "conv2_b": _uniform_scaling(ks[3], (C,)),
        "conv3_w": _uniform_scaling(ks[4], (C, C, 3, 3)),
        "conv3_b": _uniform_scaling(ks[5], (C,)),
        "fc1_w": _uniform_scaling(ks[6], (576, NF)),
        "fc1_b": _uniform_scaling(ks[7], (NF,)),
        "cls_w": _uniform_scaling(ks[8], (NF, num_classes)),
        "cls_b": _uniform_scaling(ks[9], (num_classes,)),
    }


# ----------------------------------------------------------------------------
# Full forward pass (eval mode): one pallas_call.
# ----------------------------------------------------------------------------
@functools.partial(jax.jit, static_argnames=("tile_cap",))
def cnn_mnist_forward(packed, x, tile_cap=32):
    """x: [B, 1, 28, 28] (NCHW, like PyTorch) -> logits [B, num_classes] f32.

    tile_cap=32 keeps the per-step working set ~<10 MiB (fits all VMEM
    generations) and yields >=2 grid steps for B>=64 so v7x's two TensorCores
    both get work; small batches collapse to a single full-batch step.
    """
    b = x.shape[0]
    nc = packed["wc"].shape[1]
    tb = _pick_tile(b, tile_cap)
    rows = tb * PITCH

    p1 = _conv1_patches(x)                                  # [4, B*40, 25]

    kernel = functools.partial(_fused_kernel, tb=tb)

    def const(shape):
        return pl.BlockSpec(shape, lambda i: (0,) * len(shape))

    out = pl.pallas_call(
        kernel,
        out_shape=jax.ShapeDtypeStruct((b, nc), jnp.float32),
        grid_spec=pltpu.PrefetchScalarGridSpec(
            num_scalar_prefetch=0,
            grid=(b // tb,),
            in_specs=[
                pl.BlockSpec((4, rows, K1), lambda i: (0, i, 0)),  # conv1 patches
                const((K1, C)), const((1, C)),                     # w1, b1
                const((9, C, C)), const((1, C)),                   # w2, b2
                const((9, C, C)), const((1, C)),                   # w3, b3
                const((9, C, NF)), const((1, NF)),                 # wf1, bf1
                const((NF, nc)), const((1, nc)),                   # wc, bc
            ],
            out_specs=pl.BlockSpec((tb, nc), lambda i: (i, 0)),
            scratch_shapes=[
                pltpu.VMEM((4, rows, C), jnp.float32),   # h1: conv1 parity planes
                pltpu.VMEM((rows, C), jnp.float32),      # h2: conv2 dilated plane
                pltpu.VMEM((rows, C), jnp.float32),      # h3: conv3 dilated plane
            ],
        ),
        compiler_params=pltpu.CompilerParams(
            dimension_semantics=("parallel",),
            vmem_limit_bytes=32 * 1024 * 1024,
        ),
    )(p1, packed["w1"], packed["b1"], packed["w2"], packed["b2"],
      packed["w3"], packed["b3"], packed["wf1"], packed["bf1"],
      packed["wc"], packed["bc"])
    return out


if __name__ == "__main__":
    key = jax.random.PRNGKey(0)
    k_param, k_x = jax.random.split(key)
    params = init_params(k_param, num_classes=10)
    packed = pack_params(params)          # one-time packing, outside the jit
    # MNIST-shaped input (28x28 is required by fc1's 576 in_features); batch=2.
    x = jax.random.normal(k_x, (2, 1, 28, 28), dtype=jnp.float32)
    out = cnn_mnist_forward(packed, x)
    out = jax.block_until_ready(out)
    assert out.shape == (2, 10), out.shape
    assert bool(jnp.all(jnp.isfinite(out)))
    print("KERNEL_OK")
</pallas_src>

<mosaic_0001>
module attributes {stable_mosaic.version = 11 : i64} {
  func.func @_fused_kernel(%arg0: i32, %arg1: memref<4x80x25xf32, #tpu.memory_space<vmem>>, %arg2: memref<25x64xf32, #tpu.memory_space<vmem>>, %arg3: memref<1x64xf32, #tpu.memory_space<vmem>>, %arg4: memref<9x64x64xf32, #tpu.memory_space<vmem>>, %arg5: memref<1x64xf32, #tpu.memory_space<vmem>>, %arg6: memref<9x64x64xf32, #tpu.memory_space<vmem>>, %arg7: memref<1x64xf32, #tpu.memory_space<vmem>>, %arg8: memref<9x64x32xf32, #tpu.memory_space<vmem>>, %arg9: memref<1x32xf32, #tpu.memory_space<vmem>>, %arg10: memref<32x10xf32, #tpu.memory_space<vmem>>, %arg11: memref<1x10xf32, #tpu.memory_space<vmem>>, %arg12: memref<2x10xf32, #tpu.memory_space<vmem>>, %arg13: memref<4x80x64xf32, #tpu.memory_space<vmem>>, %arg14: memref<80x64xf32, #tpu.memory_space<vmem>>, %arg15: memref<80x64xf32, #tpu.memory_space<vmem>>) attributes {dimension_semantics = [#tpu.dimension_semantics<parallel>], iteration_bounds = array<i64: 1>, scalar_prefetch = 0 : i64, scratch_operands = 3 : i64, tpu.core_type = #tpu.core_type<tc>, window_params = [{transform_indices = @transform_0, window_bounds = array<i64: 4, 80, 25>}, {pipeline_mode = #tpu.pipeline_mode<synchronous>, transform_indices = @transform_1, window_bounds = array<i64: 25, 64>}, {pipeline_mode = #tpu.pipeline_mode<synchronous>, transform_indices = @transform_2, window_bounds = array<i64: 1, 64>}, {pipeline_mode = #tpu.pipeline_mode<synchronous>, transform_indices = @transform_3, window_bounds = array<i64: 9, 64, 64>}, {pipeline_mode = #tpu.pipeline_mode<synchronous>, transform_indices = @transform_4, window_bounds = array<i64: 1, 64>}, {pipeline_mode = #tpu.pipeline_mode<synchronous>, transform_indices = @transform_5, window_bounds = array<i64: 9, 64, 64>}, {pipeline_mode = #tpu.pipeline_mode<synchronous>, transform_indices = @transform_6, window_bounds = array<i64: 1, 64>}, {pipeline_mode = #tpu.pipeline_mode<synchronous>, transform_indices = @transform_7, window_bounds = array<i64: 9, 64, 32>}, {pipeline_mode = #tpu.pipeline_mode<synchronous>, transform_indices = @transform_8, window_bounds = array<i64: 1, 32>}, {pipeline_mode = #tpu.pipeline_mode<synchronous>, transform_indices = @transform_9, window_bounds = array<i64: 32, 10>}, {pipeline_mode = #tpu.pipeline_mode<synchronous>, transform_indices = @transform_10, window_bounds = array<i64: 1, 10>}, {transform_indices = @transform_11, window_bounds = array<i64: 2, 10>}]} {
    %c0 = arith.constant 0 : index
    %c0_0 = arith.constant 0 : index
    %c0_1 = arith.constant 0 : index
    %0 = vector.load %arg1[%c0, %c0_0, %c0_1] : memref<4x80x25xf32, #tpu.memory_space<vmem>>, vector<1x80x25xf32>
    %1 = vector.shape_cast %0 : vector<1x80x25xf32> to vector<80x25xf32>
    %c0_2 = arith.constant 0 : index
    %c0_3 = arith.constant 0 : index
    %2 = vector.load %arg2[%c0_2, %c0_3] : memref<25x64xf32, #tpu.memory_space<vmem>>, vector<25x64xf32>
    %cst = arith.constant dense<0.000000e+00> : vector<80x64xf32>
    %3 = tpu.matmul %1, %2, %cst {dimension_numbers = #tpu.dot_dimension_numbers<[1], [0], [0], [1], [0, 0, 1, 1], [], []>} : vector<80x25xf32>, vector<25x64xf32>, vector<80x64xf32> -> vector<80x64xf32>
    %c0_4 = arith.constant 0 : index
    %c0_5 = arith.constant 0 : index
    %4 = vector.load %arg3[%c0_4, %c0_5] : memref<1x64xf32, #tpu.memory_space<vmem>>, vector<1x64xf32>
    %5 = vector.broadcast %4 : vector<1x64xf32> to vector<80x64xf32>
    %6 = arith.addf %3, %5 : vector<80x64xf32>
    %cst_6 = arith.constant 0.000000e+00 : f32
    %7 = vector.broadcast %cst_6 : f32 to vector<80x64xf32>
    %8 = arith.maximumf %6, %7 : vector<80x64xf32>
    %c0_7 = arith.constant 0 : index
    %c0_8 = arith.constant 0 : index
    %c0_9 = arith.constant 0 : index
    %9 = vector.load %arg13[%c0_7, %c0_8, %c0_9] : memref<4x80x64xf32, #tpu.memory_space<vmem>>, vector<1x80x64xf32>
    %10 = vector.shape_cast %9 : vector<1x80x64xf32> to vector<80x64xf32>
    %11 = vector.shape_cast %8 : vector<80x64xf32> to vector<1x80x64xf32>
    tpu.vector_store %arg13[%c0_7, %c0_8, %c0_9], %11 {strides = array<i32>} : memref<4x80x64xf32, #tpu.memory_space<vmem>>, vector<1x80x64xf32>,
    %c1 = arith.constant 1 : index
    %c0_10 = arith.constant 0 : index
    %c0_11 = arith.constant 0 : index
    %12 = vector.load %arg1[%c1, %c0_10, %c0_11] : memref<4x80x25xf32, #tpu.memory_space<vmem>>, vector<1x80x25xf32>
    %13 = vector.shape_cast %12 : vector<1x80x25xf32> to vector<80x25xf32>
    %c0_12 = arith.constant 0 : index
    %c0_13 = arith.constant 0 : index
    %14 = vector.load %arg2[%c0_12, %c0_13] : memref<25x64xf32, #tpu.memory_space<vmem>>, vector<25x64xf32>
    %cst_14 = arith.constant dense<0.000000e+00> : vector<80x64xf32>
    %15 = tpu.matmul %13, %14, %cst_14 {dimension_numbers = #tpu.dot_dimension_numbers<[1], [0], [0], [1], [0, 0, 1, 1], [], []>} : vector<80x25xf32>, vector<25x64xf32>, vector<80x64xf32> -> vector<80x64xf32>
    %c0_15 = arith.constant 0 : index
    %c0_16 = arith.constant 0 : index
    %16 = vector.load %arg3[%c0_15, %c0_16] : memref<1x64xf32, #tpu.memory_space<vmem>>, vector<1x64xf32>
    %17 = vector.broadcast %16 : vector<1x64xf32> to vector<80x64xf32>
    %18 = arith.addf %15, %17 : vector<80x64xf32>
    %cst_17 = arith.constant 0.000000e+00 : f32
    %19 = vector.broadcast %cst_17 : f32 to vector<80x64xf32>
    %20 = arith.maximumf %18, %19 : vector<80x64xf32>
    %c1_18 = arith.constant 1 : index
    %c0_19 = arith.constant 0 : index
    %c0_20 = arith.constant 0 : index
    %21 = vector.load %arg13[%c1_18, %c0_19, %c0_20] : memref<4x80x64xf32, #tpu.memory_space<vmem>>, vector<1x80x64xf32>
    %22 = vector.shape_cast %21 : vector<1x80x64xf32> to vector<80x64xf32>
    %23 = vector.shape_cast %20 : vector<80x64xf32> to vector<1x80x64xf32>
    tpu.vector_store %arg13[%c1_18, %c0_19, %c0_20], %23 {strides = array<i32>} : memref<4x80x64xf32, #tpu.memory_space<vmem>>, vector<1x80x64xf32>,
    %c2 = arith.constant 2 : index
    %c0_21 = arith.constant 0 : index
    %c0_22 = arith.constant 0 : index
    %24 = vector.load %arg1[%c2, %c0_21, %c0_22] : memref<4x80x25xf32, #tpu.memory_space<vmem>>, vector<1x80x25xf32>
    %25 = vector.shape_cast %24 : vector<1x80x25xf32> to vector<80x25xf32>
    %c0_23 = arith.constant 0 : index
    %c0_24 = arith.constant 0 : index
    %26 = vector.load %arg2[%c0_23, %c0_24] : memref<25x64xf32, #tpu.memory_space<vmem>>, vector<25x64xf32>
    %cst_25 = arith.constant dense<0.000000e+00> : vector<80x64xf32>
    %27 = tpu.matmul %25, %26, %cst_25 {dimension_numbers = #tpu.dot_dimension_numbers<[1], [0], [0], [1], [0, 0, 1, 1], [], []>} : vector<80x25xf32>, vector<25x64xf32>, vector<80x64xf32> -> vector<80x64xf32>
    %c0_26 = arith.constant 0 : index
    %c0_27 = arith.constant 0 : index
    %28 = vector.load %arg3[%c0_26, %c0_27] : memref<1x64xf32, #tpu.memory_space<vmem>>, vector<1x64xf32>
    %29 = vector.broadcast %28 : vector<1x64xf32> to vector<80x64xf32>
    %30 = arith.addf %27, %29 : vector<80x64xf32>
    %cst_28 = arith.constant 0.000000e+00 : f32
    %31 = vector.broadcast %cst_28 : f32 to vector<80x64xf32>
    %32 = arith.maximumf %30, %31 : vector<80x64xf32>
    %c2_29 = arith.constant 2 : index
    %c0_30 = arith.constant 0 : index
    %c0_31 = arith.constant 0 : index
    %33 = vector.load %arg13[%c2_29, %c0_30, %c0_31] : memref<4x80x64xf32, #tpu.memory_space<vmem>>, vector<1x80x64xf32>
    %34 = vector.shape_cast %33 : vector<1x80x64xf32> to vector<80x64xf32>
    %35 = vector.shape_cast %32 : vector<80x64xf32> to vector<1x80x64xf32>
    tpu.vector_store %arg13[%c2_29, %c0_30, %c0_31], %35 {strides = array<i32>} : memref<4x80x64xf32, #tpu.memory_space<vmem>>, vector<1x80x64xf32>,
    %c3 = arith.constant 3 : index
    %c0_32 = arith.constant 0 : index
    %c0_33 = arith.constant 0 : index
    %36 = vector.load %arg1[%c3, %c0_32, %c0_33] : memref<4x80x25xf32, #tpu.memory_space<vmem>>, vector<1x80x25xf32>
    %37 = vector.shape_cast %36 : vector<1x80x25xf32> to vector<80x25xf32>
    %c0_34 = arith.constant 0 : index
    %c0_35 = arith.constant 0 : index
    %38 = vector.load %arg2[%c0_34, %c0_35] : memref<25x64xf32, #tpu.memory_space<vmem>>, vector<25x64xf32>
    %cst_36 = arith.constant dense<0.000000e+00> : vector<80x64xf32>
    %39 = tpu.matmul %37, %38, %cst_36 {dimension_numbers = #tpu.dot_dimension_numbers<[1], [0], [0], [1], [0, 0, 1, 1], [], []>} : vector<80x25xf32>, vector<25x64xf32>, vector<80x64xf32> -> vector<80x64xf32>
    %c0_37 = arith.constant 0 : index
    %c0_38 = arith.constant 0 : index
    %40 = vector.load %arg3[%c0_37, %c0_38] : memref<1x64xf32, #tpu.memory_space<vmem>>, vector<1x64xf32>
    %41 = vector.broadcast %40 : vector<1x64xf32> to vector<80x64xf32>
    %42 = arith.addf %39, %41 : vector<80x64xf32>
    %cst_39 = arith.constant 0.000000e+00 : f32
    %43 = vector.broadcast %cst_39 : f32 to vector<80x64xf32>
    %44 = arith.maximumf %42, %43 : vector<80x64xf32>
    %c3_40 = arith.constant 3 : index
    %c0_41 = arith.constant 0 : index
    %c0_42 = arith.constant 0 : index
    %45 = vector.load %arg13[%c3_40, %c0_41, %c0_42] : memref<4x80x64xf32, #tpu.memory_space<vmem>>, vector<1x80x64xf32>
    %46 = vector.shape_cast %45 : vector<1x80x64xf32> to vector<80x64xf32>
    %47 = vector.shape_cast %44 : vector<80x64xf32> to vector<1x80x64xf32>
    tpu.vector_store %arg13[%c3_40, %c0_41, %c0_42], %47 {strides = array<i32>} : memref<4x80x64xf32, #tpu.memory_space<vmem>>, vector<1x80x64xf32>,
    %cst_43 = arith.constant 0.000000e+00 : f32
    %48 = vector.broadcast %cst_43 : f32 to vector<73x64xf32>
    %c0_44 = arith.constant 0 : index
    %c0_45 = arith.constant 0 : index
    %c0_46 = arith.constant 0 : index
    %49 = vector.load %arg13[%c0_44, %c0_45, %c0_46] : memref<4x80x64xf32, #tpu.memory_space<vmem>>, vector<1x73x64xf32>
    %50 = vector.shape_cast %49 : vector<1x73x64xf32> to vector<73x64xf32>
    %c0_47 = arith.constant 0 : index
    %c0_48 = arith.constant 0 : index
    %c0_49 = arith.constant 0 : index
    %51 = vector.load %arg4[%c0_47, %c0_48, %c0_49] : memref<9x64x64xf32, #tpu.memory_space<vmem>>, vector<1x64x64xf32>
    %52 = vector.shape_cast %51 : vector<1x64x64xf32> to vector<64x64xf32>
    %cst_50 = arith.constant dense<0.000000e+00> : vector<73x64xf32>
    %53 = tpu.matmul %50, %52, %cst_50 {dimension_numbers = #tpu.dot_dimension_numbers<[1], [0], [0], [1], [0, 0, 1, 1], [], []>} : vector<73x64xf32>, vector<64x64xf32>, vector<73x64xf32> -> vector<73x64xf32>
    %54 = arith.addf %48, %53 : vector<73x64xf32>
    %c1_51 = arith.constant 1 : index
    %c0_52 = arith.constant 0 : index
    %c0_53 = arith.constant 0 : index
    %55 = vector.load %arg13[%c1_51, %c0_52, %c0_53] : memref<4x80x64xf32, #tpu.memory_space<vmem>>, vector<1x73x64xf32>
    %56 = vector.shape_cast %55 : vector<1x73x64xf32> to vector<73x64xf32>
    %c1_54 = arith.constant 1 : index
    %c0_55 = arith.constant 0 : index
    %c0_56 = arith.constant 0 : index
    %57 = vector.load %arg4[%c1_54, %c0_55, %c0_56] : memref<9x64x64xf32, #tpu.memory_space<vmem>>, vector<1x64x64xf32>
    %58 = vector.shape_cast %57 : vector<1x64x64xf32> to vector<64x64xf32>
    %cst_57 = arith.constant dense<0.000000e+00> : vector<73x64xf32>
    %59 = tpu.matmul %56, %58, %cst_57 {dimension_numbers = #tpu.dot_dimension_numbers<[1], [0], [0], [1], [0, 0, 1, 1], [], []>} : vector<73x64xf32>, vector<64x64xf32>, vector<73x64xf32> -> vector<73x64xf32>
    %60 = arith.addf %54, %59 : vector<73x64xf32>
    %c0_58 = arith.constant 0 : index
    %c1_59 = arith.constant 1 : index
    %c0_60 = arith.constant 0 : index
    %61 = vector.load %arg13[%c0_58, %c1_59, %c0_60] : memref<4x80x64xf32, #tpu.memory_space<vmem>>, vector<1x73x64xf32>
    %62 = vector.shape_cast %61 : vector<1x73x64xf32> to vector<73x64xf32>
    %c2_61 = arith.constant 2 : index
    %c0_62 = arith.constant 0 : index
    %c0_63 = arith.constant 0 : index
    %63 = vector.load %arg4[%c2_61, %c0_62, %c0_63] : memref<9x64x64xf32, #tpu.memory_space<vmem>>, vector<1x64x64xf32>
    %64 = vector.shape_cast %63 : vector<1x64x64xf32> to vector<64x64xf32>
    %cst_64 = arith.constant dense<0.000000e+00> : vector<73x64xf32>
    %65 = tpu.matmul %62, %64, %cst_64 {dimension_numbers = #tpu.dot_dimension_numbers<[1], [0], [0], [1], [0, 0, 1, 1], [], []>} : vector<73x64xf32>, vector<64x64xf32>, vector<73x64xf32> -> vector<73x64xf32>
    %66 = arith.addf %60, %65 : vector<73x64xf32>
    %c2_65 = arith.constant 2 : index
    %c0_66 = arith.constant 0 : index
    %c0_67 = arith.constant 0 : index
    %67 = vector.load %arg13[%c2_65, %c0_66, %c0_67] : memref<4x80x64xf32, #tpu.memory_space<vmem>>, vector<1x73x64xf32>
    %68 = vector.shape_cast %67 : vector<1x73x64xf32> to vector<73x64xf32>
    %c3_68 = arith.constant 3 : index
    %c0_69 = arith.constant 0 : index
    %c0_70 = arith.constant 0 : index
    %69 = vector.load %arg4[%c3_68, %c0_69, %c0_70] : memref<9x64x64xf32, #tpu.memory_space<vmem>>, vector<1x64x64xf32>
    %70 = vector.shape_cast %69 : vector<1x64x64xf32> to vector<64x64xf32>
    %cst_71 = arith.constant dense<0.000000e+00> : vector<73x64xf32>
    %71 = tpu.matmul %68, %70, %cst_71 {dimension_numbers = #tpu.dot_dimension_numbers<[1], [0], [0], [1], [0, 0, 1, 1], [], []>} : vector<73x64xf32>, vector<64x64xf32>, vector<73x64xf32> -> vector<73x64xf32>
    %72 = arith.addf %66, %71 : vector<73x64xf32>
    %c3_72 = arith.constant 3 : index
    %c0_73 = arith.constant 0 : index
    %c0_74 = arith.constant 0 : index
    %73 = vector.load %arg13[%c3_72, %c0_73, %c0_74] : memref<4x80x64xf32, #tpu.memory_space<vmem>>, vector<1x73x64xf32>
    %74 = vector.shape_cast %73 : vector<1x73x64xf32> to vector<73x64xf32>
    %c4 = arith.constant 4 : index
    %c0_75 = arith.constant 0 : index
    %c0_76 = arith.constant 0 : index
    %75 = vector.load %arg4[%c4, %c0_75, %c0_76] : memref<9x64x64xf32, #tpu.memory_space<vmem>>, vector<1x64x64xf32>
    %76 = vector.shape_cast %75 : vector<1x64x64xf32> to vector<64x64xf32>
    %cst_77 = arith.constant dense<0.000000e+00> : vector<73x64xf32>
    %77 = tpu.matmul %74, %76, %cst_77 {dimension_numbers = #tpu.dot_dimension_numbers<[1], [0], [0], [1], [0, 0, 1, 1], [], []>} : vector<73x64xf32>, vector<64x64xf32>, vector<73x64xf32> -> vector<73x64xf32>
    %78 = arith.addf %72, %77 : vector<73x64xf32>
    %c2_78 = arith.constant 2 : index
    %c1_79 = arith.constant 1 : index
    %c0_80 = arith.constant 0 : index
    %79 = vector.load %arg13[%c2_78, %c1_79, %c0_80] : memref<4x80x64xf32, #tpu.memory_space<vmem>>, vector<1x73x64xf32>
    %80 = vector.shape_cast %79 : vector<1x73x64xf32> to vector<73x64xf32>
    %c5 = arith.constant 5 : index
    %c0_81 = arith.constant 0 : index
    %c0_82 = arith.constant 0 : index
    %81 = vector.load %arg4[%c5, %c0_81, %c0_82] : memref<9x64x64xf32, #tpu.memory_space<vmem>>, vector<1x64x64xf32>
    %82 = vector.shape_cast %81 : vector<1x64x64xf32> to vector<64x64xf32>
    %cst_83 = arith.constant dense<0.000000e+00> : vector<73x64xf32>
    %83 = tpu.matmul %80, %82, %cst_83 {dimension_numbers = #tpu.dot_dimension_numbers<[1], [0], [0], [1], [0, 0, 1, 1], [], []>} : vector<73x64xf32>, vector<64x64xf32>, vector<73x64xf32> -> vector<73x64xf32>
    %84 = arith.addf %78, %83 : vector<73x64xf32>
    %c0_84 = arith.constant 0 : index
    %c6 = arith.constant 6 : index
    %c0_85 = arith.constant 0 : index
    %85 = vector.load %arg13[%c0_84, %c6, %c0_85] : memref<4x80x64xf32, #tpu.memory_space<vmem>>, vector<1x73x64xf32>
    %86 = vector.shape_cast %85 : vector<1x73x64xf32> to vector<73x64xf32>
    %c6_86 = arith.constant 6 : index
    %c0_87 = arith.constant 0 : index
    %c0_88 = arith.constant 0 : index
    %87 = vector.load %arg4[%c6_86, %c0_87, %c0_88] : memref<9x64x64xf32, #tpu.memory_space<vmem>>, vector<1x64x64xf32>
    %88 = vector.shape_cast %87 : vector<1x64x64xf32> to vector<64x64xf32>
    %cst_89 = arith.constant dense<0.000000e+00> : vector<73x64xf32>
    %89 = tpu.matmul %86, %88, %cst_89 {dimension_numbers = #tpu.dot_dimension_numbers<[1], [0], [0], [1], [0, 0, 1, 1], [], []>} : vector<73x64xf32>, vector<64x64xf32>, vector<73x64xf32> -> vector<73x64xf32>
    %90 = arith.addf %84, %89 : vector<73x64xf32>
    %c1_90 = arith.constant 1 : index
    %c6_91 = arith.constant 6 : index
    %c0_92 = arith.constant 0 : index
    %91 = vector.load %arg13[%c1_90, %c6_91, %c0_92] : memref<4x80x64xf32, #tpu.memory_space<vmem>>, vector<1x73x64xf32>
    %92 = vector.shape_cast %91 : vector<1x73x64xf32> to vector<73x64xf32>
    %c7 = arith.constant 7 : index
    %c0_93 = arith.constant 0 : index
    %c0_94 = arith.constant 0 : index
    %93 = vector.load %arg4[%c7, %c0_93, %c0_94] : memref<9x64x64xf32, #tpu.memory_space<vmem>>, vector<1x64x64xf32>
    %94 = vector.shape_cast %93 : vector<1x64x64xf32> to vector<64x64xf32>
    %cst_95 = arith.constant dense<0.000000e+00> : vector<73x64xf32>
    %95 = tpu.matmul %92, %94, %cst_95 {dimension_numbers = #tpu.dot_dimension_numbers<[1], [0], [0], [1], [0, 0, 1, 1], [], []>} : vector<73x64xf32>, vector<64x64xf32>, vector<73x64xf32> -> vector<73x64xf32>
    %96 = arith.addf %90, %95 : vector<73x64xf32>
    %c0_96 = arith.constant 0 : index
    %c7_97 = arith.constant 7 : index
    %c0_98 = arith.constant 0 : index
    %97 = vector.load %arg13[%c0_96, %c7_97, %c0_98] : memref<4x80x64xf32, #tpu.memory_space<vmem>>, vector<1x73x64xf32>
    %98 = vector.shape_cast %97 : vector<1x73x64xf32> to vector<73x64xf32>
    %c8 = arith.constant 8 : index
    %c0_99 = arith.constant 0 : index
    %c0_100 = arith.constant 0 : index
    %99 = vector.load %arg4[%c8, %c0_99, %c0_100] : memref<9x64x64xf32, #tpu.memory_space<vmem>>, vector<1x64x64xf32>
    %100 = vector.shape_cast %99 : vector<1x64x64xf32> to vector<64x64xf32>
    %cst_101 = arith.constant dense<0.000000e+00> : vector<73x64xf32>
    %101 = tpu.matmul %98, %100, %cst_101 {dimension_numbers = #tpu.dot_dimension_numbers<[1], [0], [0], [1], [0, 0, 1, 1], [], []>} : vector<73x64xf32>, vector<64x64xf32>, vector<73x64xf32> -> vector<73x64xf32>
    %102 = arith.addf %96, %101 : vector<73x64xf32>
    %c0_102 = arith.constant 0 : index
    %c0_103 = arith.constant 0 : index
    %103 = vector.load %arg5[%c0_102, %c0_103] : memref<1x64xf32, #tpu.memory_space<vmem>>, vector<1x64xf32>
    %104 = vector.broadcast %103 : vector<1x64xf32> to vector<73x64xf32>
    %105 = arith.addf %102, %104 : vector<73x64xf32>
    %cst_104 = arith.constant 0.000000e+00 : f32
    %106 = vector.broadcast %cst_104 : f32 to vector<73x64xf32>
    %107 = arith.maximumf %105, %106 : vector<73x64xf32>
    %c0_105 = arith.constant 0 : index
    %c0_106 = arith.constant 0 : index
    %108 = vector.load %arg14[%c0_105, %c0_106] : memref<80x64xf32, #tpu.memory_space<vmem>>, vector<73x64xf32>
    tpu.vector_store %arg14[%c0_105, %c0_106], %107 {strides = array<i32>} : memref<80x64xf32, #tpu.memory_space<vmem>>, vector<73x64xf32>,
    %cst_107 = arith.constant 0.000000e+00 : f32
    %109 = vector.broadcast %cst_107 : f32 to vector<7x64xf32>
    %c73 = arith.constant 73 : index
    %c0_108 = arith.constant 0 : index
    %110 = vector.load %arg14[%c73, %c0_108] : memref<80x64xf32, #tpu.memory_space<vmem>>, vector<7x64xf32>
    tpu.vector_store %arg14[%c73, %c0_108], %109 {strides = array<i32>} : memref<80x64xf32, #tpu.memory_space<vmem>>, vector<7x64xf32>,
    %cst_109 = arith.constant 0.000000e+00 : f32
    %111 = vector.broadcast %cst_109 : f32 to vector<66x64xf32>
    %c0_110 = arith.constant 0 : index
    %c0_111 = arith.constant 0 : index
    %112 = vector.load %arg14[%c0_110, %c0_111] : memref<80x64xf32, #tpu.memory_space<vmem>>, vector<66x64xf32>
    %c0_112 = arith.constant 0 : index
    %c0_113 = arith.constant 0 : index
    %c0_114 = arith.constant 0 : index
    %113 = vector.load %arg6[%c0_112, %c0_113, %c0_114] : memref<9x64x64xf32, #tpu.memory_space<vmem>>, vector<1x64x64xf32>
    %114 = vector.shape_cast %113 : vector<1x64x64xf32> to vector<64x64xf32>
    %cst_115 = arith.constant dense<0.000000e+00> : vector<66x64xf32>
    %115 = tpu.matmul %112, %114, %cst_115 {dimension_numbers = #tpu.dot_dimension_numbers<[1], [0], [0], [1], [0, 0, 1, 1], [], []>} : vector<66x64xf32>, vector<64x64xf32>, vector<66x64xf32> -> vector<66x64xf32>
    %116 = arith.addf %111, %115 : vector<66x64xf32>
    %c1_116 = arith.constant 1 : index
    %c0_117 = arith.constant 0 : index
    %117 = vector.load %arg14[%c1_116, %c0_117] : memref<80x64xf32, #tpu.memory_space<vmem>>, vector<66x64xf32>
    %c1_118 = arith.constant 1 : index
    %c0_119 = arith.constant 0 : index
    %c0_120 = arith.constant 0 : index
    %118 = vector.load %arg6[%c1_118, %c0_119, %c0_120] : memref<9x64x64xf32, #tpu.memory_space<vmem>>, vector<1x64x64xf32>
    %119 = vector.shape_cast %118 : vector<1x64x64xf32> to vector<64x64xf32>
    %cst_121 = arith.constant dense<0.000000e+00> : vector<66x64xf32>
    %120 = tpu.matmul %117, %119, %cst_121 {dimension_numbers = #tpu.dot_dimension_numbers<[1], [0], [0], [1], [0, 0, 1, 1], [], []>} : vector<66x64xf32>, vector<64x64xf32>, vector<66x64xf32> -> vector<66x64xf32>
    %121 = arith.addf %116, %120 : vector<66x64xf32>
    %c2_122 = arith.constant 2 : index
    %c0_123 = arith.constant 0 : index
    %122 = vector.load %arg14[%c2_122, %c0_123] : memref<80x64xf32, #tpu.memory_space<vmem>>, vector<66x64xf32>
    %c2_124 = arith.constant 2 : index
    %c0_125 = arith.constant 0 : index
    %c0_126 = arith.constant 0 : index
    %123 = vector.load %arg6[%c2_124, %c0_125, %c0_126] : memref<9x64x64xf32, #tpu.memory_space<vmem>>, vector<1x64x64xf32>
    %124 = vector.shape_cast %123 : vector<1x64x64xf32> to vector<64x64xf32>
    %cst_127 = arith.constant dense<0.000000e+00> : vector<66x64xf32>
    %125 = tpu.matmul %122, %124, %cst_127 {dimension_numbers = #tpu.dot_dimension_numbers<[1], [0], [0], [1], [0, 0, 1, 1], [], []>} : vector<66x64xf32>, vector<64x64xf32>, vector<66x64xf32> -> vector<66x64xf32>
    %126 = arith.addf %121, %125 : vector<66x64xf32>
    %c6_128 = arith.constant 6 : index
    %c0_129 = arith.constant 0 : index
    %127 = vector.load %arg14[%c6_128, %c0_129] : memref<80x64xf32, #tpu.memory_space<vmem>>, vector<66x64xf32>
    %c3_130 = arith.constant 3 : index
    %c0_131 = arith.constant 0 : index
    %c0_132 = arith.constant 0 : index
    %128 = vector.load %arg6[%c3_130, %c0_131, %c0_132] : memref<9x64x64xf32, #tpu.memory_space<vmem>>, vector<1x64x64xf32>
    %129 = vector.shape_cast %128 : vector<1x64x64xf32> to vector<64x64xf32>
    %cst_133 = arith.constant dense<0.000000e+00> : vector<66x64xf32>
    %130 = tpu.matmul %127, %129, %cst_133 {dimension_numbers = #tpu.dot_dimension_numbers<[1], [0], [0], [1], [0, 0, 1, 1], [], []>} : vector<66x64xf32>, vector<64x64xf32>, vector<66x64xf32> -> vector<66x64xf32>
    %131 = arith.addf %126, %130 : vector<66x64xf32>
    %c7_134 = arith.constant 7 : index
    %c0_135 = arith.constant 0 : index
    %132 = vector.load %arg14[%c7_134, %c0_135] : memref<80x64xf32, #tpu.memory_space<vmem>>, vector<66x64xf32>
    %c4_136 = arith.constant 4 : index
    %c0_137 = arith.constant 0 : index
    %c0_138 = arith.constant 0 : index
    %133 = vector.load %arg6[%c4_136, %c0_137, %c0_138] : memref<9x64x64xf32, #tpu.memory_space<vmem>>, vector<1x64x64xf32>
    %134 = vector.shape_cast %133 : vector<1x64x64xf32> to vector<64x64xf32>
    %cst_139 = arith.constant dense<0.000000e+00> : vector<66x64xf32>
    %135 = tpu.matmul %132, %134, %cst_139 {dimension_numbers = #tpu.dot_dimension_numbers<[1], [0], [0], [1], [0, 0, 1, 1], [], []>} : vector<66x64xf32>, vector<64x64xf32>, vector<66x64xf32> -> vector<66x64xf32>
    %136 = arith.addf %131, %135 : vector<66x64xf32>
    %c8_140 = arith.constant 8 : index
    %c0_141 = arith.constant 0 : index
    %137 = vector.load %arg14[%c8_140, %c0_141] : memref<80x64xf32, #tpu.memory_space<vmem>>, vector<66x64xf32>
    %c5_142 = arith.constant 5 : index
    %c0_143 = arith.constant 0 : index
    %c0_144 = arith.constant 0 : index
    %138 = vector.load %arg6[%c5_142, %c0_143, %c0_144] : memref<9x64x64xf32, #tpu.memory_space<vmem>>, vector<1x64x64xf32>
    %139 = vector.shape_cast %138 : vector<1x64x64xf32> to vector<64x64xf32>
    %cst_145 = arith.constant dense<0.000000e+00> : vector<66x64xf32>
    %140 = tpu.matmul %137, %139, %cst_145 {dimension_numbers = #tpu.dot_dimension_numbers<[1], [0], [0], [1], [0, 0, 1, 1], [], []>} : vector<66x64xf32>, vector<64x64xf32>, vector<66x64xf32> -> vector<66x64xf32>
    %141 = arith.addf %136, %140 : vector<66x64xf32>
    %c12 = arith.constant 12 : index
    %c0_146 = arith.constant 0 : index
    %142 = vector.load %arg14[%c12, %c0_146] : memref<80x64xf32, #tpu.memory_space<vmem>>, vector<66x64xf32>
    %c6_147 = arith.constant 6 : index
    %c0_148 = arith.constant 0 : index
    %c0_149 = arith.constant 0 : index
    %143 = vector.load %arg6[%c6_147, %c0_148, %c0_149] : memref<9x64x64xf32, #tpu.memory_space<vmem>>, vector<1x64x64xf32>
    %144 = vector.shape_cast %143 : vector<1x64x64xf32> to vector<64x64xf32>
    %cst_150 = arith.constant dense<0.000000e+00> : vector<66x64xf32>
    %145 = tpu.matmul %142, %144, %cst_150 {dimension_numbers = #tpu.dot_dimension_numbers<[1], [0], [0], [1], [0, 0, 1, 1], [], []>} : vector<66x64xf32>, vector<64x64xf32>, vector<66x64xf32> -> vector<66x64xf32>
    %146 = arith.addf %141, %145 : vector<66x64xf32>
    %c13 = arith.constant 13 : index
    %c0_151 = arith.constant 0 : index
    %147 = vector.load %arg14[%c13, %c0_151] : memref<80x64xf32, #tpu.memory_space<vmem>>, vector<66x64xf32>
    %c7_152 = arith.constant 7 : index
    %c0_153 = arith.constant 0 : index
    %c0_154 = arith.constant 0 : index
    %148 = vector.load %arg6[%c7_152, %c0_153, %c0_154] : memref<9x64x64xf32, #tpu.memory_space<vmem>>, vector<1x64x64xf32>
    %149 = vector.shape_cast %148 : vector<1x64x64xf32> to vector<64x64xf32>
    %cst_155 = arith.constant dense<0.000000e+00> : vector<66x64xf32>
    %150 = tpu.matmul %147, %149, %cst_155 {dimension_numbers = #tpu.dot_dimension_numbers<[1], [0], [0], [1], [0, 0, 1, 1], [], []>} : vector<66x64xf32>, vector<64x64xf32>, vector<66x64xf32> -> vector<66x64xf32>
    %151 = arith.addf %146, %150 : vector<66x64xf32>
    %c14 = arith.constant 14 : index
    %c0_156 = arith.constant 0 : index
    %152 = vector.load %arg14[%c14, %c0_156] : memref<80x64xf32, #tpu.memory_space<vmem>>, vector<66x64xf32>
    %c8_157 = arith.constant 8 : index
    %c0_158 = arith.constant 0 : index
    %c0_159 = arith.constant 0 : index
    %153 = vector.load %arg6[%c8_157, %c0_158, %c0_159] : memref<9x64x64xf32, #tpu.memory_space<vmem>>, vector<1x64x64xf32>
    %154 = vector.shape_cast %153 : vector<1x64x64xf32> to vector<64x64xf32>
    %cst_160 = arith.constant dense<0.000000e+00> : vector<66x64xf32>
    %155 = tpu.matmul %152, %154, %cst_160 {dimension_numbers = #tpu.dot_dimension_numbers<[1], [0], [0], [1], [0, 0, 1, 1], [], []>} : vector<66x64xf32>, vector<64x64xf32>, vector<66x64xf32> -> vector<66x64xf32>
    %156 = arith.addf %151, %155 : vector<66x64xf32>
    %c0_161 = arith.constant 0 : index
    %c0_162 = arith.constant 0 : index
    %157 = vector.load %arg7[%c0_161, %c0_162] : memref<1x64xf32, #tpu.memory_space<vmem>>, vector<1x64xf32>
    %158 = vector.broadcast %157 : vector<1x64xf32> to vector<66x64xf32>
    %159 = arith.addf %156, %158 : vector<66x64xf32>
    %cst_163 = arith.constant 0.000000e+00 : f32
    %160 = vector.broadcast %cst_163 : f32 to vector<66x64xf32>
    %161 = arith.maximumf %159, %160 : vector<66x64xf32>
    %c0_164 = arith.constant 0 : index
    %c0_165 = arith.constant 0 : index
    %162 = vector.load %arg15[%c0_164, %c0_165] : memref<80x64xf32, #tpu.memory_space<vmem>>, vector<66x64xf32>
    tpu.vector_store %arg15[%c0_164, %c0_165], %161 {strides = array<i32>} : memref<80x64xf32, #tpu.memory_space<vmem>>, vector<66x64xf32>,
    %cst_166 = arith.constant 0.000000e+00 : f32
    %163 = vector.broadcast %cst_166 : f32 to vector<2x32xf32>
    %c0_167 = arith.constant 0 : index
    %c0_168 = arith.constant 0 : index
    %164 = tpu.strided_load %arg15[%c0_167, %c0_168] {strides = array<i32: 40, 1>} : memref<80x64xf32, #tpu.memory_space<vmem>>, vector<2x64xf32>
    %c0_169 = arith.constant 0 : index
    %c0_170 = arith.constant 0 : index
    %c0_171 = arith.constant 0 : index
    %165 = vector.load %arg8[%c0_169, %c0_170, %c0_171] : memref<9x64x32xf32, #tpu.memory_space<vmem>>, vector<1x64x32xf32>
    %166 = vector.shape_cast %165 : vector<1x64x32xf32> to vector<64x32xf32>
    %cst_172 = arith.constant dense<0.000000e+00> : vector<2x32xf32>
    %167 = tpu.matmul %164, %166, %cst_172 {dimension_numbers = #tpu.dot_dimension_numbers<[1], [0], [0], [1], [0, 0, 1, 1], [], []>} : vector<2x64xf32>, vector<64x32xf32>, vector<2x32xf32> -> vector<2x32xf32>
    %168 = arith.addf %163, %167 : vector<2x32xf32>
    %c1_173 = arith.constant 1 : index
    %c0_174 = arith.constant 0 : index
    %169 = tpu.strided_load %arg15[%c1_173, %c0_174] {strides = array<i32: 40, 1>} : memref<80x64xf32, #tpu.memory_space<vmem>>, vector<2x64xf32>
    %c1_175 = arith.constant 1 : index
    %c0_176 = arith.constant 0 : index
    %c0_177 = arith.constant 0 : index
    %170 = vector.load %arg8[%c1_175, %c0_176, %c0_177] : memref<9x64x32xf32, #tpu.memory_space<vmem>>, vector<1x64x32xf32>
    %171 = vector.shape_cast %170 : vector<1x64x32xf32> to vector<64x32xf32>
    %cst_178 = arith.constant dense<0.000000e+00> : vector<2x32xf32>
    %172 = tpu.matmul %169, %171, %cst_178 {dimension_numbers = #tpu.dot_dimension_numbers<[1], [0], [0], [1], [0, 0, 1, 1], [], []>} : vector<2x64xf32>, vector<64x32xf32>, vector<2x32xf32> -> vector<2x32xf32>
    %173 = arith.addf %168, %172 : vector<2x32xf32>
    %c2_179 = arith.constant 2 : index
    %c0_180 = arith.constant 0 : index
    %174 = tpu.strided_load %arg15[%c2_179, %c0_180] {strides = array<i32: 40, 1>} : memref<80x64xf32, #tpu.memory_space<vmem>>, vector<2x64xf32>
    %c2_181 = arith.constant 2 : index
    %c0_182 = arith.constant 0 : index
    %c0_183 = arith.constant 0 : index
    %175 = vector.load %arg8[%c2_181, %c0_182, %c0_183] : memref<9x64x32xf32, #tpu.memory_space<vmem>>, vector<1x64x32xf32>
    %176 = vector.shape_cast %175 : vector<1x64x32xf32> to vector<64x32xf32>
    %cst_184 = arith.constant dense<0.000000e+00> : vector<2x32xf32>
    %177 = tpu.matmul %174, %176, %cst_184 {dimension_numbers = #tpu.dot_dimension_numbers<[1], [0], [0], [1], [0, 0, 1, 1], [], []>} : vector<2x64xf32>, vector<64x32xf32>, vector<2x32xf32> -> vector<2x32xf32>
    %178 = arith.addf %173, %177 : vector<2x32xf32>
    %c6_185 = arith.constant 6 : index
    %c0_186 = arith.constant 0 : index
    %179 = tpu.strided_load %arg15[%c6_185, %c0_186] {strides = array<i32: 40, 1>} : memref<80x64xf32, #tpu.memory_space<vmem>>, vector<2x64xf32>
    %c3_187 = arith.constant 3 : index
    %c0_188 = arith.constant 0 : index
    %c0_189 = arith.constant 0 : index
    %180 = vector.load %arg8[%c3_187, %c0_188, %c0_189] : memref<9x64x32xf32, #tpu.memory_space<vmem>>, vector<1x64x32xf32>
    %181 = vector.shape_cast %180 : vector<1x64x32xf32> to vector<64x32xf32>
    %cst_190 = arith.constant dense<0.000000e+00> : vector<2x32xf32>
    %182 = tpu.matmul %179, %181, %cst_190 {dimension_numbers = #tpu.dot_dimension_numbers<[1], [0], [0], [1], [0, 0, 1, 1], [], []>} : vector<2x64xf32>, vector<64x32xf32>, vector<2x32xf32> -> vector<2x32xf32>
    %183 = arith.addf %178, %182 : vector<2x32xf32>
    %c7_191 = arith.constant 7 : index
    %c0_192 = arith.constant 0 : index
    %184 = tpu.strided_load %arg15[%c7_191, %c0_192] {strides = array<i32: 40, 1>} : memref<80x64xf32, #tpu.memory_space<vmem>>, vector<2x64xf32>
    %c4_193 = arith.constant 4 : index
    %c0_194 = arith.constant 0 : index
    %c0_195 = arith.constant 0 : index
    %185 = vector.load %arg8[%c4_193, %c0_194, %c0_195] : memref<9x64x32xf32, #tpu.memory_space<vmem>>, vector<1x64x32xf32>
    %186 = vector.shape_cast %185 : vector<1x64x32xf32> to vector<64x32xf32>
    %cst_196 = arith.constant dense<0.000000e+00> : vector<2x32xf32>
    %187 = tpu.matmul %184, %186, %cst_196 {dimension_numbers = #tpu.dot_dimension_numbers<[1], [0], [0], [1], [0, 0, 1, 1], [], []>} : vector<2x64xf32>, vector<64x32xf32>, vector<2x32xf32> -> vector<2x32xf32>
    %188 = arith.addf %183, %187 : vector<2x32xf32>
    %c8_197 = arith.constant 8 : index
    %c0_198 = arith.constant 0 : index
    %189 = tpu.strided_load %arg15[%c8_197, %c0_198] {strides = array<i32: 40, 1>} : memref<80x64xf32, #tpu.memory_space<vmem>>, vector<2x64xf32>
    %c5_199 = arith.constant 5 : index
    %c0_200 = arith.constant 0 : index
    %c0_201 = arith.constant 0 : index
    %190 = vector.load %arg8[%c5_199, %c0_200, %c0_201] : memref<9x64x32xf32, #tpu.memory_space<vmem>>, vector<1x64x32xf32>
    %191 = vector.shape_cast %190 : vector<1x64x32xf32> to vector<64x32xf32>
    %cst_202 = arith.constant dense<0.000000e+00> : vector<2x32xf32>
    %192 = tpu.matmul %189, %191, %cst_202 {dimension_numbers = #tpu.dot_dimension_numbers<[1], [0], [0], [1], [0, 0, 1, 1], [], []>} : vector<2x64xf32>, vector<64x32xf32>, vector<2x32xf32> -> vector<2x32xf32>
    %193 = arith.addf %188, %192 : vector<2x32xf32>
    %c12_203 = arith.constant 12 : index
    %c0_204 = arith.constant 0 : index
    %194 = tpu.strided_load %arg15[%c12_203, %c0_204] {strides = array<i32: 40, 1>} : memref<80x64xf32, #tpu.memory_space<vmem>>, vector<2x64xf32>
    %c6_205 = arith.constant 6 : index
    %c0_206 = arith.constant 0 : index
    %c0_207 = arith.constant 0 : index
    %195 = vector.load %arg8[%c6_205, %c0_206, %c0_207] : memref<9x64x32xf32, #tpu.memory_space<vmem>>, vector<1x64x32xf32>
    %196 = vector.shape_cast %195 : vector<1x64x32xf32> to vector<64x32xf32>
    %cst_208 = arith.constant dense<0.000000e+00> : vector<2x32xf32>
    %197 = tpu.matmul %194, %196, %cst_208 {dimension_numbers = #tpu.dot_dimension_numbers<[1], [0], [0], [1], [0, 0, 1, 1], [], []>} : vector<2x64xf32>, vector<64x32xf32>, vector<2x32xf32> -> vector<2x32xf32>
    %198 = arith.addf %193, %197 : vector<2x32xf32>
    %c13_209 = arith.constant 13 : index
    %c0_210 = arith.constant 0 : index
    %199 = tpu.strided_load %arg15[%c13_209, %c0_210] {strides = array<i32: 40, 1>} : memref<80x64xf32, #tpu.memory_space<vmem>>, vector<2x64xf32>
    %c7_211 = arith.constant 7 : index
    %c0_212 = arith.constant 0 : index
    %c0_213 = arith.constant 0 : index
    %200 = vector.load %arg8[%c7_211, %c0_212, %c0_213] : memref<9x64x32xf32, #tpu.memory_space<vmem>>, vector<1x64x32xf32>
    %201 = vector.shape_cast %200 : vector<1x64x32xf32> to vector<64x32xf32>
    %cst_214 = arith.constant dense<0.000000e+00> : vector<2x32xf32>
    %202 = tpu.matmul %199, %201, %cst_214 {dimension_numbers = #tpu.dot_dimension_numbers<[1], [0], [0], [1], [0, 0, 1, 1], [], []>} : vector<2x64xf32>, vector<64x32xf32>, vector<2x32xf32> -> vector<2x32xf32>
    %203 = arith.addf %198, %202 : vector<2x32xf32>
    %c14_215 = arith.constant 14 : index
    %c0_216 = arith.constant 0 : index
    %204 = tpu.strided_load %arg15[%c14_215, %c0_216] {strides = array<i32: 40, 1>} : memref<80x64xf32, #tpu.memory_space<vmem>>, vector<2x64xf32>
    %c8_217 = arith.constant 8 : index
    %c0_218 = arith.constant 0 : index
    %c0_219 = arith.constant 0 : index
    %205 = vector.load %arg8[%c8_217, %c0_218, %c0_219] : memref<9x64x32xf32, #tpu.memory_space<vmem>>, vector<1x64x32xf32>
    %206 = vector.shape_cast %205 : vector<1x64x32xf32> to vector<64x32xf32>
    %cst_220 = arith.constant dense<0.000000e+00> : vector<2x32xf32>
    %207 = tpu.matmul %204, %206, %cst_220 {dimension_numbers = #tpu.dot_dimension_numbers<[1], [0], [0], [1], [0, 0, 1, 1], [], []>} : vector<2x64xf32>, vector<64x32xf32>, vector<2x32xf32> -> vector<2x32xf32>
    %208 = arith.addf %203, %207 : vector<2x32xf32>
    %c0_221 = arith.constant 0 : index
    %c0_222 = arith.constant 0 : index
    %209 = vector.load %arg9[%c0_221, %c0_222] : memref<1x32xf32, #tpu.memory_space<vmem>>, vector<1x32xf32>
    %210 = vector.broadcast %209 : vector<1x32xf32> to vector<2x32xf32>
    %211 = arith.addf %208, %210 : vector<2x32xf32>
    %cst_223 = arith.constant 0.000000e+00 : f32
    %212 = vector.broadcast %cst_223 : f32 to vector<2x32xf32>
    %213 = arith.maximumf %211, %212 : vector<2x32xf32>
    %c0_224 = arith.constant 0 : index
    %c0_225 = arith.constant 0 : index
    %214 = vector.load %arg10[%c0_224, %c0_225] : memref<32x10xf32, #tpu.memory_space<vmem>>, vector<32x10xf32>
    %cst_226 = arith.constant dense<0.000000e+00> : vector<2x10xf32>
    %215 = tpu.matmul %213, %214, %cst_226 {dimension_numbers = #tpu.dot_dimension_numbers<[1], [0], [0], [1], [0, 0, 1, 1], [], []>} : vector<2x32xf32>, vector<32x10xf32>, vector<2x10xf32> -> vector<2x10xf32>
    %c0_227 = arith.constant 0 : index
    %c0_228 = arith.constant 0 : index
    %216 = vector.load %arg11[%c0_227, %c0_228] : memref<1x10xf32, #tpu.memory_space<vmem>>, vector<1x10xf32>
    %217 = vector.broadcast %216 : vector<1x10xf32> to vector<2x10xf32>
    %218 = arith.addf %215, %217 : vector<2x10xf32>
    %c0_229 = arith.constant 0 : index
    %c0_230 = arith.constant 0 : index
    %219 = vector.load %arg12[%c0_229, %c0_230] : memref<2x10xf32, #tpu.memory_space<vmem>>, vector<2x10xf32>
    tpu.vector_store %arg12[%c0_229, %c0_230], %218 {strides = array<i32>} : memref<2x10xf32, #tpu.memory_space<vmem>>, vector<2x10xf32>,
    return
  }
  func.func @transform_0(%arg0: i32) -> (i32, i32, i32) {
    %c0_i32 = arith.constant 0 : i32
    %c0_i32_0 = arith.constant 0 : i32
    %c0_i32_1 = arith.constant 0 : i32
    return %c0_i32, %arg0, %c0_i32_0 : i32, i32, i32
  }
  func.func @transform_1(%arg0: i32) -> (i32, i32) {
    %c0_i32 = arith.constant 0 : i32
    %c0_i32_0 = arith.constant 0 : i32
    %c0_i32_1 = arith.constant 0 : i32
    return %c0_i32, %c0_i32_0 : i32, i32
  }
  func.func @transform_2(%arg0: i32) -> (i32, i32) {
    %c0_i32 = arith.constant 0 : i32
    %c0_i32_0 = arith.constant 0 : i32
    %c0_i32_1 = arith.constant 0 : i32
    return %c0_i32, %c0_i32_0 : i32, i32
  }
  func.func @transform_3(%arg0: i32) -> (i32, i32, i32) {
    %c0_i32 = arith.constant 0 : i32
    %c0_i32_0 = arith.constant 0 : i32
    %c0_i32_1 = arith.constant 0 : i32
    %c0_i32_2 = arith.constant 0 : i32
    return %c0_i32, %c0_i32_0, %c0_i32_1 : i32, i32, i32
  }
  func.func @transform_4(%arg0: i32) -> (i32, i32) {
    %c0_i32 = arith.constant 0 : i32
    %c0_i32_0 = arith.constant 0 : i32
    %c0_i32_1 = arith.constant 0 : i32
    return %c0_i32, %c0_i32_0 : i32, i32
  }
  func.func @transform_5(%arg0: i32) -> (i32, i32, i32) {
    %c0_i32 = arith.constant 0 : i32
    %c0_i32_0 = arith.constant 0 : i32
    %c0_i32_1 = arith.constant 0 : i32
    %c0_i32_2 = arith.constant 0 : i32
    return %c0_i32, %c0_i32_0, %c0_i32_1 : i32, i32, i32
  }
  func.func @transform_6(%arg0: i32) -> (i32, i32) {
    %c0_i32 = arith.constant 0 : i32
    %c0_i32_0 = arith.constant 0 : i32
    %c0_i32_1 = arith.constant 0 : i32
    return %c0_i32, %c0_i32_0 : i32, i32
  }
  func.func @transform_7(%arg0: i32) -> (i32, i32, i32) {
    %c0_i32 = arith.constant 0 : i32
    %c0_i32_0 = arith.constant 0 : i32
    %c0_i32_1 = arith.constant 0 : i32
    %c0_i32_2 = arith.constant 0 : i32
    return %c0_i32, %c0_i32_0, %c0_i32_1 : i32, i32, i32
  }
  func.func @transform_8(%arg0: i32) -> (i32, i32) {
    %c0_i32 = arith.constant 0 : i32
    %c0_i32_0 = arith.constant 0 : i32
    %c0_i32_1 = arith.constant 0 : i32
    return %c0_i32, %c0_i32_0 : i32, i32
  }
  func.func @transform_9(%arg0: i32) -> (i32, i32) {
    %c0_i32 = arith.constant 0 : i32
    %c0_i32_0 = arith.constant 0 : i32
    %c0_i32_1 = arith.constant 0 : i32
    return %c0_i32, %c0_i32_0 : i32, i32
  }
  func.func @transform_10(%arg0: i32) -> (i32, i32) {
    %c0_i32 = arith.constant 0 : i32
    %c0_i32_0 = arith.constant 0 : i32
    %c0_i32_1 = arith.constant 0 : i32
    return %c0_i32, %c0_i32_0 : i32, i32
  }
  func.func @transform_11(%arg0: i32) -> (i32, i32) {
    %c0_i32 = arith.constant 0 : i32
    %c0_i32_0 = arith.constant 0 : i32
    return %arg0, %c0_i32 : i32, i32
  }
}

</mosaic_0001>

<llo_original>
// kernel: cnn_mnist_forward.1
$region0: #{cnn_mnist_forward.1}
  #allocation0 [shape = 'u32[]', space=smem, size = 0x4, offset = 0x4, fixed_abs, tag = 'smem constant byte address 0x4 - core index']
  #allocation1 [shape = 'u32[144,128]{1,0:T(1,128)}', space=vmem, size = 0x12000, scoped, tag = 'internal scratch']
  #allocation2 [shape = 'f32[4,80,64]{2,1,0:T(8,128)}', space=vmem, size = 0x28000, scoped, tag = 'scratch operand']
  #allocation3 [shape = 'f32[80,64]{1,0:T(8,128)}', space=vmem, size = 0xa000, scoped, tag = 'scratch operand']
  #allocation4 [shape = 'f32[80,64]{1,0:T(8,128)}', space=vmem, size = 0xa000, scoped, tag = 'scratch operand']
  %s0 = inlined_call_operand.vmem [shape: f32[4,80,25], index: 0, kind: input, shape index: {}]
  %s1 = inlined_call_operand.vmem [shape: f32[25,64], index: 1, kind: input, shape index: {}]
  %s2 = inlined_call_operand.vmem [shape: f32[1,64], index: 2, kind: input, shape index: {}]
  %s3 = inlined_call_operand.vmem [shape: f32[9,64,64], index: 3, kind: input, shape index: {}]
  %s4 = inlined_call_operand.vmem [shape: f32[1,64], index: 4, kind: input, shape index: {}]
  %s5 = inlined_call_operand.vmem [shape: f32[9,64,64], index: 5, kind: input, shape index: {}]
  %s6 = inlined_call_operand.vmem [shape: f32[1,64], index: 6, kind: input, shape index: {}]
  %s7 = inlined_call_operand.vmem [shape: f32[9,64,32], index: 7, kind: input, shape index: {}]
  %s8 = inlined_call_operand.vmem [shape: f32[1,32], index: 8, kind: input, shape index: {}]
  %s9 = inlined_call_operand.vmem [shape: f32[32,10], index: 9, kind: input, shape index: {}]
  %s10 = inlined_call_operand.vmem [shape: f32[1,10], index: 10, kind: input, shape index: {}]
  %s11 = inlined_call_operand.hbm [shape: f32[2,10], index: 11, kind: output, shape index: {}]
  %s12 = sld [smem:[#allocation0]]
  $region54: #{cnn_mnist_forward.1} parent=0
    _
  %s14 = ssub.s32 1, %s12
  %s15 = scalar_select 0, %s14, %s12
  $region1: #{cnn_mnist_forward.1} parent=0
    #allocation5 [shape = 'u8[1024]{0}', space=vmem, size = 0x400, scoped, tag = 'output window, operand 0, single buffered']
    #allocation6 [shape = 's32[1]{0}', space=sflag, size = 0x4, scoped, tag = 'scoped memory for cnn_mnist_forward.1']
    %16 = vsyncpa [#allocation6], 0
    // Predicated region
    $region2: #{cnn_mnist_forward.1} parent=1 // pred_check
      _
    $region3: #{cnn_mnist_forward.1} parent=1 // pred_check_branch
      %18 = sbr.rel (0) target = $region5
    $region4: #{cnn_mnist_forward.1} parent=1 // pred_region
      _
    $region5: #{cnn_mnist_forward.1} parent=1 // pred_fallthru
      _
    // Predicated region
    $region6: #{cnn_mnist_forward.1} parent=1 // pred_check
      _
    $region7: #{cnn_mnist_forward.1} parent=1 // pred_check_branch
      %20 = sbr.rel (0) target = $region9
    $region8: #{cnn_mnist_forward.1} parent=1 // pred_region
      _
    $region9: #{cnn_mnist_forward.1} parent=1 // pred_fallthru
      _
    // Predicated region
    $region10: #{cnn_mnist_forward.1} parent=1 // pred_check
      _
    $region11: #{cnn_mnist_forward.1} parent=1 // pred_check_branch
      %22 = sbr.rel (0) target = $region13
    $region12: #{cnn_mnist_forward.1} parent=1 // pred_region
      _
    $region13: #{cnn_mnist_forward.1} parent=1 // pred_fallthru
      _
    // Predicated region
    $region14: #{cnn_mnist_forward.1} parent=1 // pred_check
      _
    $region15: #{cnn_mnist_forward.1} parent=1 // pred_check_branch
      %24 = sbr.rel (0) target = $region17
    $region16: #{cnn_mnist_forward.1} parent=1 // pred_region
      _
    $region17: #{cnn_mnist_forward.1} parent=1 // pred_fallthru
      _
    // Predicated region
    $region18: #{cnn_mnist_forward.1} parent=1 // pred_check
      _
    $region19: #{cnn_mnist_forward.1} parent=1 // pred_check_branch
      %26 = sbr.rel (0) target = $region21
    $region20: #{cnn_mnist_forward.1} parent=1 // pred_region
      _
    $region21: #{cnn_mnist_forward.1} parent=1 // pred_fallthru
      _
    // Predicated region
    $region22: #{cnn_mnist_forward.1} parent=1 // pred_check
      _
    $region23: #{cnn_mnist_forward.1} parent=1 // pred_check_branch
      %28 = sbr.rel (0) target = $region25
    $region24: #{cnn_mnist_forward.1} parent=1 // pred_region
      _
    $region25: #{cnn_mnist_forward.1} parent=1 // pred_fallthru
      _
    // Predicated region
    $region26: #{cnn_mnist_forward.1} parent=1 // pred_check
      _
    $region27: #{cnn_mnist_forward.1} parent=1 // pred_check_branch
      %30 = sbr.rel (0) target = $region29
    $region28: #{cnn_mnist_forward.1} parent=1 // pred_region
      _
    $region29: #{cnn_mnist_forward.1} parent=1 // pred_fallthru
      _
    // Predicated region
    $region30: #{cnn_mnist_forward.1} parent=1 // pred_check
      _
    $region31: #{cnn_mnist_forward.1} parent=1 // pred_check_branch
      %32 = sbr.rel (0) target = $region33
    $region32: #{cnn_mnist_forward.1} parent=1 // pred_region
      _
    $region33: #{cnn_mnist_forward.1} parent=1 // pred_fallthru
      _
    // Predicated region
    $region34: #{cnn_mnist_forward.1} parent=1 // pred_check
      _
    $region35: #{cnn_mnist_forward.1} parent=1 // pred_check_branch
      %34 = sbr.rel (0) target = $region37
    $region36: #{cnn_mnist_forward.1} parent=1 // pred_region
      _
    $region37: #{cnn_mnist_forward.1} parent=1 // pred_fallthru
      _
    // Predicated region
    $region38: #{cnn_mnist_forward.1} parent=1 // pred_check
      _
    $region39: #{cnn_mnist_forward.1} parent=1 // pred_check_branch
      %36 = sbr.rel (0) target = $region41
    $region40: #{cnn_mnist_forward.1} parent=1 // pred_region
      _
    $region41: #{cnn_mnist_forward.1} parent=1 // pred_fallthru
      _
    // Predicated region
    $region42: #{cnn_mnist_forward.1} parent=1 // pred_check
      _
    $region43: #{cnn_mnist_forward.1} parent=1 // pred_check_branch
      %38 = sbr.rel (0) target = $region45
    $region44: #{cnn_mnist_forward.1} parent=1 // pred_region
      _
    $region45: #{cnn_mnist_forward.1} parent=1 // pred_fallthru
      _
    %v39 = vld [vmem:[%s0] sm:$0xff]
    %v40 = vld [vmem:[%s0 + $0x8] sm:$0xff]
    %v41 = vld [vmem:[%s0 + $0x10] sm:$0xff]
    %v42 = vld [vmem:[%s0 + $0x18] sm:$0xff]
    %v43 = vld [vmem:[%s0 + $0x20] sm:$0xff]
    %v44 = vld [vmem:[%s0 + $0x28] sm:$0xff]
    %v45 = vld [vmem:[%s0 + $0x30] sm:$0xff]
    %v46 = vld [vmem:[%s0 + $0x38] sm:$0xff]
    %v47 = vld [vmem:[%s0 + $0x40] sm:$0xff]
    %v48 = vld [vmem:[%s0 + $0x48] sm:$0xff]
    %v49 = vld [vmem:[%s1] sm:$0xff]
    %v50 = vld [vmem:[%s1 + $0x8] sm:$0xff]
    %v51 = vld [vmem:[%s1 + $0x10] sm:$0xff]
    %v52 = vld [vmem:[%s1 + $0x18] sm:$0x1]
    %v53 = vld [vmem:[%s2] sm:$0x1]
    %v55 = vlaneseq
    %v56 = vshrl.u32 %v55, 7
    %v57 = vsub.s32 0, %v56
    %v58 = vrot.slane %v53, %v57
    %vm60 = vcmask 203776
    %v62 = vsel %vm60, %v39, 0
    %v65 = vsel %vm60, %v40, 0
    %v68 = vsel %vm60, %v41, 0
    %v71 = vsel %vm60, %v42, 0
    %v74 = vsel %vm60, %v43, 0
    %v77 = vsel %vm60, %v44, 0
    %v80 = vsel %vm60, %v45, 0
    %v83 = vsel %vm60, %v46, 0
    %v86 = vsel %vm60, %v47, 0
    %v89 = vsel %vm60, %v48, 0
    %vm91 = vcmask 1040384
    %v93 = vsel %vm91, %v52, 0
    %95 = vmatprep.subr.mxu0 0.0
    %96 = vmatpush1.msra.mxu0 %v49
    %97 = vmatprep.subr.mxu0 0.0
    %98 = vmatpush1.msra.mxu0 %v50
    %99 = vmatprep.subr.mxu0 0.0
    %100 = vmatpush1.msra.mxu0 %v51
    %101 = vmatprep.subr.mxu0 0.0
    %102 = vmatpush1.msra.mxu0 %v93
    %103 = vmatprep.subr.mxu0 0.0
    %104 = vmatpush1.msra.mxu0 0.0
    %105 = vmatprep.subr.mxu0 0.0
    %106 = vmatpush1.msra.mxu0 0.0
    %107 = vmatprep.subr.mxu0 0.0
    %108 = vmatpush1.msra.mxu0 0.0
    %109 = vmatprep.subr.mxu0 0.0
    %110 = vmatpush1.msra.mxu0 0.0
    %111 = vmatprep.subr.mxu0 0.0
    %112 = vmatpush1.msra.mxu0 0.0
    %113 = vmatprep.subr.mxu0 0.0
    %114 = vmatpush1.msra.mxu0 0.0
    %115 = vmatprep.subr.mxu0 0.0
    %116 = vmatpush1.msra.mxu0 0.0
    %117 = vmatprep.subr.mxu0 0.0
    %118 = vmatpush1.msra.mxu0 0.0
    %119 = vmatprep.subr.mxu0 0.0
    %120 = vmatpush1.msra.mxu0 0.0
    %121 = vmatprep.subr.mxu0 0.0
    %122 = vmatpush1.msra.mxu0 0.0
    %123 = vmatprep.subr.mxu0 0.0
    %124 = vmatpush1.msra.mxu0 0.0
    %125 = vmatprep.subr.mxu0 0.0
    %126 = vmatpush1.msra.mxu0 0.0
    %127 = vmatprep.subr.mxu0 0.0
    %128 = vmatpush1.msra.mxu0 0.0
    %129 = vmatprep.subr.mxu0 0.0
    %130 = vmatpush1.msra.mxu0 0.0
    %131 = vmatprep.subr.mxu0 0.0
    %132 = vmatpush1.msra.mxu0 0.0
    %133 = vmatprep.subr.mxu0 0.0
    %134 = vmatpush1.msra.mxu0 0.0
    %135 = vmatprep.subr.mxu0 0.0
    %136 = vmatpush1.msra.mxu0 0.0
    %137 = vmatprep.subr.mxu0 0.0
    %138 = vmatpush1.msra.mxu0 0.0
    %139 = vmatprep.subr.mxu0 0.0
    %140 = vmatpush1.msra.mxu0 0.0
    %141 = vmatprep.subr.mxu0 0.0
    %142 = vmatpush1.msra.mxu0 0.0
    %143 = vmatprep.subr.mxu0 0.0
    %144 = vmatpush1.msra.mxu0 0.0
    %145 = vmatprep.subr.mxu0 0.0
    %146 = vmatpush1.msra.mxu0 0.0
    %147 = vmatprep.subr.mxu0 0.0
    %148 = vmatpush1.msra.mxu0 0.0
    %149 = vmatprep.subr.mxu0 0.0
    %150 = vmatpush1.msra.mxu0 0.0
    %151 = vmatprep.subr.mxu0 0.0
    %152 = vmatpush1.msra.mxu0 0.0
    %153 = vmatprep.subr.mxu0 0.0
    %154 = vmatpush1.msra.mxu0 0.0
    %155 = vmatprep.subr.mxu0 0.0
    %156 = vmatpush1.msra.mxu0 0.0
    %157 = vmatprep.subr.mxu0 0.0
    %158 = vmatpush1.msra.mxu0 0.0
    %159 = vmatprep.mubr.f32.mxu0 0.0
    %160 = vmatmul.mubr.f32.gmra.mrb[0].mxu0 %v62
    %v161 = vpop.f32.mrb[0].mxu0
    %v162 = vadd.f32 %v58, %v161
    %v163 = vpop.f32.mrb[0].mxu0
    %164 = vmatprep.mubr.f32.mxu0 0.0
    %165 = vmatmul.mubr.f32.gmra.mrb[0].mxu0 %v65
    %v166 = vpop.f32.mrb[0].mxu0
    %v167 = vadd.f32 %v58, %v166
    %v168 = vpop.f32.mrb[0].mxu0
    %169 = vmatprep.mubr.f32.mxu0 0.0
    %170 = vmatmul.mubr.f32.gmra.mrb[0].mxu0 %v68
    %v171 = vpop.f32.mrb[0].mxu0
    %v172 = vadd.f32 %v58, %v171
    %v173 = vpop.f32.mrb[0].mxu0
    %174 = vmatprep.mubr.f32.mxu0 0.0
    %175 = vmatmul.mubr.f32.gmra.mrb[0].mxu0 %v71
    %v176 = vpop.f32.mrb[0].mxu0
    %v177 = vadd.f32 %v58, %v176
    %v178 = vpop.f32.mrb[0].mxu0
    %179 = vmatprep.mubr.f32.mxu0 0.0
    %180 = vmatmul.mubr.f32.gmra.mrb[0].mxu0 %v74
    %v181 = vpop.f32.mrb[0].mxu0
    %v182 = vadd.f32 %v58, %v181
    %v183 = vpop.f32.mrb[0].mxu0
    %184 = vmatprep.mubr.f32.mxu0 0.0
    %185 = vmatmul.mubr.f32.gmra.mrb[0].mxu0 %v77
    %v186 = vpop.f32.mrb[0].mxu0
    %v187 = vadd.f32 %v58, %v186
    %v188 = vpop.f32.mrb[0].mxu0
    %189 = vmatprep.mubr.f32.mxu0 0.0
    %190 = vmatmul.mubr.f32.gmra.mrb[0].mxu0 %v80
    %v191 = vpop.f32.mrb[0].mxu0
    %v192 = vadd.f32 %v58, %v191
    %v193 = vpop.f32.mrb[0].mxu0
    %194 = vmatprep.mubr.f32.mxu0 0.0
    %195 = vmatmul.mubr.f32.gmra.mrb[0].mxu0 %v83
    %v196 = vpop.f32.mrb[0].mxu0
    %v197 = vadd.f32 %v58, %v196
    %v198 = vpop.f32.mrb[0].mxu0
    %199 = vmatprep.mubr.f32.mxu0 0.0
    %200 = vmatmul.mubr.f32.gmra.mrb[0].mxu0 %v86
    %v201 = vpop.f32.mrb[0].mxu0
    %v202 = vadd.f32 %v58, %v201
    %v203 = vpop.f32.mrb[0].mxu0
    %204 = vmatprep.mubr.f32.mxu0 0.0
    %205 = vmatmul.mubr.f32.gmra.mrb[0].mxu0 %v89
    %v206 = vpop.f32.mrb[0].mxu0
    %v207 = vadd.f32 %v58, %v206
    %v208 = vpop.f32.mrb[0].mxu0
    %209 = vdwg.mxu0
    %v210 = vmax.f32 %v162, 0.0
    %v211 = vmax.f32 %v167, 0.0
    %v212 = vmax.f32 %v172, 0.0
    %v213 = vmax.f32 %v177, 0.0
    %v214 = vmax.f32 %v182, 0.0
    %v215 = vmax.f32 %v187, 0.0
    %v216 = vmax.f32 %v192, 0.0
    %v217 = vmax.f32 %v197, 0.0
    %v218 = vmax.f32 %v202, 0.0
    %v219 = vmax.f32 %v207, 0.0
    %vm220 = vcmask 523264
    %221 = vst.msk [vmem:[#allocation2] sm:$0xff] %vm220, %v210
    %222 = vst.msk [vmem:[#allocation2 + $0x8] sm:$0xff] %vm220, %v211
    %223 = vst.msk [vmem:[#allocation2 + $0x10] sm:$0xff] %vm220, %v212
    %224 = vst.msk [vmem:[#allocation2 + $0x18] sm:$0xff] %vm220, %v213
    %225 = vst.msk [vmem:[#allocation2 + $0x20] sm:$0xff] %vm220, %v214
    %226 = vst.msk [vmem:[#allocation2 + $0x28] sm:$0xff] %vm220, %v215
    %227 = vst.msk [vmem:[#allocation2 + $0x30] sm:$0xff] %vm220, %v216
    %228 = vst.msk [vmem:[#allocation2 + $0x38] sm:$0xff] %vm220, %v217
    %229 = vst.msk [vmem:[#allocation2 + $0x40] sm:$0xff] %vm220, %v218
    %230 = vst.msk [vmem:[#allocation2 + $0x48] sm:$0xff] %vm220, %v219
    %s231 = scalar_lea.vmem %s0, 80
    %v232 = vld [vmem:[%s231] sm:$0xff]
    %v233 = vld [vmem:[%s231 + $0x8] sm:$0xff]
    %v234 = vld [vmem:[%s231 + $0x10] sm:$0xff]
    %v235 = vld [vmem:[%s231 + $0x18] sm:$0xff]
    %v236 = vld [vmem:[%s231 + $0x20] sm:$0xff]
    %v237 = vld [vmem:[%s231 + $0x28] sm:$0xff]
    %v238 = vld [vmem:[%s231 + $0x30] sm:$0xff]
    %v239 = vld [vmem:[%s231 + $0x38] sm:$0xff]
    %v240 = vld [vmem:[%s231 + $0x40] sm:$0xff]
    %v241 = vld [vmem:[%s231 + $0x48] sm:$0xff]
    %v242 = vld [vmem:[%s1] sm:$0xff]
    %v243 = vld [vmem:[%s1 + $0x8] sm:$0xff]
    %v244 = vld [vmem:[%s1 + $0x10] sm:$0xff]
    %v245 = vld [vmem:[%s1 + $0x18] sm:$0x1]
    %v246 = vld [vmem:[%s2] sm:$0x1]
    %v248 = vlaneseq
    %v249 = vshrl.u32 %v248, 7
    %v250 = vsub.s32 0, %v249
    %v251 = vrot.slane %v246, %v250
    %v254 = vsel %vm60, %v232, 0
    %v257 = vsel %vm60, %v233, 0
    %v260 = vsel %vm60, %v234, 0
    %v263 = vsel %vm60, %v235, 0
    %v266 = vsel %vm60, %v236, 0
    %v269 = vsel %vm60, %v237, 0
    %v272 = vsel %vm60, %v238, 0
    %v275 = vsel %vm60, %v239, 0
    %v278 = vsel %vm60, %v240, 0
    %v281 = vsel %vm60, %v241, 0
    %v284 = vsel %vm91, %v245, 0
    %286 = vmatprep.subr.mxu0 0.0
    %287 = vmatpush1.msra.mxu0 %v242
    %288 = vmatprep.subr.mxu0 0.0
    %289 = vmatpush1.msra.mxu0 %v243
    %290 = vmatprep.subr.mxu0 0.0
    %291 = vmatpush1.msra.mxu0 %v244
    %292 = vmatprep.subr.mxu0 0.0
    %293 = vmatpush1.msra.mxu0 %v284
    %294 = vmatprep.subr.mxu0 0.0
    %295 = vmatpush1.msra.mxu0 0.0
    %296 = vmatprep.subr.mxu0 0.0
    %297 = vmatpush1.msra.mxu0 0.0
    %298 = vmatprep.subr.mxu0 0.0
    %299 = vmatpush1.msra.mxu0 0.0
    %300 = vmatprep.subr.mxu0 0.0
    %301 = vmatpush1.msra.mxu0 0.0
    %302 = vmatprep.subr.mxu0 0.0
    %303 = vmatpush1.msra.mxu0 0.0
    %304 = vmatprep.subr.mxu0 0.0
    %305 = vmatpush1.msra.mxu0 0.0
    %306 = vmatprep.subr.mxu0 0.0
    %307 = vmatpush1.msra.mxu0 0.0
    %308 = vmatprep.subr.mxu0 0.0
    %309 = vmatpush1.msra.mxu0 0.0
    %310 = vmatprep.subr.mxu0 0.0
    %311 = vmatpush1.msra.mxu0 0.0
    %312 = vmatprep.subr.mxu0 0.0
    %313 = vmatpush1.msra.mxu0 0.0
    %314 = vmatprep.subr.mxu0 0.0
    %315 = vmatpush1.msra.mxu0 0.0
    %316 = vmatprep.subr.mxu0 0.0
    %317 = vmatpush1.msra.mxu0 0.0
    %318 = vmatprep.subr.mxu0 0.0
    %319 = vmatpush1.msra.mxu0 0.0
    %320 = vmatprep.subr.mxu0 0.0
    %321 = vmatpush1.msra.mxu0 0.0
    %322 = vmatprep.subr.mxu0 0.0
    %323 = vmatpush1.msra.mxu0 0.0
    %324 = vmatprep.subr.mxu0 0.0
    %325 = vmatpush1.msra.mxu0 0.0
    %326 = vmatprep.subr.mxu0 0.0
    %327 = vmatpush1.msra.mxu0 0.0
    %328 = vmatprep.subr.mxu0 0.0
    %329 = vmatpush1.msra.mxu0 0.0
    %330 = vmatprep.subr.mxu0 0.0
    %331 = vmatpush1.msra.mxu0 0.0
    %332 = vmatprep.subr.mxu0 0.0
    %333 = vmatpush1.msra.mxu0 0.0
    %334 = vmatprep.subr.mxu0 0.0
    %335 = vmatpush1.msra.mxu0 0.0
    %336 = vmatprep.subr.mxu0 0.0
    %337 = vmatpush1.msra.mxu0 0.0
    %338 = vmatprep.subr.mxu0 0.0
    %339 = vmatpush1.msra.mxu0 0.0
    %340 = vmatprep.subr.mxu0 0.0
    %341 = vmatpush1.msra.mxu0 0.0
    %342 = vmatprep.subr.mxu0 0.0
    %343 = vmatpush1.msra.mxu0 0.0
    %344 = vmatprep.subr.mxu0 0.0
    %345 = vmatpush1.msra.mxu0 0.0
    %346 = vmatprep.subr.mxu0 0.0
    %347 = vmatpush1.msra.mxu0 0.0
    %348 = vmatprep.subr.mxu0 0.0
    %349 = vmatpush1.msra.mxu0 0.0
    %350 = vmatprep.mubr.f32.mxu0 0.0
    %351 = vmatmul.mubr.f32.gmra.mrb[0].mxu0 %v254
    %v352 = vpop.f32.mrb[0].mxu0
    %v353 = vadd.f32 %v251, %v352
    %v354 = vpop.f32.mrb[0].mxu0
    %355 = vmatprep.mubr.f32.mxu0 0.0
    %356 = vmatmul.mubr.f32.gmra.mrb[0].mxu0 %v257
    %v357 = vpop.f32.mrb[0].mxu0
    %v358 = vadd.f32 %v251, %v357
    %v359 = vpop.f32.mrb[0].mxu0
    %360 = vmatprep.mubr.f32.mxu0 0.0
    %361 = vmatmul.mubr.f32.gmra.mrb[0].mxu0 %v260
    %v362 = vpop.f32.mrb[0].mxu0
    %v363 = vadd.f32 %v251, %v362
    %v364 = vpop.f32.mrb[0].mxu0
    %365 = vmatprep.mubr.f32.mxu0 0.0
    %366 = vmatmul.mubr.f32.gmra.mrb[0].mxu0 %v263
    %v367 = vpop.f32.mrb[0].mxu0
    %v368 = vadd.f32 %v251, %v367
    %v369 = vpop.f32.mrb[0].mxu0
    %370 = vmatprep.mubr.f32.mxu0 0.0
    %371 = vmatmul.mubr.f32.gmra.mrb[0].mxu0 %v266
    %v372 = vpop.f32.mrb[0].mxu0
    %v373 = vadd.f32 %v251, %v372
    %v374 = vpop.f32.mrb[0].mxu0
    %375 = vmatprep.mubr.f32.mxu0 0.0
    %376 = vmatmul.mubr.f32.gmra.mrb[0].mxu0 %v269
    %v377 = vpop.f32.mrb[0].mxu0
    %v378 = vadd.f32 %v251, %v377
    %v379 = vpop.f32.mrb[0].mxu0
    %380 = vmatprep.mubr.f32.mxu0 0.0
    %381 = vmatmul.mubr.f32.gmra.mrb[0].mxu0 %v272
    %v382 = vpop.f32.mrb[0].mxu0
    %v383 = vadd.f32 %v251, %v382
    %v384 = vpop.f32.mrb[0].mxu0
    %385 = vmatprep.mubr.f32.mxu0 0.0
    %386 = vmatmul.mubr.f32.gmra.mrb[0].mxu0 %v275
    %v387 = vpop.f32.mrb[0].mxu0
    %v388 = vadd.f32 %v251, %v387
    %v389 = vpop.f32.mrb[0].mxu0
    %390 = vmatprep.mubr.f32.mxu0 0.0
    %391 = vmatmul.mubr.f32.gmra.mrb[0].mxu0 %v278
    %v392 = vpop.f32.mrb[0].mxu0
    %v393 = vadd.f32 %v251, %v392
    %v394 = vpop.f32.mrb[0].mxu0
    %395 = vmatprep.mubr.f32.mxu0 0.0
    %396 = vmatmul.mubr.f32.gmra.mrb[0].mxu0 %v281
    %v397 = vpop.f32.mrb[0].mxu0
    %v398 = vadd.f32 %v251, %v397
    %v399 = vpop.f32.mrb[0].mxu0
    %400 = vdwg.mxu0
    %v401 = vmax.f32 %v353, 0.0
    %v402 = vmax.f32 %v358, 0.0
    %v403 = vmax.f32 %v363, 0.0
    %v404 = vmax.f32 %v368, 0.0
    %v405 = vmax.f32 %v373, 0.0
    %v406 = vmax.f32 %v378, 0.0
    %v407 = vmax.f32 %v383, 0.0
    %v408 = vmax.f32 %v388, 0.0
    %v409 = vmax.f32 %v393, 0.0
    %v410 = vmax.f32 %v398, 0.0
    %s411 = scalar_lea.vmem [#allocation2], 80
    %412 = vst.msk [vmem:[%s411] sm:$0xff] %vm220, %v401
    %413 = vst.msk [vmem:[%s411 + $0x8] sm:$0xff] %vm220, %v402
    %414 = vst.msk [vmem:[%s411 + $0x10] sm:$0xff] %vm220, %v403
    %415 = vst.msk [vmem:[%s411 + $0x18] sm:$0xff] %vm220, %v404
    %416 = vst.msk [vmem:[%s411 + $0x20] sm:$0xff] %vm220, %v405
    %417 = vst.msk [vmem:[%s411 + $0x28] sm:$0xff] %vm220, %v406
    %418 = vst.msk [vmem:[%s411 + $0x30] sm:$0xff] %vm220, %v407
    %419 = vst.msk [vmem:[%s411 + $0x38] sm:$0xff] %vm220, %v408
    %420 = vst.msk [vmem:[%s411 + $0x40] sm:$0xff] %vm220, %v409
    %421 = vst.msk [vmem:[%s411 + $0x48] sm:$0xff] %vm220, %v410
    %s422 = scalar_lea.vmem %s0, 160
    %v423 = vld [vmem:[%s422] sm:$0xff]
    %v424 = vld [vmem:[%s422 + $0x8] sm:$0xff]
    %v425 = vld [vmem:[%s422 + $0x10] sm:$0xff]
    %v426 = vld [vmem:[%s422 + $0x18] sm:$0xff]
    %v427 = vld [vmem:[%s422 + $0x20] sm:$0xff]
    %v428 = vld [vmem:[%s422 + $0x28] sm:$0xff]
    %v429 = vld [vmem:[%s422 + $0x30] sm:$0xff]
    %v430 = vld [vmem:[%s422 + $0x38] sm:$0xff]
    %v431 = vld [vmem:[%s422 + $0x40] sm:$0xff]
    %v432 = vld [vmem:[%s422 + $0x48] sm:$0xff]
    %v433 = vld [vmem:[%s1] sm:$0xff]
    %v434 = vld [vmem:[%s1 + $0x8] sm:$0xff]
    %v435 = vld [vmem:[%s1 + $0x10] sm:$0xff]
    %v436 = vld [vmem:[%s1 + $0x18] sm:$0x1]
    %v437 = vld [vmem:[%s2] sm:$0x1]
    %v439 = vlaneseq
    %v440 = vshrl.u32 %v439, 7
    %v441 = vsub.s32 0, %v440
    %v442 = vrot.slane %v437, %v441
    %v445 = vsel %vm60, %v423, 0
    %v448 = vsel %vm60, %v424, 0
    %v451 = vsel %vm60, %v425, 0
    %v454 = vsel %vm60, %v426, 0
    %v457 = vsel %vm60, %v427, 0
    %v460 = vsel %vm60, %v428, 0
    %v463 = vsel %vm60, %v429, 0
    %v466 = vsel %vm60, %v430, 0
    %v469 = vsel %vm60, %v431, 0
    %v472 = vsel %vm60, %v432, 0
    %v475 = vsel %vm91, %v436, 0
    %477 = vmatprep.subr.mxu0 0.0
    %478 = vmatpush1.msra.mxu0 %v433
    %479 = vmatprep.subr.mxu0 0.0
    %480 = vmatpush1.msra.mxu0 %v434
    %481 = vmatprep.subr.mxu0 0.0
    %482 = vmatpush1.msra.mxu0 %v435
    %483 = vmatprep.subr.mxu0 0.0
    %484 = vmatpush1.msra.mxu0 %v475
    %485 = vmatprep.subr.mxu0 0.0
    %486 = vmatpush1.msra.mxu0 0.0
    %487 = vmatprep.subr.mxu0 0.0
    %488 = vmatpush1.msra.mxu0 0.0
    %489 = vmatprep.subr.mxu0 0.0
    %490 = vmatpush1.msra.mxu0 0.0
    %491 = vmatprep.subr.mxu0 0.0
    %492 = vmatpush1.msra.mxu0 0.0
    %493 = vmatprep.subr.mxu0 0.0
    %494 = vmatpush1.msra.mxu0 0.0
    %495 = vmatprep.subr.mxu0 0.0
    %496 = vmatpush1.msra.mxu0 0.0
    %497 = vmatprep.subr.mxu0 0.0
    %498 = vmatpush1.msra.mxu0 0.0
    %499 = vmatprep.subr.mxu0 0.0
    %500 = vmatpush1.msra.mxu0 0.0
    %501 = vmatprep.subr.mxu0 0.0
    %502 = vmatpush1.msra.mxu0 0.0
    %503 = vmatprep.subr.mxu0 0.0
    %504 = vmatpush1.msra.mxu0 0.0
    %505 = vmatprep.subr.mxu0 0.0
    %506 = vmatpush1.msra.mxu0 0.0
    %507 = vmatprep.subr.mxu0 0.0
    %508 = vmatpush1.msra.mxu0 0.0
    %509 = vmatprep.subr.mxu0 0.0
    %510 = vmatpush1.msra.mxu0 0.0
    %511 = vmatprep.subr.mxu0 0.0
    %512 = vmatpush1.msra.mxu0 0.0
    %513 = vmatprep.subr.mxu0 0.0
    %514 = vmatpush1.msra.mxu0 0.0
    %515 = vmatprep.subr.mxu0 0.0
    %516 = vmatpush1.msra.mxu0 0.0
    %517 = vmatprep.subr.mxu0 0.0
    %518 = vmatpush1.msra.mxu0 0.0
    %519 = vmatprep.subr.mxu0 0.0
    %520 = vmatpush1.msra.mxu0 0.0
    %521 = vmatprep.subr.mxu0 0.0
    %522 = vmatpush1.msra.mxu0 0.0
    %523 = vmatprep.subr.mxu0 0.0
    %524 = vmatpush1.msra.mxu0 0.0
    %525 = vmatprep.subr.mxu0 0.0
    %526 = vmatpush1.msra.mxu0 0.0
    %527 = vmatprep.subr.mxu0 0.0
    %528 = vmatpush1.msra.mxu0 0.0
    %529 = vmatprep.subr.mxu0 0.0
    %530 = vmatpush1.msra.mxu0 0.0
    %531 = vmatprep.subr.mxu0 0.0
    %532 = vmatpush1.msra.mxu0 0.0
    %533 = vmatprep.subr.mxu0 0.0
    %534 = vmatpush1.msra.mxu0 0.0
    %535 = vmatprep.subr.mxu0 0.0
    %536 = vmatpush1.msra.mxu0 0.0
    %537 = vmatprep.subr.mxu0 0.0
    %538 = vmatpush1.msra.mxu0 0.0
    %539 = vmatprep.subr.mxu0 0.0
    %540 = vmatpush1.msra.mxu0 0.0
    %541 = vmatprep.mubr.f32.mxu0 0.0
    %542 = vmatmul.mubr.f32.gmra.mrb[0].mxu0 %v445
    %v543 = vpop.f32.mrb[0].mxu0
    %v544 = vadd.f32 %v442, %v543
    %v545 = vpop.f32.mrb[0].mxu0
    %546 = vmatprep.mubr.f32.mxu0 0.0
    %547 = vmatmul.mubr.f32.gmra.mrb[0].mxu0 %v448
    %v548 = vpop.f32.mrb[0].mxu0
    %v549 = vadd.f32 %v442, %v548
    %v550 = vpop.f32.mrb[0].mxu0
    %551 = vmatprep.mubr.f32.mxu0 0.0
    %552 = vmatmul.mubr.f32.gmra.mrb[0].mxu0 %v451
    %v553 = vpop.f32.mrb[0].mxu0
    %v554 = vadd.f32 %v442, %v553
    %v555 = vpop.f32.mrb[0].mxu0
    %556 = vmatprep.mubr.f32.mxu0 0.0
    %557 = vmatmul.mubr.f32.gmra.mrb[0].mxu0 %v454
    %v558 = vpop.f32.mrb[0].mxu0
    %v559 = vadd.f32 %v442, %v558
    %v560 = vpop.f32.mrb[0].mxu0
    %561 = vmatprep.mubr.f32.mxu0 0.0
    %562 = vmatmul.mubr.f32.gmra.mrb[0].mxu0 %v457
    %v563 = vpop.f32.mrb[0].mxu0
    %v564 = vadd.f32 %v442, %v563
    %v565 = vpop.f32.mrb[0].mxu0
    %566 = vmatprep.mubr.f32.mxu0 0.0
    %567 = vmatmul.mubr.f32.gmra.mrb[0].mxu0 %v460
    %v568 = vpop.f32.mrb[0].mxu0
    %v569 = vadd.f32 %v442, %v568
    %v570 = vpop.f32.mrb[0].mxu0
    %571 = vmatprep.mubr.f32.mxu0 0.0
    %572 = vmatmul.mubr.f32.gmra.mrb[0].mxu0 %v463
    %v573 = vpop.f32.mrb[0].mxu0
    %v574 = vadd.f32 %v442, %v573
    %v575 = vpop.f32.mrb[0].mxu0
    %576 = vmatprep.mubr.f32.mxu0 0.0
    %577 = vmatmul.mubr.f32.gmra.mrb[0].mxu0 %v466
    %v578 = vpop.f32.mrb[0].mxu0
    %v579 = vadd.f32 %v442, %v578
    %v580 = vpop.f32.mrb[0].mxu0
    %581 = vmatprep.mubr.f32.mxu0 0.0
    %582 = vmatmul.mubr.f32.gmra.mrb[0].mxu0 %v469
    %v583 = vpop.f32.mrb[0].mxu0
    %v584 = vadd.f32 %v442, %v583
    %v585 = vpop.f32.mrb[0].mxu0
    %586 = vmatprep.mubr.f32.mxu0 0.0
    %587 = vmatmul.mubr.f32.gmra.mrb[0].mxu0 %v472
    %v588 = vpop.f32.mrb[0].mxu0
    %v589 = vadd.f32 %v442, %v588
    %v590 = vpop.f32.mrb[0].mxu0
    %591 = vdwg.mxu0
    %v592 = vmax.f32 %v544, 0.0
    %v593 = vmax.f32 %v549, 0.0
    %v594 = vmax.f32 %v554, 0.0
    %v595 = vmax.f32 %v559, 0.0
    %v596 = vmax.f32 %v564, 0.0
    %v597 = vmax.f32 %v569, 0.0
    %v598 = vmax.f32 %v574, 0.0
    %v599 = vmax.f32 %v579, 0.0
    %v600 = vmax.f32 %v584, 0.0
    %v601 = vmax.f32 %v589, 0.0
    %s602 = scalar_lea.vmem [#allocation2], 160
    %603 = vst.msk [vmem:[%s602] sm:$0xff] %vm220, %v592
    %604 = vst.msk [vmem:[%s602 + $0x8] sm:$0xff] %vm220, %v593
    %605 = vst.msk [vmem:[%s602 + $0x10] sm:$0xff] %vm220, %v594
    %606 = vst.msk [vmem:[%s602 + $0x18] sm:$0xff] %vm220, %v595
    %607 = vst.msk [vmem:[%s602 + $0x20] sm:$0xff] %vm220, %v596
    %608 = vst.msk [vmem:[%s602 + $0x28] sm:$0xff] %vm220, %v597
    %609 = vst.msk [vmem:[%s602 + $0x30] sm:$0xff] %vm220, %v598
    %610 = vst.msk [vmem:[%s602 + $0x38] sm:$0xff] %vm220, %v599
    %611 = vst.msk [vmem:[%s602 + $0x40] sm:$0xff] %vm220, %v600
    %612 = vst.msk [vmem:[%s602 + $0x48] sm:$0xff] %vm220, %v601
    %s613 = scalar_lea.vmem %s0, 240
    %v614 = vld [vmem:[%s613] sm:$0xff]
    %v615 = vld [vmem:[%s613 + $0x8] sm:$0xff]
    %v616 = vld [vmem:[%s613 + $0x10] sm:$0xff]
    %v617 = vld [vmem:[%s613 + $0x18] sm:$0xff]
    %v618 = vld [vmem:[%s613 + $0x20] sm:$0xff]
    %v619 = vld [vmem:[%s613 + $0x28] sm:$0xff]
    %v620 = vld [vmem:[%s613 + $0x30] sm:$0xff]
    %v621 = vld [vmem:[%s613 + $0x38] sm:$0xff]
    %v622 = vld [vmem:[%s613 + $0x40] sm:$0xff]
    %v623 = vld [vmem:[%s613 + $0x48] sm:$0xff]
    %v624 = vld [vmem:[%s1] sm:$0xff]
    %v625 = vld [vmem:[%s1 + $0x8] sm:$0xff]
    %v626 = vld [vmem:[%s1 + $0x10] sm:$0xff]
    %v627 = vld [vmem:[%s1 + $0x18] sm:$0x1]
    %v628 = vld [vmem:[%s2] sm:$0x1]
    %v630 = vlaneseq
    %v631 = vshrl.u32 %v630, 7
    %v632 = vsub.s32 0, %v631
    %v633 = vrot.slane %v628, %v632
    %v636 = vsel %vm60, %v614, 0
    %v639 = vsel %vm60, %v615, 0
    %v642 = vsel %vm60, %v616, 0
    %v645 = vsel %vm60, %v617, 0
    %v648 = vsel %vm60, %v618, 0
    %v651 = vsel %vm60, %v619, 0
    %v654 = vsel %vm60, %v620, 0
    %v657 = vsel %vm60, %v621, 0
    %v660 = vsel %vm60, %v622, 0
    %v663 = vsel %vm60, %v623, 0
    %v666 = vsel %vm91, %v627, 0
    %668 = vmatprep.subr.mxu0 0.0
    %669 = vmatpush1.msra.mxu0 %v624
    %670 = vmatprep.subr.mxu0 0.0
    %671 = vmatpush1.msra.mxu0 %v625
    %672 = vmatprep.subr.mxu0 0.0
    %673 = vmatpush1.msra.mxu0 %v626
    %674 = vmatprep.subr.mxu0 0.0
    %675 = vmatpush1.msra.mxu0 %v666
    %676 = vmatprep.subr.mxu0 0.0
    %677 = vmatpush1.msra.mxu0 0.0
    %678 = vmatprep.subr.mxu0 0.0
    %679 = vmatpush1.msra.mxu0 0.0
    %680 = vmatprep.subr.mxu0 0.0
    %681 = vmatpush1.msra.mxu0 0.0
    %682 = vmatprep.subr.mxu0 0.0
    %683 = vmatpush1.msra.mxu0 0.0
    %684 = vmatprep.subr.mxu0 0.0
    %685 = vmatpush1.msra.mxu0 0.0
    %686 = vmatprep.subr.mxu0 0.0
    %687 = vmatpush1.msra.mxu0 0.0
    %688 = vmatprep.subr.mxu0 0.0
    %689 = vmatpush1.msra.mxu0 0.0
    %690 = vmatprep.subr.mxu0 0.0
    %691 = vmatpush1.msra.mxu0 0.0
    %692 = vmatprep.subr.mxu0 0.0
    %693 = vmatpush1.msra.mxu0 0.0
    %694 = vmatprep.subr.mxu0 0.0
    %695 = vmatpush1.msra.mxu0 0.0
    %696 = vmatprep.subr.mxu0 0.0
    %697 = vmatpush1.msra.mxu0 0.0
    %698 = vmatprep.subr.mxu0 0.0
    %699 = vmatpush1.msra.mxu0 0.0
    %700 = vmatprep.subr.mxu0 0.0
    %701 = vmatpush1.msra.mxu0 0.0
    %702 = vmatprep.subr.mxu0 0.0
    %703 = vmatpush1.msra.mxu0 0.0
    %704 = vmatprep.subr.mxu0 0.0
    %705 = vmatpush1.msra.mxu0 0.0
    %706 = vmatprep.subr.mxu0 0.0
    %707 = vmatpush1.msra.mxu0 0.0
    %708 = vmatprep.subr.mxu0 0.0
    %709 = vmatpush1.msra.mxu0 0.0
    %710 = vmatprep.subr.mxu0 0.0
    %711 = vmatpush1.msra.mxu0 0.0
    %712 = vmatprep.subr.mxu0 0.0
    %713 = vmatpush1.msra.mxu0 0.0
    %714 = vmatprep.subr.mxu0 0.0
    %715 = vmatpush1.msra.mxu0 0.0
    %716 = vmatprep.subr.mxu0 0.0
    %717 = vmatpush1.msra.mxu0 0.0
    %718 = vmatprep.subr.mxu0 0.0
    %719 = vmatpush1.msra.mxu0 0.0
    %720 = vmatprep.subr.mxu0 0.0
    %721 = vmatpush1.msra.mxu0 0.0
    %722 = vmatprep.subr.mxu0 0.0
    %723 = vmatpush1.msra.mxu0 0.0
    %724 = vmatprep.subr.mxu0 0.0
    %725 = vmatpush1.msra.mxu0 0.0
    %726 = vmatprep.subr.mxu0 0.0
    %727 = vmatpush1.msra.mxu0 0.0
    %728 = vmatprep.subr.mxu0 0.0
    %729 = vmatpush1.msra.mxu0 0.0
    %730 = vmatprep.subr.mxu0 0.0
    %731 = vmatpush1.msra.mxu0 0.0
    %732 = vmatprep.mubr.f32.mxu0 0.0
    %733 = vmatmul.mubr.f32.gmra.mrb[0].mxu0 %v636
    %v734 = vpop.f32.mrb[0].mxu0
    %v735 = vadd.f32 %v633, %v734
    %v736 = vpop.f32.mrb[0].mxu0
    %737 = vmatprep.mubr.f32.mxu0 0.0
    %738 = vmatmul.mubr.f32.gmra.mrb[0].mxu0 %v639
    %v739 = vpop.f32.mrb[0].mxu0
    %v740 = vadd.f32 %v633, %v739
    %v741 = vpop.f32.mrb[0].mxu0
    %742 = vmatprep.mubr.f32.mxu0 0.0
    %743 = vmatmul.mubr.f32.gmra.mrb[0].mxu0 %v642
    %v744 = vpop.f32.mrb[0].mxu0
    %v745 = vadd.f32 %v633, %v744
    %v746 = vpop.f32.mrb[0].mxu0
    %747 = vmatprep.mubr.f32.mxu0 0.0
    %748 = vmatmul.mubr.f32.gmra.mrb[0].mxu0 %v645
    %v749 = vpop.f32.mrb[0].mxu0
    %v750 = vadd.f32 %v633, %v749
    %v751 = vpop.f32.mrb[0].mxu0
    %752 = vmatprep.mubr.f32.mxu0 0.0
    %753 = vmatmul.mubr.f32.gmra.mrb[0].mxu0 %v648
    %v754 = vpop.f32.mrb[0].mxu0
    %v755 = vadd.f32 %v633, %v754
    %v756 = vpop.f32.mrb[0].mxu0
    %757 = vmatprep.mubr.f32.mxu0 0.0
    %758 = vmatmul.mubr.f32.gmra.mrb[0].mxu0 %v651
    %v759 = vpop.f32.mrb[0].mxu0
    %v760 = vadd.f32 %v633, %v759
    %v761 = vpop.f32.mrb[0].mxu0
    %762 = vmatprep.mubr.f32.mxu0 0.0
    %763 = vmatmul.mubr.f32.gmra.mrb[0].mxu0 %v654
    %v764 = vpop.f32.mrb[0].mxu0
    %v765 = vadd.f32 %v633, %v764
    %v766 = vpop.f32.mrb[0].mxu0
    %767 = vmatprep.mubr.f32.mxu0 0.0
    %768 = vmatmul.mubr.f32.gmra.mrb[0].mxu0 %v657
    %v769 = vpop.f32.mrb[0].mxu0
    %v770 = vadd.f32 %v633, %v769
    %v771 = vpop.f32.mrb[0].mxu0
    %772 = vmatprep.mubr.f32.mxu0 0.0
    %773 = vmatmul.mubr.f32.gmra.mrb[0].mxu0 %v660
    %v774 = vpop.f32.mrb[0].mxu0
    %v775 = vadd.f32 %v633, %v774
    %v776 = vpop.f32.mrb[0].mxu0
    %777 = vmatprep.mubr.f32.mxu0 0.0
    %778 = vmatmul.mubr.f32.gmra.mrb[0].mxu0 %v663
    %v779 = vpop.f32.mrb[0].mxu0
    %v780 = vadd.f32 %v633, %v779
    %v781 = vpop.f32.mrb[0].mxu0
    %782 = vdwg.mxu0
    %v783 = vmax.f32 %v735, 0.0
    %v784 = vmax.f32 %v740, 0.0
    %v785 = vmax.f32 %v745, 0.0
    %v786 = vmax.f32 %v750, 0.0
    %v787 = vmax.f32 %v755, 0.0
    %v788 = vmax.f32 %v760, 0.0
    %v789 = vmax.f32 %v765, 0.0
    %v790 = vmax.f32 %v770, 0.0
    %v791 = vmax.f32 %v775, 0.0
    %v792 = vmax.f32 %v780, 0.0
    %s793 = scalar_lea.vmem [#allocation2], 240
    %794 = vst.msk [vmem:[%s793] sm:$0xff] %vm220, %v783
    %795 = vst.msk [vmem:[%s793 + $0x8] sm:$0xff] %vm220, %v784
    %796 = vst.msk [vmem:[%s793 + $0x10] sm:$0xff] %vm220, %v785
    %797 = vst.msk [vmem:[%s793 + $0x18] sm:$0xff] %vm220, %v786
    %798 = vst.msk [vmem:[%s793 + $0x20] sm:$0xff] %vm220, %v787
    %799 = vst.msk [vmem:[%s793 + $0x28] sm:$0xff] %vm220, %v788
    %800 = vst.msk [vmem:[%s793 + $0x30] sm:$0xff] %vm220, %v789
    %801 = vst.msk [vmem:[%s793 + $0x38] sm:$0xff] %vm220, %v790
    %802 = vst.msk [vmem:[%s793 + $0x40] sm:$0xff] %vm220, %v791
    %803 = vst.msk [vmem:[%s793 + $0x48] sm:$0xff] %vm220, %v792
    %v804 = vld [vmem:[#allocation2] sm:$0xff]
    %v805 = vld [vmem:[#allocation2 + $0x8] sm:$0xff]
    %v806 = vld [vmem:[#allocation2 + $0x10] sm:$0xff]
    %v807 = vld [vmem:[#allocation2 + $0x18] sm:$0xff]
    %v808 = vld [vmem:[#allocation2 + $0x20] sm:$0xff]
    %v809 = vld [vmem:[#allocation2 + $0x28] sm:$0xff]
    %v810 = vld [vmem:[#allocation2 + $0x30] sm:$0xff]
    %v811 = vld [vmem:[#allocation2 + $0x38] sm:$0xff]
    %v812 = vld [vmem:[#allocation2 + $0x40] sm:$0xff]
    %v813 = vld [vmem:[#allocation2 + $0x48] sm:$0x1]
    %v814 = vld [vmem:[%s3] sm:$0xff]
    %v815 = vld [vmem:[%s3 + $0x8] sm:$0xff]
    %v816 = vld [vmem:[%s3 + $0x10] sm:$0xff]
    %v817 = vld [vmem:[%s3 + $0x18] sm:$0xff]
    %v818 = vld [vmem:[%s3 + $0x20] sm:$0xff]
    %v819 = vld [vmem:[%s3 + $0x28] sm:$0xff]
    %v820 = vld [vmem:[%s3 + $0x30] sm:$0xff]
    %v821 = vld [vmem:[%s3 + $0x38] sm:$0xff]
    %v822 = vld [vmem:[%s411] sm:$0xff]
    %v823 = vld [vmem:[%s411 + $0x8] sm:$0xff]
    %v824 = vld [vmem:[%s411 + $0x10] sm:$0xff]
    %v825 = vld [vmem:[%s411 + $0x18] sm:$0xff]
    %v826 = vld [vmem:[%s411 + $0x20] sm:$0xff]
    %v827 = vld [vmem:[%s411 + $0x28] sm:$0xff]
    %v828 = vld [vmem:[%s411 + $0x30] sm:$0xff]
    %v829 = vld [vmem:[%s411 + $0x38] sm:$0xff]
    %v830 = vld [vmem:[%s411 + $0x40] sm:$0xff]
    %v831 = vld [vmem:[%s411 + $0x48] sm:$0x1]
    %s832 = scalar_lea.vmem %s3, 64
    %v833 = vld [vmem:[%s832] sm:$0xff]
    %v834 = vld [vmem:[%s832 + $0x8] sm:$0xff]
    %v835 = vld [vmem:[%s832 + $0x10] sm:$0xff]
    %v836 = vld [vmem:[%s832 + $0x18] sm:$0xff]
    %v837 = vld [vmem:[%s832 + $0x20] sm:$0xff]
    %v838 = vld [vmem:[%s832 + $0x28] sm:$0xff]
    %v839 = vld [vmem:[%s832 + $0x30] sm:$0xff]
    %v840 = vld [vmem:[%s832 + $0x38] sm:$0xff]
    %v842 = vsel %vm220, %v822, 0
    %v845 = vsel %vm220, %v823, 0
    %v848 = vsel %vm220, %v824, 0
    %v851 = vsel %vm220, %v825, 0
    %v854 = vsel %vm220, %v826, 0
    %v857 = vsel %vm220, %v827, 0
    %v860 = vsel %vm220, %v828, 0
    %v863 = vsel %vm220, %v829, 0
    %v866 = vsel %vm220, %v830, 0
    %v869 = vsel %vm220, %v831, 0
    %871 = vmatprep.subr.mxu0 0.0
    %872 = vmatpush1.msra.mxu0 %v833
    %873 = vmatprep.subr.mxu0 0.0
    %874 = vmatpush1.msra.mxu0 %v834
    %875 = vmatprep.subr.mxu0 0.0
    %876 = vmatpush1.msra.mxu0 %v835
    %877 = vmatprep.subr.mxu0 0.0
    %878 = vmatpush1.msra.mxu0 %v836
    %879 = vmatprep.subr.mxu0 0.0
    %880 = vmatpush1.msra.mxu0 %v837
    %881 = vmatprep.subr.mxu0 0.0
    %882 = vmatpush1.msra.mxu0 %v838
    %883 = vmatprep.subr.mxu0 0.0
    %884 = vmatpush1.msra.mxu0 %v839
    %885 = vmatprep.subr.mxu0 0.0
    %886 = vmatpush1.msra.mxu0 %v840
    %887 = vmatprep.subr.mxu0 0.0
    %888 = vmatpush1.msra.mxu0 0.0
    %889 = vmatprep.subr.mxu0 0.0
    %890 = vmatpush1.msra.mxu0 0.0
    %891 = vmatprep.subr.mxu0 0.0
    %892 = vmatpush1.msra.mxu0 0.0
    %893 = vmatprep.subr.mxu0 0.0
    %894 = vmatpush1.msra.mxu0 0.0
    %895 = vmatprep.subr.mxu0 0.0
    %896 = vmatpush1.msra.mxu0 0.0
    %897 = vmatprep.subr.mxu0 0.0
    %898 = vmatpush1.msra.mxu0 0.0
    %899 = vmatprep.subr.mxu0 0.0
    %900 = vmatpush1.msra.mxu0 0.0
    %901 = vmatprep.subr.mxu0 0.0
    %902 = vmatpush1.msra.mxu0 0.0
    %903 = vmatprep.subr.mxu0 0.0
    %904 = vmatpush1.msra.mxu0 0.0
    %905 = vmatprep.subr.mxu0 0.0
    %906 = vmatpush1.msra.mxu0 0.0
    %907 = vmatprep.subr.mxu0 0.0
    %908 = vmatpush1.msra.mxu0 0.0
    %909 = vmatprep.subr.mxu0 0.0
    %910 = vmatpush1.msra.mxu0 0.0
    %911 = vmatprep.subr.mxu0 0.0
    %912 = vmatpush1.msra.mxu0 0.0
    %913 = vmatprep.subr.mxu0 0.0
    %914 = vmatpush1.msra.mxu0 0.0
    %915 = vmatprep.subr.mxu0 0.0
    %916 = vmatpush1.msra.mxu0 0.0
    %917 = vmatprep.subr.mxu0 0.0
    %918 = vmatpush1.msra.mxu0 0.0
    %919 = vmatprep.subr.mxu0 0.0
    %920 = vmatpush1.msra.mxu0 0.0
    %921 = vmatprep.subr.mxu0 0.0
    %922 = vmatpush1.msra.mxu0 0.0
    %923 = vmatprep.subr.mxu0 0.0
    %924 = vmatpush1.msra.mxu0 0.0
    %925 = vmatprep.subr.mxu0 0.0
    %926 = vmatpush1.msra.mxu0 0.0
    %927 = vmatprep.subr.mxu0 0.0
    %928 = vmatpush1.msra.mxu0 0.0
    %929 = vmatprep.subr.mxu0 0.0
    %930 = vmatpush1.msra.mxu0 0.0
    %931 = vmatprep.subr.mxu0 0.0
    %932 = vmatpush1.msra.mxu0 0.0
    %933 = vmatprep.subr.mxu0 0.0
    %934 = vmatpush1.msra.mxu0 0.0
    %935 = vmatprep.mubr.f32.mxu0 0.0
    %936 = vmatmul.mubr.f32.gmra.mrb[0].mxu0 %v842
    %v937 = vpop.f32.mrb[0].mxu0
    %v938 = vadd.f32 0.0, %v937
    %v939 = vpop.f32.mrb[0].mxu0
    %940 = vmatprep.mubr.f32.mxu0 0.0
    %941 = vmatmul.mubr.f32.gmra.mrb[0].mxu0 %v845
    %v942 = vpop.f32.mrb[0].mxu0
    %v943 = vadd.f32 0.0, %v942
    %v944 = vpop.f32.mrb[0].mxu0
    %945 = vmatprep.mubr.f32.mxu0 0.0
    %946 = vmatmul.mubr.f32.gmra.mrb[0].mxu0 %v848
    %v947 = vpop.f32.mrb[0].mxu0
    %v948 = vadd.f32 0.0, %v947
    %v949 = vpop.f32.mrb[0].mxu0
    %950 = vmatprep.mubr.f32.mxu0 0.0
    %951 = vmatmul.mubr.f32.gmra.mrb[0].mxu0 %v851
    %v952 = vpop.f32.mrb[0].mxu0
    %v953 = vadd.f32 0.0, %v952
    %v954 = vpop.f32.mrb[0].mxu0
    %955 = vmatprep.mubr.f32.mxu0 0.0
    %956 = vmatmul.mubr.f32.gmra.mrb[0].mxu0 %v854
    %v957 = vpop.f32.mrb[0].mxu0
    %v958 = vadd.f32 0.0, %v957
    %v959 = vpop.f32.mrb[0].mxu0
    %960 = vmatprep.mubr.f32.mxu0 0.0
    %961 = vmatmul.mubr.f32.gmra.mrb[0].mxu0 %v857
    %v962 = vpop.f32.mrb[0].mxu0
    %v963 = vadd.f32 0.0, %v962
    %v964 = vpop.f32.mrb[0].mxu0
    %965 = vmatprep.mubr.f32.mxu0 0.0
    %966 = vmatmul.mubr.f32.gmra.mrb[0].mxu0 %v860
    %v967 = vpop.f32.mrb[0].mxu0
    %v968 = vadd.f32 0.0, %v967
    %v969 = vpop.f32.mrb[0].mxu0
    %970 = vmatprep.mubr.f32.mxu0 0.0
    %971 = vmatmul.mubr.f32.gmra.mrb[0].mxu0 %v863
    %v972 = vpop.f32.mrb[0].mxu0
    %v973 = vadd.f32 0.0, %v972
    %v974 = vpop.f32.mrb[0].mxu0
    %975 = vmatprep.mubr.f32.mxu0 0.0
    %976 = vmatmul.mubr.f32.gmra.mrb[0].mxu0 %v866
    %v977 = vpop.f32.mrb[0].mxu0
    %v978 = vadd.f32 0.0, %v977
    %v979 = vpop.f32.mrb[0].mxu0
    %980 = vmatprep.mubr.f32.mxu0 0.0
    %981 = vmatmul.mubr.f32.gmra.mrb[0].mxu0 %v869
    %v982 = vpop.f32.mrb[0].mxu0
    %v983 = vadd.f32 0.0, %v982
    %v984 = vpop.f32.mrb[0].mxu0
    %985 = vdwg.mxu0
    %v987 = vsel %vm220, %v804, 0
    %v990 = vsel %vm220, %v805, 0
    %v993 = vsel %vm220, %v806, 0
    %v996 = vsel %vm220, %v807, 0
    %v999 = vsel %vm220, %v808, 0
    %v1002 = vsel %vm220, %v809, 0
    %v1005 = vsel %vm220, %v810, 0
    %v1008 = vsel %vm220, %v811, 0
    %v1011 = vsel %vm220, %v812, 0
    %v1014 = vsel %vm220, %v813, 0
    %1016 = vmatprep.subr.mxu0 0.0
    %1017 = vmatpush1.msra.mxu0 %v814
    %1018 = vmatprep.subr.mxu0 0.0
    %1019 = vmatpush1.msra.mxu0 %v815
    %1020 = vmatprep.subr.mxu0 0.0
    %1021 = vmatpush1.msra.mxu0 %v816
    %1022 = vmatprep.subr.mxu0 0.0
    %1023 = vmatpush1.msra.mxu0 %v817
    %1024 = vmatprep.subr.mxu0 0.0
    %1025 = vmatpush1.msra.mxu0 %v818
    %1026 = vmatprep.subr.mxu0 0.0
    %1027 = vmatpush1.msra.mxu0 %v819
    %1028 = vmatprep.subr.mxu0 0.0
    %1029 = vmatpush1.msra.mxu0 %v820
    %1030 = vmatprep.subr.mxu0 0.0
    %1031 = vmatpush1.msra.mxu0 %v821
    %1032 = vmatprep.subr.mxu0 0.0
    %1033 = vmatpush1.msra.mxu0 0.0
    %1034 = vmatprep.subr.mxu0 0.0
    %1035 = vmatpush1.msra.mxu0 0.0
    %1036 = vmatprep.subr.mxu0 0.0
    %1037 = vmatpush1.msra.mxu0 0.0
    %1038 = vmatprep.subr.mxu0 0.0
    %1039 = vmatpush1.msra.mxu0 0.0
    %1040 = vmatprep.subr.mxu0 0.0
    %1041 = vmatpush1.msra.mxu0 0.0
    %1042 = vmatprep.subr.mxu0 0.0
    %1043 = vmatpush1.msra.mxu0 0.0
    %1044 = vmatprep.subr.mxu0 0.0
    %1045 = vmatpush1.msra.mxu0 0.0
    %1046 = vmatprep.subr.mxu0 0.0
    %1047 = vmatpush1.msra.mxu0 0.0
    %1048 = vmatprep.subr.mxu0 0.0
    %1049 = vmatpush1.msra.mxu0 0.0
    %1050 = vmatprep.subr.mxu0 0.0
    %1051 = vmatpush1.msra.mxu0 0.0
    %1052 = vmatprep.subr.mxu0 0.0
    %1053 = vmatpush1.msra.mxu0 0.0
    %1054 = vmatprep.subr.mxu0 0.0
    %1055 = vmatpush1.msra.mxu0 0.0
    %1056 = vmatprep.subr.mxu0 0.0
    %1057 = vmatpush1.msra.mxu0 0.0
    %1058 = vmatprep.subr.mxu0 0.0
    %1059 = vmatpush1.msra.mxu0 0.0
    %1060 = vmatprep.subr.mxu0 0.0
    %1061 = vmatpush1.msra.mxu0 0.0
    %1062 = vmatprep.subr.mxu0 0.0
    %1063 = vmatpush1.msra.mxu0 0.0
    %1064 = vmatprep.subr.mxu0 0.0
    %1065 = vmatpush1.msra.mxu0 0.0
    %1066 = vmatprep.subr.mxu0 0.0
    %1067 = vmatpush1.msra.mxu0 0.0
    %1068 = vmatprep.subr.mxu0 0.0
    %1069 = vmatpush1.msra.mxu0 0.0
    %1070 = vmatprep.subr.mxu0 0.0
    %1071 = vmatpush1.msra.mxu0 0.0
    %1072 = vmatprep.subr.mxu0 0.0
    %1073 = vmatpush1.msra.mxu0 0.0
    %1074 = vmatprep.subr.mxu0 0.0
    %1075 = vmatpush1.msra.mxu0 0.0
    %1076 = vmatprep.subr.mxu0 0.0
    %1077 = vmatpush1.msra.mxu0 0.0
    %1078 = vmatprep.subr.mxu0 0.0
    %1079 = vmatpush1.msra.mxu0 0.0
    %1080 = vmatprep.mubr.f32.mxu0 0.0
    %1081 = vmatmul.mubr.f32.gmra.mrb[0].mxu0 %v987
    %v1082 = vpop.f32.mrb[0].mxu0
    %v1083 = vadd.f32 %v938, %v1082
    %v1084 = vpop.f32.mrb[0].mxu0
    %1085 = vmatprep.mubr.f32.mxu0 0.0
    %1086 = vmatmul.mubr.f32.gmra.mrb[0].mxu0 %v990
    %v1087 = vpop.f32.mrb[0].mxu0
    %v1088 = vadd.f32 %v943, %v1087
    %v1089 = vpop.f32.mrb[0].mxu0
    %1090 = vmatprep.mubr.f32.mxu0 0.0
    %1091 = vmatmul.mubr.f32.gmra.mrb[0].mxu0 %v993
    %v1092 = vpop.f32.mrb[0].mxu0
    %v1093 = vadd.f32 %v948, %v1092
    %v1094 = vpop.f32.mrb[0].mxu0
    %1095 = vmatprep.mubr.f32.mxu0 0.0
    %1096 = vmatmul.mubr.f32.gmra.mrb[0].mxu0 %v996
    %v1097 = vpop.f32.mrb[0].mxu0
    %v1098 = vadd.f32 %v953, %v1097
    %v1099 = vpop.f32.mrb[0].mxu0
    %1100 = vmatprep.mubr.f32.mxu0 0.0
    %1101 = vmatmul.mubr.f32.gmra.mrb[0].mxu0 %v999
    %v1102 = vpop.f32.mrb[0].mxu0
    %v1103 = vadd.f32 %v958, %v1102
    %v1104 = vpop.f32.mrb[0].mxu0
    %1105 = vmatprep.mubr.f32.mxu0 0.0
    %1106 = vmatmul.mubr.f32.gmra.mrb[0].mxu0 %v1002
    %v1107 = vpop.f32.mrb[0].mxu0
    %v1108 = vadd.f32 %v963, %v1107
    %v1109 = vpop.f32.mrb[0].mxu0
    %1110 = vmatprep.mubr.f32.mxu0 0.0
    %1111 = vmatmul.mubr.f32.gmra.mrb[0].mxu0 %v1005
    %v1112 = vpop.f32.mrb[0].mxu0
    %v1113 = vadd.f32 %v968, %v1112
    %v1114 = vpop.f32.mrb[0].mxu0
    %1115 = vmatprep.mubr.f32.mxu0 0.0
    %1116 = vmatmul.mubr.f32.gmra.mrb[0].mxu0 %v1008
    %v1117 = vpop.f32.mrb[0].mxu0
    %v1118 = vadd.f32 %v973, %v1117
    %v1119 = vpop.f32.mrb[0].mxu0
    %1120 = vmatprep.mubr.f32.mxu0 0.0
    %1121 = vmatmul.mubr.f32.gmra.mrb[0].mxu0 %v1011
    %v1122 = vpop.f32.mrb[0].mxu0
    %v1123 = vadd.f32 %v978, %v1122
    %v1124 = vpop.f32.mrb[0].mxu0
    %1125 = vmatprep.mubr.f32.mxu0 0.0
    %1126 = vmatmul.mubr.f32.gmra.mrb[0].mxu0 %v1014
    %v1127 = vpop.f32.mrb[0].mxu0
    %v1128 = vadd.f32 %v983, %v1127
    %v1129 = vpop.f32.mrb[0].mxu0
    %1130 = vdwg.mxu0
    %v1131 = vld [vmem:[#allocation2 + $0x1] sm:$0xff]
    %v1132 = vld [vmem:[#allocation2 + $0x9] sm:$0xff]
    %v1133 = vld [vmem:[#allocation2 + $0x11] sm:$0xff]
    %v1134 = vld [vmem:[#allocation2 + $0x19] sm:$0xff]
    %v1135 = vld [vmem:[#allocation2 + $0x21] sm:$0xff]
    %v1136 = vld [vmem:[#allocation2 + $0x29] sm:$0xff]
    %v1137 = vld [vmem:[#allocation2 + $0x31] sm:$0xff]
    %v1138 = vld [vmem:[#allocation2 + $0x39] sm:$0xff]
    %v1139 = vld [vmem:[#allocation2 + $0x41] sm:$0xff]
    %v1140 = vld [vmem:[#allocation2 + $0x49] sm:$0x1]
    %s1141 = scalar_lea.vmem %s3, 128
    %v1142 = vld [vmem:[%s1141] sm:$0xff]
    %v1143 = vld [vmem:[%s1141 + $0x8] sm:$0xff]
    %v1144 = vld [vmem:[%s1141 + $0x10] sm:$0xff]
    %v1145 = vld [vmem:[%s1141 + $0x18] sm:$0xff]
    %v1146 = vld [vmem:[%s1141 + $0x20] sm:$0xff]
    %v1147 = vld [vmem:[%s1141 + $0x28] sm:$0xff]
    %v1148 = vld [vmem:[%s1141 + $0x30] sm:$0xff]
    %v1149 = vld [vmem:[%s1141 + $0x38] sm:$0xff]
    %v1151 = vsel %vm220, %v1131, 0
    %v1154 = vsel %vm220, %v1132, 0
    %v1157 = vsel %vm220, %v1133, 0
    %v1160 = vsel %vm220, %v1134, 0
    %v1163 = vsel %vm220, %v1135, 0
    %v1166 = vsel %vm220, %v1136, 0
    %v1169 = vsel %vm220, %v1137, 0
    %v1172 = vsel %vm220, %v1138, 0
    %v1175 = vsel %vm220, %v1139, 0
    %v1178 = vsel %vm220, %v1140, 0
    %1180 = vmatprep.subr.mxu0 0.0
    %1181 = vmatpush1.msra.mxu0 %v1142
    %1182 = vmatprep.subr.mxu0 0.0
    %1183 = vmatpush1.msra.mxu0 %v1143
    %1184 = vmatprep.subr.mxu0 0.0
    %1185 = vmatpush1.msra.mxu0 %v1144
    %1186 = vmatprep.subr.mxu0 0.0
    %1187 = vmatpush1.msra.mxu0 %v1145
    %1188 = vmatprep.subr.mxu0 0.0
    %1189 = vmatpush1.msra.mxu0 %v1146
    %1190 = vmatprep.subr.mxu0 0.0
    %1191 = vmatpush1.msra.mxu0 %v1147
    %1192 = vmatprep.subr.mxu0 0.0
    %1193 = vmatpush1.msra.mxu0 %v1148
    %1194 = vmatprep.subr.mxu0 0.0
    %1195 = vmatpush1.msra.mxu0 %v1149
    %1196 = vmatprep.subr.mxu0 0.0
    %1197 = vmatpush1.msra.mxu0 0.0
    %1198 = vmatprep.subr.mxu0 0.0
    %1199 = vmatpush1.msra.mxu0 0.0
    %1200 = vmatprep.subr.mxu0 0.0
    %1201 = vmatpush1.msra.mxu0 0.0
    %1202 = vmatprep.subr.mxu0 0.0
    %1203 = vmatpush1.msra.mxu0 0.0
    %1204 = vmatprep.subr.mxu0 0.0
    %1205 = vmatpush1.msra.mxu0 0.0
    %1206 = vmatprep.subr.mxu0 0.0
    %1207 = vmatpush1.msra.mxu0 0.0
    %1208 = vmatprep.subr.mxu0 0.0
    %1209 = vmatpush1.msra.mxu0 0.0
    %1210 = vmatprep.subr.mxu0 0.0
    %1211 = vmatpush1.msra.mxu0 0.0
    %1212 = vmatprep.subr.mxu0 0.0
    %1213 = vmatpush1.msra.mxu0 0.0
    %1214 = vmatprep.subr.mxu0 0.0
    %1215 = vmatpush1.msra.mxu0 0.0
    %1216 = vmatprep.subr.mxu0 0.0
    %1217 = vmatpush1.msra.mxu0 0.0
    %1218 = vmatprep.subr.mxu0 0.0
    %1219 = vmatpush1.msra.mxu0 0.0
    %1220 = vmatprep.subr.mxu0 0.0
    %1221 = vmatpush1.msra.mxu0 0.0
    %1222 = vmatprep.subr.mxu0 0.0
    %1223 = vmatpush1.msra.mxu0 0.0
    %1224 = vmatprep.subr.mxu0 0.0
    %1225 = vmatpush1.msra.mxu0 0.0
    %1226 = vmatprep.subr.mxu0 0.0
    %1227 = vmatpush1.msra.mxu0 0.0
    %1228 = vmatprep.subr.mxu0 0.0
    %1229 = vmatpush1.msra.mxu0 0.0
    %1230 = vmatprep.subr.mxu0 0.0
    %1231 = vmatpush1.msra.mxu0 0.0
    %1232 = vmatprep.subr.mxu0 0.0
    %1233 = vmatpush1.msra.mxu0 0.0
    %1234 = vmatprep.subr.mxu0 0.0
    %1235 = vmatpush1.msra.mxu0 0.0
    %1236 = vmatprep.subr.mxu0 0.0
    %1237 = vmatpush1.msra.mxu0 0.0
    %1238 = vmatprep.subr.mxu0 0.0
    %1239 = vmatpush1.msra.mxu0 0.0
    %1240 = vmatprep.subr.mxu0 0.0
    %1241 = vmatpush1.msra.mxu0 0.0
    %1242 = vmatprep.subr.mxu0 0.0
    %1243 = vmatpush1.msra.mxu0 0.0
    %1244 = vmatprep.mubr.f32.mxu0 0.0
    %1245 = vmatmul.mubr.f32.gmra.mrb[0].mxu0 %v1151
    %v1246 = vpop.f32.mrb[0].mxu0
    %v1247 = vadd.f32 0.0, %v1246
    %v1248 = vpop.f32.mrb[0].mxu0
    %1249 = vmatprep.mubr.f32.mxu0 0.0
    %1250 = vmatmul.mubr.f32.gmra.mrb[0].mxu0 %v1154
    %v1251 = vpop.f32.mrb[0].mxu0
    %v1252 = vadd.f32 0.0, %v1251
    %v1253 = vpop.f32.mrb[0].mxu0
    %1254 = vmatprep.mubr.f32.mxu0 0.0
    %1255 = vmatmul.mubr.f32.gmra.mrb[0].mxu0 %v1157
    %v1256 = vpop.f32.mrb[0].mxu0
    %v1257 = vadd.f32 0.0, %v1256
    %v1258 = vpop.f32.mrb[0].mxu0
    %1259 = vmatprep.mubr.f32.mxu0 0.0
    %1260 = vmatmul.mubr.f32.gmra.mrb[0].mxu0 %v1160
    %v1261 = vpop.f32.mrb[0].mxu0
    %v1262 = vadd.f32 0.0, %v1261
    %v1263 = vpop.f32.mrb[0].mxu0
    %1264 = vmatprep.mubr.f32.mxu0 0.0
    %1265 = vmatmul.mubr.f32.gmra.mrb[0].mxu0 %v1163
    %v1266 = vpop.f32.mrb[0].mxu0
    %v1267 = vadd.f32 0.0, %v1266
    %v1268 = vpop.f32.mrb[0].mxu0
    %1269 = vmatprep.mubr.f32.mxu0 0.0
    %1270 = vmatmul.mubr.f32.gmra.mrb[0].mxu0 %v1166
    %v1271 = vpop.f32.mrb[0].mxu0
    %v1272 = vadd.f32 0.0, %v1271
    %v1273 = vpop.f32.mrb[0].mxu0
    %1274 = vmatprep.mubr.f32.mxu0 0.0
    %1275 = vmatmul.mubr.f32.gmra.mrb[0].mxu0 %v1169
    %v1276 = vpop.f32.mrb[0].mxu0
    %v1277 = vadd.f32 0.0, %v1276
    %v1278 = vpop.f32.mrb[0].mxu0
    %1279 = vmatprep.mubr.f32.mxu0 0.0
    %1280 = vmatmul.mubr.f32.gmra.mrb[0].mxu0 %v1172
    %v1281 = vpop.f32.mrb[0].mxu0
    %v1282 = vadd.f32 0.0, %v1281
    %v1283 = vpop.f32.mrb[0].mxu0
    %1284 = vmatprep.mubr.f32.mxu0 0.0
    %1285 = vmatmul.mubr.f32.gmra.mrb[0].mxu0 %v1175
    %v1286 = vpop.f32.mrb[0].mxu0
    %v1287 = vadd.f32 0.0, %v1286
    %v1288 = vpop.f32.mrb[0].mxu0
    %1289 = vmatprep.mubr.f32.mxu0 0.0
    %1290 = vmatmul.mubr.f32.gmra.mrb[0].mxu0 %v1178
    %v1291 = vpop.f32.mrb[0].mxu0
    %v1292 = vadd.f32 0.0, %v1291
    %v1293 = vpop.f32.mrb[0].mxu0
    %1294 = vdwg.mxu0
    %v1295 = vadd.f32 %v1083, %v1247
    %v1296 = vadd.f32 %v1088, %v1252
    %v1297 = vadd.f32 %v1093, %v1257
    %v1298 = vadd.f32 %v1098, %v1262
    %v1299 = vadd.f32 %v1103, %v1267
    %v1300 = vadd.f32 %v1108, %v1272
    %v1301 = vadd.f32 %v1113, %v1277
    %v1302 = vadd.f32 %v1118, %v1282
    %v1303 = vadd.f32 %v1123, %v1287
    %v1304 = vadd.f32 %v1128, %v1292
    %v1305 = vld [vmem:[%s602] sm:$0xff]
    %v1306 = vld [vmem:[%s602 + $0x8] sm:$0xff]
    %v1307 = vld [vmem:[%s602 + $0x10] sm:$0xff]
    %v1308 = vld [vmem:[%s602 + $0x18] sm:$0xff]
    %v1309 = vld [vmem:[%s602 + $0x20] sm:$0xff]
    %v1310 = vld [vmem:[%s602 + $0x28] sm:$0xff]
    %v1311 = vld [vmem:[%s602 + $0x30] sm:$0xff]
    %v1312 = vld [vmem:[%s602 + $0x38] sm:$0xff]
    %v1313 = vld [vmem:[%s602 + $0x40] sm:$0xff]
    %v1314 = vld [vmem:[%s602 + $0x48] sm:$0x1]
    %s1315 = scalar_lea.vmem %s3, 192
    %v1316 = vld [vmem:[%s1315] sm:$0xff]
    %v1317 = vld [vmem:[%s1315 + $0x8] sm:$0xff]
    %v1318 = vld [vmem:[%s1315 + $0x10] sm:$0xff]
    %v1319 = vld [vmem:[%s1315 + $0x18] sm:$0xff]
    %v1320 = vld [vmem:[%s1315 + $0x20] sm:$0xff]
    %v1321 = vld [vmem:[%s1315 + $0x28] sm:$0xff]
    %v1322 = vld [vmem:[%s1315 + $0x30] sm:$0xff]
    %v1323 = vld [vmem:[%s1315 + $0x38] sm:$0xff]
    %v1325 = vsel %vm220, %v1305, 0
    %v1328 = vsel %vm220, %v1306, 0
    %v1331 = vsel %vm220, %v1307, 0
    %v1334 = vsel %vm220, %v1308, 0
    %v1337 = vsel %vm220, %v1309, 0
    %v1340 = vsel %vm220, %v1310, 0
    %v1343 = vsel %vm220, %v1311, 0
    %v1346 = vsel %vm220, %v1312, 0
    %v1349 = vsel %vm220, %v1313, 0
    %v1352 = vsel %vm220, %v1314, 0
    %1354 = vmatprep.subr.mxu0 0.0
    %1355 = vmatpush1.msra.mxu0 %v1316
    %1356 = vmatprep.subr.mxu0 0.0
    %1357 = vmatpush1.msra.mxu0 %v1317
    %1358 = vmatprep.subr.mxu0 0.0
    %1359 = vmatpush1.msra.mxu0 %v1318
    %1360 = vmatprep.subr.mxu0 0.0
    %1361 = vmatpush1.msra.mxu0 %v1319
    %1362 = vmatprep.subr.mxu0 0.0
    %1363 = vmatpush1.msra.mxu0 %v1320
    %1364 = vmatprep.subr.mxu0 0.0
    %1365 = vmatpush1.msra.mxu0 %v1321
    %1366 = vmatprep.subr.mxu0 0.0
    %1367 = vmatpush1.msra.mxu0 %v1322
    %1368 = vmatprep.subr.mxu0 0.0
    %1369 = vmatpush1.msra.mxu0 %v1323
    %1370 = vmatprep.subr.mxu0 0.0
    %1371 = vmatpush1.msra.mxu0 0.0
    %1372 = vmatprep.subr.mxu0 0.0
    %1373 = vmatpush1.msra.mxu0 0.0
    %1374 = vmatprep.subr.mxu0 0.0
    %1375 = vmatpush1.msra.mxu0 0.0
    %1376 = vmatprep.subr.mxu0 0.0
    %1377 = vmatpush1.msra.mxu0 0.0
    %1378 = vmatprep.subr.mxu0 0.0
    %1379 = vmatpush1.msra.mxu0 0.0
    %1380 = vmatprep.subr.mxu0 0.0
    %1381 = vmatpush1.msra.mxu0 0.0
    %1382 = vmatprep.subr.mxu0 0.0
    %1383 = vmatpush1.msra.mxu0 0.0
    %1384 = vmatprep.subr.mxu0 0.0
    %1385 = vmatpush1.msra.mxu0 0.0
    %1386 = vmatprep.subr.mxu0 0.0
    %1387 = vmatpush1.msra.mxu0 0.0
    %1388 = vmatprep.subr.mxu0 0.0
    %1389 = vmatpush1.msra.mxu0 0.0
    %1390 = vmatprep.subr.mxu0 0.0
    %1391 = vmatpush1.msra.mxu0 0.0
    %1392 = vmatprep.subr.mxu0 0.0
    %1393 = vmatpush1.msra.mxu0 0.0
    %1394 = vmatprep.subr.mxu0 0.0
    %1395 = vmatpush1.msra.mxu0 0.0
    %1396 = vmatprep.subr.mxu0 0.0
    %1397 = vmatpush1.msra.mxu0 0.0
    %1398 = vmatprep.subr.mxu0 0.0
    %1399 = vmatpush1.msra.mxu0 0.0
    %1400 = vmatprep.subr.mxu0 0.0
    %1401 = vmatpush1.msra.mxu0 0.0
    %1402 = vmatprep.subr.mxu0 0.0
    %1403 = vmatpush1.msra.mxu0 0.0
    %1404 = vmatprep.subr.mxu0 0.0
    %1405 = vmatpush1.msra.mxu0 0.0
    %1406 = vmatprep.subr.mxu0 0.0
    %1407 = vmatpush1.msra.mxu0 0.0
    %1408 = vmatprep.subr.mxu0 0.0
    %1409 = vmatpush1.msra.mxu0 0.0
    %1410 = vmatprep.subr.mxu0 0.0
    %1411 = vmatpush1.msra.mxu0 0.0
    %1412 = vmatprep.subr.mxu0 0.0
    %1413 = vmatpush1.msra.mxu0 0.0
    %1414 = vmatprep.subr.mxu0 0.0
    %1415 = vmatpush1.msra.mxu0 0.0
    %1416 = vmatprep.subr.mxu0 0.0
    %1417 = vmatpush1.msra.mxu0 0.0
    %1418 = vmatprep.mubr.f32.mxu0 0.0
    %1419 = vmatmul.mubr.f32.gmra.mrb[0].mxu0 %v1325
    %v1420 = vpop.f32.mrb[0].mxu0
    %v1421 = vadd.f32 0.0, %v1420
    %v1422 = vpop.f32.mrb[0].mxu0
    %1423 = vmatprep.mubr.f32.mxu0 0.0
    %1424 = vmatmul.mubr.f32.gmra.mrb[0].mxu0 %v1328
    %v1425 = vpop.f32.mrb[0].mxu0
    %v1426 = vadd.f32 0.0, %v1425
    %v1427 = vpop.f32.mrb[0].mxu0
    %1428 = vmatprep.mubr.f32.mxu0 0.0
    %1429 = vmatmul.mubr.f32.gmra.mrb[0].mxu0 %v1331
    %v1430 = vpop.f32.mrb[0].mxu0
    %v1431 = vadd.f32 0.0, %v1430
    %v1432 = vpop.f32.mrb[0].mxu0
    %1433 = vmatprep.mubr.f32.mxu0 0.0
    %1434 = vmatmul.mubr.f32.gmra.mrb[0].mxu0 %v1334
    %v1435 = vpop.f32.mrb[0].mxu0
    %v1436 = vadd.f32 0.0, %v1435
    %v1437 = vpop.f32.mrb[0].mxu0
    %1438 = vmatprep.mubr.f32.mxu0 0.0
    %1439 = vmatmul.mubr.f32.gmra.mrb[0].mxu0 %v1337
    %v1440 = vpop.f32.mrb[0].mxu0
    %v1441 = vadd.f32 0.0, %v1440
    %v1442 = vpop.f32.mrb[0].mxu0
    %1443 = vmatprep.mubr.f32.mxu0 0.0
    %1444 = vmatmul.mubr.f32.gmra.mrb[0].mxu0 %v1340
    %v1445 = vpop.f32.mrb[0].mxu0
    %v1446 = vadd.f32 0.0, %v1445
    %v1447 = vpop.f32.mrb[0].mxu0
    %1448 = vmatprep.mubr.f32.mxu0 0.0
    %1449 = vmatmul.mubr.f32.gmra.mrb[0].mxu0 %v1343
    %v1450 = vpop.f32.mrb[0].mxu0
    %v1451 = vadd.f32 0.0, %v1450
    %v1452 = vpop.f32.mrb[0].mxu0
    %1453 = vmatprep.mubr.f32.mxu0 0.0
    %1454 = vmatmul.mubr.f32.gmra.mrb[0].mxu0 %v1346
    %v1455 = vpop.f32.mrb[0].mxu0
    %v1456 = vadd.f32 0.0, %v1455
    %v1457 = vpop.f32.mrb[0].mxu0
    %1458 = vmatprep.mubr.f32.mxu0 0.0
    %1459 = vmatmul.mubr.f32.gmra.mrb[0].mxu0 %v1349
    %v1460 = vpop.f32.mrb[0].mxu0
    %v1461 = vadd.f32 0.0, %v1460
    %v1462 = vpop.f32.mrb[0].mxu0
    %1463 = vmatprep.mubr.f32.mxu0 0.0
    %1464 = vmatmul.mubr.f32.gmra.mrb[0].mxu0 %v1352
    %v1465 = vpop.f32.mrb[0].mxu0
    %v1466 = vadd.f32 0.0, %v1465
    %v1467 = vpop.f32.mrb[0].mxu0
    %1468 = vdwg.mxu0
    %v1469 = vadd.f32 %v1295, %v1421
    %v1470 = vadd.f32 %v1296, %v1426
    %v1471 = vadd.f32 %v1297, %v1431
    %v1472 = vadd.f32 %v1298, %v1436
    %v1473 = vadd.f32 %v1299, %v1441
    %v1474 = vadd.f32 %v1300, %v1446
    %v1475 = vadd.f32 %v1301, %v1451
    %v1476 = vadd.f32 %v1302, %v1456
    %v1477 = vadd.f32 %v1303, %v1461
    %v1478 = vadd.f32 %v1304, %v1466
    %v1479 = vld [vmem:[%s793] sm:$0xff]
    %v1480 = vld [vmem:[%s793 + $0x8] sm:$0xff]
    %v1481 = vld [vmem:[%s793 + $0x10] sm:$0xff]
    %v1482 = vld [vmem:[%s793 + $0x18] sm:$0xff]
    %v1483 = vld [vmem:[%s793 + $0x20] sm:$0xff]
    %v1484 = vld [vmem:[%s793 + $0x28] sm:$0xff]
    %v1485 = vld [vmem:[%s793 + $0x30] sm:$0xff]
    %v1486 = vld [vmem:[%s793 + $0x38] sm:$0xff]
    %v1487 = vld [vmem:[%s793 + $0x40] sm:$0xff]
    %v1488 = vld [vmem:[%s793 + $0x48] sm:$0x1]
    %s1489 = scalar_lea.vmem %s3, 256
    %v1490 = vld [vmem:[%s1489] sm:$0xff]
    %v1491 = vld [vmem:[%s1489 + $0x8] sm:$0xff]
    %v1492 = vld [vmem:[%s1489 + $0x10] sm:$0xff]
    %v1493 = vld [vmem:[%s1489 + $0x18] sm:$0xff]
    %v1494 = vld [vmem:[%s1489 + $0x20] sm:$0xff]
    %v1495 = vld [vmem:[%s1489 + $0x28] sm:$0xff]
    %v1496 = vld [vmem:[%s1489 + $0x30] sm:$0xff]
    %v1497 = vld [vmem:[%s1489 + $0x38] sm:$0xff]
    %v1499 = vsel %vm220, %v1479, 0
    %v1502 = vsel %vm220, %v1480, 0
    %v1505 = vsel %vm220, %v1481, 0
    %v1508 = vsel %vm220, %v1482, 0
    %v1511 = vsel %vm220, %v1483, 0
    %v1514 = vsel %vm220, %v1484, 0
    %v1517 = vsel %vm220, %v1485, 0
    %v1520 = vsel %vm220, %v1486, 0
    %v1523 = vsel %vm220, %v1487, 0
    %v1526 = vsel %vm220, %v1488, 0
    %1528 = vmatprep.subr.mxu0 0.0
    %1529 = vmatpush1.msra.mxu0 %v1490
    %1530 = vmatprep.subr.mxu0 0.0
    %1531 = vmatpush1.msra.mxu0 %v1491
    %1532 = vmatprep.subr.mxu0 0.0
    %1533 = vmatpush1.msra.mxu0 %v1492
    %1534 = vmatprep.subr.mxu0 0.0
    %1535 = vmatpush1.msra.mxu0 %v1493
    %1536 = vmatprep.subr.mxu0 0.0
    %1537 = vmatpush1.msra.mxu0 %v1494
    %1538 = vmatprep.subr.mxu0 0.0
    %1539 = vmatpush1.msra.mxu0 %v1495
    %1540 = vmatprep.subr.mxu0 0.0
    %1541 = vmatpush1.msra.mxu0 %v1496
    %1542 = vmatprep.subr.mxu0 0.0
    %1543 = vmatpush1.msra.mxu0 %v1497
    %1544 = vmatprep.subr.mxu0 0.0
    %1545 = vmatpush1.msra.mxu0 0.0
    %1546 = vmatprep.subr.mxu0 0.0
    %1547 = vmatpush1.msra.mxu0 0.0
    %1548 = vmatprep.subr.mxu0 0.0
    %1549 = vmatpush1.msra.mxu0 0.0
    %1550 = vmatprep.subr.mxu0 0.0
    %1551 = vmatpush1.msra.mxu0 0.0
    %1552 = vmatprep.subr.mxu0 0.0
    %1553 = vmatpush1.msra.mxu0 0.0
    %1554 = vmatprep.subr.mxu0 0.0
    %1555 = vmatpush1.msra.mxu0 0.0
    %1556 = vmatprep.subr.mxu0 0.0
    %1557 = vmatpush1.msra.mxu0 0.0
    %1558 = vmatprep.subr.mxu0 0.0
    %1559 = vmatpush1.msra.mxu0 0.0
    %1560 = vmatprep.subr.mxu0 0.0
    %1561 = vmatpush1.msra.mxu0 0.0
    %1562 = vmatprep.subr.mxu0 0.0
    %1563 = vmatpush1.msra.mxu0 0.0
    %1564 = vmatprep.subr.mxu0 0.0
    %1565 = vmatpush1.msra.mxu0 0.0
    %1566 = vmatprep.subr.mxu0 0.0
    %1567 = vmatpush1.msra.mxu0 0.0
    %1568 = vmatprep.subr.mxu0 0.0
    %1569 = vmatpush1.msra.mxu0 0.0
    %1570 = vmatprep.subr.mxu0 0.0
    %1571 = vmatpush1.msra.mxu0 0.0
    %1572 = vmatprep.subr.mxu0 0.0
    %1573 = vmatpush1.msra.mxu0 0.0
    %1574 = vmatprep.subr.mxu0 0.0
    %1575 = vmatpush1.msra.mxu0 0.0
    %1576 = vmatprep.subr.mxu0 0.0
    %1577 = vmatpush1.msra.mxu0 0.0
    %1578 = vmatprep.subr.mxu0 0.0
    %1579 = vmatpush1.msra.mxu0 0.0
    %1580 = vmatprep.subr.mxu0 0.0
    %1581 = vmatpush1.msra.mxu0 0.0
    %1582 = vmatprep.subr.mxu0 0.0
    %1583 = vmatpush1.msra.mxu0 0.0
    %1584 = vmatprep.subr.mxu0 0.0
    %1585 = vmatpush1.msra.mxu0 0.0
    %1586 = vmatprep.subr.mxu0 0.0
    %1587 = vmatpush1.msra.mxu0 0.0
    %1588 = vmatprep.subr.mxu0 0.0
    %1589 = vmatpush1.msra.mxu0 0.0
    %1590 = vmatprep.subr.mxu0 0.0
    %1591 = vmatpush1.msra.mxu0 0.0
    %1592 = vmatprep.mubr.f32.mxu0 0.0
    %1593 = vmatmul.mubr.f32.gmra.mrb[0].mxu0 %v1499
    %v1594 = vpop.f32.mrb[0].mxu0
    %v1595 = vadd.f32 0.0, %v1594
    %v1596 = vpop.f32.mrb[0].mxu0
    %1597 = vmatprep.mubr.f32.mxu0 0.0
    %1598 = vmatmul.mubr.f32.gmra.mrb[0].mxu0 %v1502
    %v1599 = vpop.f32.mrb[0].mxu0
    %v1600 = vadd.f32 0.0, %v1599
    %v1601 = vpop.f32.mrb[0].mxu0
    %1602 = vmatprep.mubr.f32.mxu0 0.0
    %1603 = vmatmul.mubr.f32.gmra.mrb[0].mxu0 %v1505
    %v1604 = vpop.f32.mrb[0].mxu0
    %v1605 = vadd.f32 0.0, %v1604
    %v1606 = vpop.f32.mrb[0].mxu0
    %1607 = vmatprep.mubr.f32.mxu0 0.0
    %1608 = vmatmul.mubr.f32.gmra.mrb[0].mxu0 %v1508
    %v1609 = vpop.f32.mrb[0].mxu0
    %v1610 = vadd.f32 0.0, %v1609
    %v1611 = vpop.f32.mrb[0].mxu0
    %1612 = vmatprep.mubr.f32.mxu0 0.0
    %1613 = vmatmul.mubr.f32.gmra.mrb[0].mxu0 %v1511
    %v1614 = vpop.f32.mrb[0].mxu0
    %v1615 = vadd.f32 0.0, %v1614
    %v1616 = vpop.f32.mrb[0].mxu0
    %1617 = vmatprep.mubr.f32.mxu0 0.0
    %1618 = vmatmul.mubr.f32.gmra.mrb[0].mxu0 %v1514
    %v1619 = vpop.f32.mrb[0].mxu0
    %v1620 = vadd.f32 0.0, %v1619
    %v1621 = vpop.f32.mrb[0].mxu0
    %1622 = vmatprep.mubr.f32.mxu0 0.0
    %1623 = vmatmul.mubr.f32.gmra.mrb[0].mxu0 %v1517
    %v1624 = vpop.f32.mrb[0].mxu0
    %v1625 = vadd.f32 0.0, %v1624
    %v1626 = vpop.f32.mrb[0].mxu0
    %1627 = vmatprep.mubr.f32.mxu0 0.0
    %1628 = vmatmul.mubr.f32.gmra.mrb[0].mxu0 %v1520
    %v1629 = vpop.f32.mrb[0].mxu0
    %v1630 = vadd.f32 0.0, %v1629
    %v1631 = vpop.f32.mrb[0].mxu0
    %1632 = vmatprep.mubr.f32.mxu0 0.0
    %1633 = vmatmul.mubr.f32.gmra.mrb[0].mxu0 %v1523
    %v1634 = vpop.f32.mrb[0].mxu0
    %v1635 = vadd.f32 0.0, %v1634
    %v1636 = vpop.f32.mrb[0].mxu0
    %1637 = vmatprep.mubr.f32.mxu0 0.0
    %1638 = vmatmul.mubr.f32.gmra.mrb[0].mxu0 %v1526
    %v1639 = vpop.f32.mrb[0].mxu0
    %v1640 = vadd.f32 0.0, %v1639
    %v1641 = vpop.f32.mrb[0].mxu0
    %1642 = vdwg.mxu0
    %v1643 = vadd.f32 %v1469, %v1595
    %v1644 = vadd.f32 %v1470, %v1600
    %v1645 = vadd.f32 %v1471, %v1605
    %v1646 = vadd.f32 %v1472, %v1610
    %v1647 = vadd.f32 %v1473, %v1615
    %v1648 = vadd.f32 %v1474, %v1620
    %v1649 = vadd.f32 %v1475, %v1625
    %v1650 = vadd.f32 %v1476, %v1630
    %v1651 = vadd.f32 %v1477, %v1635
    %v1652 = vadd.f32 %v1478, %v1640
    %v1653 = vld [vmem:[%s602 + $0x1] sm:$0xff]
    %v1654 = vld [vmem:[%s602 + $0x9] sm:$0xff]
    %v1655 = vld [vmem:[%s602 + $0x11] sm:$0xff]
    %v1656 = vld [vmem:[%s602 + $0x19] sm:$0xff]
    %v1657 = vld [vmem:[%s602 + $0x21] sm:$0xff]
    %v1658 = vld [vmem:[%s602 + $0x29] sm:$0xff]
    %v1659 = vld [vmem:[%s602 + $0x31] sm:$0xff]
    %v1660 = vld [vmem:[%s602 + $0x39] sm:$0xff]
    %v1661 = vld [vmem:[%s602 + $0x41] sm:$0xff]
    %v1662 = vld [vmem:[%s602 + $0x49] sm:$0x1]
    %s1663 = scalar_lea.vmem %s3, 320
    %v1664 = vld [vmem:[%s1663] sm:$0xff]
    %v1665 = vld [vmem:[%s1663 + $0x8] sm:$0xff]
    %v1666 = vld [vmem:[%s1663 + $0x10] sm:$0xff]
    %v1667 = vld [vmem:[%s1663 + $0x18] sm:$0xff]
    %v1668 = vld [vmem:[%s1663 + $0x20] sm:$0xff]
    %v1669 = vld [vmem:[%s1663 + $0x28] sm:$0xff]
    %v1670 = vld [vmem:[%s1663 + $0x30] sm:$0xff]
    %v1671 = vld [vmem:[%s1663 + $0x38] sm:$0xff]
    %v1673 = vsel %vm220, %v1653, 0
    %v1676 = vsel %vm220, %v1654, 0
    %v1679 = vsel %vm220, %v1655, 0
    %v1682 = vsel %vm220, %v1656, 0
    %v1685 = vsel %vm220, %v1657, 0
    %v1688 = vsel %vm220, %v1658, 0
    %v1691 = vsel %vm220, %v1659, 0
    %v1694 = vsel %vm220, %v1660, 0
    %v1697 = vsel %vm220, %v1661, 0
    %v1700 = vsel %vm220, %v1662, 0
    %1702 = vmatprep.subr.mxu0 0.0
    %1703 = vmatpush1.msra.mxu0 %v1664
    %1704 = vmatprep.subr.mxu0 0.0
    %1705 = vmatpush1.msra.mxu0 %v1665
    %1706 = vmatprep.subr.mxu0 0.0
    %1707 = vmatpush1.msra.mxu0 %v1666
    %1708 = vmatprep.subr.mxu0 0.0
    %1709 = vmatpush1.msra.mxu0 %v1667
    %1710 = vmatprep.subr.mxu0 0.0
    %1711 = vmatpush1.msra.mxu0 %v1668
    %1712 = vmatprep.subr.mxu0 0.0
    %1713 = vmatpush1.msra.mxu0 %v1669
    %1714 = vmatprep.subr.mxu0 0.0
    %1715 = vmatpush1.msra.mxu0 %v1670
    %1716 = vmatprep.subr.mxu0 0.0
    %1717 = vmatpush1.msra.mxu0 %v1671
    %1718 = vmatprep.subr.mxu0 0.0
    %1719 = vmatpush1.msra.mxu0 0.0
    %1720 = vmatprep.subr.mxu0 0.0
    %1721 = vmatpush1.msra.mxu0 0.0
    %1722 = vmatprep.subr.mxu0 0.0
    %1723 = vmatpush1.msra.mxu0 0.0
    %1724 = vmatprep.subr.mxu0 0.0
    %1725 = vmatpush1.msra.mxu0 0.0
    %1726 = vmatprep.subr.mxu0 0.0
    %1727 = vmatpush1.msra.mxu0 0.0
    %1728 = vmatprep.subr.mxu0 0.0
    %1729 = vmatpush1.msra.mxu0 0.0
    %1730 = vmatprep.subr.mxu0 0.0
    %1731 = vmatpush1.msra.mxu0 0.0
    %1732 = vmatprep.subr.mxu0 0.0
    %1733 = vmatpush1.msra.mxu0 0.0
    %1734 = vmatprep.subr.mxu0 0.0
    %1735 = vmatpush1.msra.mxu0 0.0
    %1736 = vmatprep.subr.mxu0 0.0
    %1737 = vmatpush1.msra.mxu0 0.0
    %1738 = vmatprep.subr.mxu0 0.0
    %1739 = vmatpush1.msra.mxu0 0.0
    %1740 = vmatprep.subr.mxu0 0.0
    %1741 = vmatpush1.msra.mxu0 0.0
    %1742 = vmatprep.subr.mxu0 0.0
    %1743 = vmatpush1.msra.mxu0 0.0
    %1744 = vmatprep.subr.mxu0 0.0
    %1745 = vmatpush1.msra.mxu0 0.0
    %1746 = vmatprep.subr.mxu0 0.0
    %1747 = vmatpush1.msra.mxu0 0.0
    %1748 = vmatprep.subr.mxu0 0.0
    %1749 = vmatpush1.msra.mxu0 0.0
    %1750 = vmatprep.subr.mxu0 0.0
    %1751 = vmatpush1.msra.mxu0 0.0
    %1752 = vmatprep.subr.mxu0 0.0
    %1753 = vmatpush1.msra.mxu0 0.0
    %1754 = vmatprep.subr.mxu0 0.0
    %1755 = vmatpush1.msra.mxu0 0.0
    %1756 = vmatprep.subr.mxu0 0.0
    %1757 = vmatpush1.msra.mxu0 0.0
    %1758 = vmatprep.subr.mxu0 0.0
    %1759 = vmatpush1.msra.mxu0 0.0
    %1760 = vmatprep.subr.mxu0 0.0
    %1761 = vmatpush1.msra.mxu0 0.0
    %1762 = vmatprep.subr.mxu0 0.0
    %1763 = vmatpush1.msra.mxu0 0.0
    %1764 = vmatprep.subr.mxu0 0.0
    %1765 = vmatpush1.msra.mxu0 0.0
    %1766 = vmatprep.mubr.f32.mxu0 0.0
    %1767 = vmatmul.mubr.f32.gmra.mrb[0].mxu0 %v1673
    %v1768 = vpop.f32.mrb[0].mxu0
    %v1769 = vadd.f32 0.0, %v1768
    %v1770 = vpop.f32.mrb[0].mxu0
    %1771 = vmatprep.mubr.f32.mxu0 0.0
    %1772 = vmatmul.mubr.f32.gmra.mrb[0].mxu0 %v1676
    %v1773 = vpop.f32.mrb[0].mxu0
    %v1774 = vadd.f32 0.0, %v1773
    %v1775 = vpop.f32.mrb[0].mxu0
    %1776 = vmatprep.mubr.f32.mxu0 0.0
    %1777 = vmatmul.mubr.f32.gmra.mrb[0].mxu0 %v1679
    %v1778 = vpop.f32.mrb[0].mxu0
    %v1779 = vadd.f32 0.0, %v1778
    %v1780 = vpop.f32.mrb[0].mxu0
    %1781 = vmatprep.mubr.f32.mxu0 0.0
    %1782 = vmatmul.mubr.f32.gmra.mrb[0].mxu0 %v1682
    %v1783 = vpop.f32.mrb[0].mxu0
    %v1784 = vadd.f32 0.0, %v1783
    %v1785 = vpop.f32.mrb[0].mxu0
    %1786 = vmatprep.mubr.f32.mxu0 0.0
    %1787 = vmatmul.mubr.f32.gmra.mrb[0].mxu0 %v1685
    %v1788 = vpop.f32.mrb[0].mxu0
    %v1789 = vadd.f32 0.0, %v1788
    %v1790 = vpop.f32.mrb[0].mxu0
    %1791 = vmatprep.mubr.f32.mxu0 0.0
    %1792 = vmatmul.mubr.f32.gmra.mrb[0].mxu0 %v1688
    %v1793 = vpop.f32.mrb[0].mxu0
    %v1794 = vadd.f32 0.0, %v1793
    %v1795 = vpop.f32.mrb[0].mxu0
    %1796 = vmatprep.mubr.f32.mxu0 0.0
    %1797 = vmatmul.mubr.f32.gmra.mrb[0].mxu0 %v1691
    %v1798 = vpop.f32.mrb[0].mxu0
    %v1799 = vadd.f32 0.0, %v1798
    %v1800 = vpop.f32.mrb[0].mxu0
    %1801 = vmatprep.mubr.f32.mxu0 0.0
    %1802 = vmatmul.mubr.f32.gmra.mrb[0].mxu0 %v1694
    %v1803 = vpop.f32.mrb[0].mxu0
    %v1804 = vadd.f32 0.0, %v1803
    %v1805 = vpop.f32.mrb[0].mxu0
    %1806 = vmatprep.mubr.f32.mxu0 0.0
    %1807 = vmatmul.mubr.f32.gmra.mrb[0].mxu0 %v1697
    %v1808 = vpop.f32.mrb[0].mxu0
    %v1809 = vadd.f32 0.0, %v1808
    %v1810 = vpop.f32.mrb[0].mxu0
    %1811 = vmatprep.mubr.f32.mxu0 0.0
    %1812 = vmatmul.mubr.f32.gmra.mrb[0].mxu0 %v1700
    %v1813 = vpop.f32.mrb[0].mxu0
    %v1814 = vadd.f32 0.0, %v1813
    %v1815 = vpop.f32.mrb[0].mxu0
    %1816 = vdwg.mxu0
    %v1817 = vadd.f32 %v1643, %v1769
    %v1818 = vadd.f32 %v1644, %v1774
    %v1819 = vadd.f32 %v1645, %v1779
    %v1820 = vadd.f32 %v1646, %v1784
    %v1821 = vadd.f32 %v1647, %v1789
    %v1822 = vadd.f32 %v1648, %v1794
    %v1823 = vadd.f32 %v1649, %v1799
    %v1824 = vadd.f32 %v1650, %v1804
    %v1825 = vadd.f32 %v1651, %v1809
    %v1826 = vadd.f32 %v1652, %v1814
    %v1827 = vld [vmem:[#allocation2 + $0x6] sm:$0xff]
    %v1828 = vld [vmem:[#allocation2 + $0xe] sm:$0xff]
    %v1829 = vld [vmem:[#allocation2 + $0x16] sm:$0xff]
    %v1830 = vld [vmem:[#allocation2 + $0x1e] sm:$0xff]
    %v1831 = vld [vmem:[#allocation2 + $0x26] sm:$0xff]
    %v1832 = vld [vmem:[#allocation2 + $0x2e] sm:$0xff]
    %v1833 = vld [vmem:[#allocation2 + $0x36] sm:$0xff]
    %v1834 = vld [vmem:[#allocation2 + $0x3e] sm:$0xff]
    %v1835 = vld [vmem:[#allocation2 + $0x46] sm:$0xff]
    %v1836 = vld [vmem:[#allocation2 + $0x4e] sm:$0x1]
    %s1837 = scalar_lea.vmem %s3, 384
    %v1838 = vld [vmem:[%s1837] sm:$0xff]
    %v1839 = vld [vmem:[%s1837 + $0x8] sm:$0xff]
    %v1840 = vld [vmem:[%s1837 + $0x10] sm:$0xff]
    %v1841 = vld [vmem:[%s1837 + $0x18] sm:$0xff]
    %v1842 = vld [vmem:[%s1837 + $0x20] sm:$0xff]
    %v1843 = vld [vmem:[%s1837 + $0x28] sm:$0xff]
    %v1844 = vld [vmem:[%s1837 + $0x30] sm:$0xff]
    %v1845 = vld [vmem:[%s1837 + $0x38] sm:$0xff]
    %v1847 = vsel %vm220, %v1827, 0
    %v1850 = vsel %vm220, %v1828, 0
    %v1853 = vsel %vm220, %v1829, 0
    %v1856 = vsel %vm220, %v1830, 0
    %v1859 = vsel %vm220, %v1831, 0
    %v1862 = vsel %vm220, %v1832, 0
    %v1865 = vsel %vm220, %v1833, 0
    %v1868 = vsel %vm220, %v1834, 0
    %v1871 = vsel %vm220, %v1835, 0
    %v1874 = vsel %vm220, %v1836, 0
    %1876 = vmatprep.subr.mxu0 0.0
    %1877 = vmatpush1.msra.mxu0 %v1838
    %1878 = vmatprep.subr.mxu0 0.0
    %1879 = vmatpush1.msra.mxu0 %v1839
    %1880 = vmatprep.subr.mxu0 0.0
    %1881 = vmatpush1.msra.mxu0 %v1840
    %1882 = vmatprep.subr.mxu0 0.0
    %1883 = vmatpush1.msra.mxu0 %v1841
    %1884 = vmatprep.subr.mxu0 0.0
    %1885 = vmatpush1.msra.mxu0 %v1842
    %1886 = vmatprep.subr.mxu0 0.0
    %1887 = vmatpush1.msra.mxu0 %v1843
    %1888 = vmatprep.subr.mxu0 0.0
    %1889 = vmatpush1.msra.mxu0 %v1844
    %1890 = vmatprep.subr.mxu0 0.0
    %1891 = vmatpush1.msra.mxu0 %v1845
    %1892 = vmatprep.subr.mxu0 0.0
    %1893 = vmatpush1.msra.mxu0 0.0
    %1894 = vmatprep.subr.mxu0 0.0
    %1895 = vmatpush1.msra.mxu0 0.0
    %1896 = vmatprep.subr.mxu0 0.0
    %1897 = vmatpush1.msra.mxu0 0.0
    %1898 = vmatprep.subr.mxu0 0.0
    %1899 = vmatpush1.msra.mxu0 0.0
    %1900 = vmatprep.subr.mxu0 0.0
    %1901 = vmatpush1.msra.mxu0 0.0
    %1902 = vmatprep.subr.mxu0 0.0
    %1903 = vmatpush1.msra.mxu0 0.0
    %1904 = vmatprep.subr.mxu0 0.0
    %1905 = vmatpush1.msra.mxu0 0.0
    %1906 = vmatprep.subr.mxu0 0.0
    %1907 = vmatpush1.msra.mxu0 0.0
    %1908 = vmatprep.subr.mxu0 0.0
    %1909 = vmatpush1.msra.mxu0 0.0
    %1910 = vmatprep.subr.mxu0 0.0
    %1911 = vmatpush1.msra.mxu0 0.0
    %1912 = vmatprep.subr.mxu0 0.0
    %1913 = vmatpush1.msra.mxu0 0.0
    %1914 = vmatprep.subr.mxu0 0.0
    %1915 = vmatpush1.msra.mxu0 0.0
    %1916 = vmatprep.subr.mxu0 0.0
    %1917 = vmatpush1.msra.mxu0 0.0
    %1918 = vmatprep.subr.mxu0 0.0
    %1919 = vmatpush1.msra.mxu0 0.0
    %1920 = vmatprep.subr.mxu0 0.0
    %1921 = vmatpush1.msra.mxu0 0.0
    %1922 = vmatprep.subr.mxu0 0.0
    %1923 = vmatpush1.msra.mxu0 0.0
    %1924 = vmatprep.subr.mxu0 0.0
    %1925 = vmatpush1.msra.mxu0 0.0
    %1926 = vmatprep.subr.mxu0 0.0
    %1927 = vmatpush1.msra.mxu0 0.0
    %1928 = vmatprep.subr.mxu0 0.0
    %1929 = vmatpush1.msra.mxu0 0.0
    %1930 = vmatprep.subr.mxu0 0.0
    %1931 = vmatpush1.msra.mxu0 0.0
    %1932 = vmatprep.subr.mxu0 0.0
    %1933 = vmatpush1.msra.mxu0 0.0
    %1934 = vmatprep.subr.mxu0 0.0
    %1935 = vmatpush1.msra.mxu0 0.0
    %1936 = vmatprep.subr.mxu0 0.0
    %1937 = vmatpush1.msra.mxu0 0.0
    %1938 = vmatprep.subr.mxu0 0.0
    %1939 = vmatpush1.msra.mxu0 0.0
    %1940 = vmatprep.mubr.f32.mxu0 0.0
    %1941 = vmatmul.mubr.f32.gmra.mrb[0].mxu0 %v1847
    %v1942 = vpop.f32.mrb[0].mxu0
    %v1943 = vadd.f32 0.0, %v1942
    %v1944 = vpop.f32.mrb[0].mxu0
    %1945 = vmatprep.mubr.f32.mxu0 0.0
    %1946 = vmatmul.mubr.f32.gmra.mrb[0].mxu0 %v1850
    %v1947 = vpop.f32.mrb[0].mxu0
    %v1948 = vadd.f32 0.0, %v1947
    %v1949 = vpop.f32.mrb[0].mxu0
    %1950 = vmatprep.mubr.f32.mxu0 0.0
    %1951 = vmatmul.mubr.f32.gmra.mrb[0].mxu0 %v1853
    %v1952 = vpop.f32.mrb[0].mxu0
    %v1953 = vadd.f32 0.0, %v1952
    %v1954 = vpop.f32.mrb[0].mxu0
    %1955 = vmatprep.mubr.f32.mxu0 0.0
    %1956 = vmatmul.mubr.f32.gmra.mrb[0].mxu0 %v1856
    %v1957 = vpop.f32.mrb[0].mxu0
    %v1958 = vadd.f32 0.0, %v1957
    %v1959 = vpop.f32.mrb[0].mxu0
    %1960 = vmatprep.mubr.f32.mxu0 0.0
    %1961 = vmatmul.mubr.f32.gmra.mrb[0].mxu0 %v1859
    %v1962 = vpop.f32.mrb[0].mxu0
    %v1963 = vadd.f32 0.0, %v1962
    %v1964 = vpop.f32.mrb[0].mxu0
    %1965 = vmatprep.mubr.f32.mxu0 0.0
    %1966 = vmatmul.mubr.f32.gmra.mrb[0].mxu0 %v1862
    %v1967 = vpop.f32.mrb[0].mxu0
    %v1968 = vadd.f32 0.0, %v1967
    %v1969 = vpop.f32.mrb[0].mxu0
    %1970 = vmatprep.mubr.f32.mxu0 0.0
    %1971 = vmatmul.mubr.f32.gmra.mrb[0].mxu0 %v1865
    %v1972 = vpop.f32.mrb[0].mxu0
    %v1973 = vadd.f32 0.0, %v1972
    %v1974 = vpop.f32.mrb[0].mxu0
    %1975 = vmatprep.mubr.f32.mxu0 0.0
    %1976 = vmatmul.mubr.f32.gmra.mrb[0].mxu0 %v1868
    %v1977 = vpop.f32.mrb[0].mxu0
    %v1978 = vadd.f32 0.0, %v1977
    %v1979 = vpop.f32.mrb[0].mxu0
    %1980 = vmatprep.mubr.f32.mxu0 0.0
    %1981 = vmatmul.mubr.f32.gmra.mrb[0].mxu0 %v1871
    %v1982 = vpop.f32.mrb[0].mxu0
    %v1983 = vadd.f32 0.0, %v1982
    %v1984 = vpop.f32.mrb[0].mxu0
    %1985 = vmatprep.mubr.f32.mxu0 0.0
    %1986 = vmatmul.mubr.f32.gmra.mrb[0].mxu0 %v1874
    %v1987 = vpop.f32.mrb[0].mxu0
    %v1988 = vadd.f32 0.0, %v1987
    %v1989 = vpop.f32.mrb[0].mxu0
    %1990 = vdwg.mxu0
    %v1991 = vadd.f32 %v1817, %v1943
    %v1992 = vadd.f32 %v1818, %v1948
    %v1993 = vadd.f32 %v1819, %v1953
    %v1994 = vadd.f32 %v1820, %v1958
    %v1995 = vadd.f32 %v1821, %v1963
    %v1996 = vadd.f32 %v1822, %v1968
    %v1997 = vadd.f32 %v1823, %v1973
    %v1998 = vadd.f32 %v1824, %v1978
    %v1999 = vadd.f32 %v1825, %v1983
    %v2000 = vadd.f32 %v1826, %v1988
    %v2001 = vld [vmem:[%s411 + $0x6] sm:$0xff]
    %v2002 = vld [vmem:[%s411 + $0xe] sm:$0xff]
    %v2003 = vld [vmem:[%s411 + $0x16] sm:$0xff]
    %v2004 = vld [vmem:[%s411 + $0x1e] sm:$0xff]
    %v2005 = vld [vmem:[%s411 + $0x26] sm:$0xff]
    %v2006 = vld [vmem:[%s411 + $0x2e] sm:$0xff]
    %v2007 = vld [vmem:[%s411 + $0x36] sm:$0xff]
    %v2008 = vld [vmem:[%s411 + $0x3e] sm:$0xff]
    %v2009 = vld [vmem:[%s411 + $0x46] sm:$0xff]
    %v2010 = vld [vmem:[%s411 + $0x4e] sm:$0x1]
    %s2011 = scalar_lea.vmem %s3, 448
    %v2012 = vld [vmem:[%s2011] sm:$0xff]
    %v2013 = vld [vmem:[%s2011 + $0x8] sm:$0xff]
    %v2014 = vld [vmem:[%s2011 + $0x10] sm:$0xff]
    %v2015 = vld [vmem:[%s2011 + $0x18] sm:$0xff]
    %v2016 = vld [vmem:[%s2011 + $0x20] sm:$0xff]
    %v2017 = vld [vmem:[%s2011 + $0x28] sm:$0xff]
    %v2018 = vld [vmem:[%s2011 + $0x30] sm:$0xff]
    %v2019 = vld [vmem:[%s2011 + $0x38] sm:$0xff]
    %v2021 = vsel %vm220, %v2001, 0
    %v2024 = vsel %vm220, %v2002, 0
    %v2027 = vsel %vm220, %v2003, 0
    %v2030 = vsel %vm220, %v2004, 0
    %v2033 = vsel %vm220, %v2005, 0
    %v2036 = vsel %vm220, %v2006, 0
    %v2039 = vsel %vm220, %v2007, 0
    %v2042 = vsel %vm220, %v2008, 0
    %v2045 = vsel %vm220, %v2009, 0
    %v2048 = vsel %vm220, %v2010, 0
    %2050 = vmatprep.subr.mxu0 0.0
    %2051 = vmatpush1.msra.mxu0 %v2012
    %2052 = vmatprep.subr.mxu0 0.0
    %2053 = vmatpush1.msra.mxu0 %v2013
    %2054 = vmatprep.subr.mxu0 0.0
    %2055 = vmatpush1.msra.mxu0 %v2014
    %2056 = vmatprep.subr.mxu0 0.0
    %2057 = vmatpush1.msra.mxu0 %v2015
    %2058 = vmatprep.subr.mxu0 0.0
    %2059 = vmatpush1.msra.mxu0 %v2016
    %2060 = vmatprep.subr.mxu0 0.0
    %2061 = vmatpush1.msra.mxu0 %v2017
    %2062 = vmatprep.subr.mxu0 0.0
    %2063 = vmatpush1.msra.mxu0 %v2018
    %2064 = vmatprep.subr.mxu0 0.0
    %2065 = vmatpush1.msra.mxu0 %v2019
    %2066 = vmatprep.subr.mxu0 0.0
    %2067 = vmatpush1.msra.mxu0 0.0
    %2068 = vmatprep.subr.mxu0 0.0
    %2069 = vmatpush1.msra.mxu0 0.0
    %2070 = vmatprep.subr.mxu0 0.0
    %2071 = vmatpush1.msra.mxu0 0.0
    %2072 = vmatprep.subr.mxu0 0.0
    %2073 = vmatpush1.msra.mxu0 0.0
    %2074 = vmatprep.subr.mxu0 0.0
    %2075 = vmatpush1.msra.mxu0 0.0
    %2076 = vmatprep.subr.mxu0 0.0
    %2077 = vmatpush1.msra.mxu0 0.0
    %2078 = vmatprep.subr.mxu0 0.0
    %2079 = vmatpush1.msra.mxu0 0.0
    %2080 = vmatprep.subr.mxu0 0.0
    %2081 = vmatpush1.msra.mxu0 0.0
    %2082 = vmatprep.subr.mxu0 0.0
    %2083 = vmatpush1.msra.mxu0 0.0
    %2084 = vmatprep.subr.mxu0 0.0
    %2085 = vmatpush1.msra.mxu0 0.0
    %2086 = vmatprep.subr.mxu0 0.0
    %2087 = vmatpush1.msra.mxu0 0.0
    %2088 = vmatprep.subr.mxu0 0.0
    %2089 = vmatpush1.msra.mxu0 0.0
    %2090 = vmatprep.subr.mxu0 0.0
    %2091 = vmatpush1.msra.mxu0 0.0
    %2092 = vmatprep.subr.mxu0 0.0
    %2093 = vmatpush1.msra.mxu0 0.0
    %2094 = vmatprep.subr.mxu0 0.0
    %2095 = vmatpush1.msra.mxu0 0.0
    %2096 = vmatprep.subr.mxu0 0.0
    %2097 = vmatpush1.msra.mxu0 0.0
    %2098 = vmatprep.subr.mxu0 0.0
    %2099 = vmatpush1.msra.mxu0 0.0
    %2100 = vmatprep.subr.mxu0 0.0
    %2101 = vmatpush1.msra.mxu0 0.0
    %2102 = vmatprep.subr.mxu0 0.0
    %2103 = vmatpush1.msra.mxu0 0.0
    %2104 = vmatprep.subr.mxu0 0.0
    %2105 = vmatpush1.msra.mxu0 0.0
    %2106 = vmatprep.subr.mxu0 0.0
    %2107 = vmatpush1.msra.mxu0 0.0
    %2108 = vmatprep.subr.mxu0 0.0
    %2109 = vmatpush1.msra.mxu0 0.0
    %2110 = vmatprep.subr.mxu0 0.0
    %2111 = vmatpush1.msra.mxu0 0.0
    %2112 = vmatprep.subr.mxu0 0.0
    %2113 = vmatpush1.msra.mxu0 0.0
    %2114 = vmatprep.mubr.f32.mxu0 0.0
    %2115 = vmatmul.mubr.f32.gmra.mrb[0].mxu0 %v2021
    %v2116 = vpop.f32.mrb[0].mxu0
    %v2117 = vadd.f32 0.0, %v2116
    %v2118 = vpop.f32.mrb[0].mxu0
    %2119 = vmatprep.mubr.f32.mxu0 0.0
    %2120 = vmatmul.mubr.f32.gmra.mrb[0].mxu0 %v2024
    %v2121 = vpop.f32.mrb[0].mxu0
    %v2122 = vadd.f32 0.0, %v2121
    %v2123 = vpop.f32.mrb[0].mxu0
    %2124 = vmatprep.mubr.f32.mxu0 0.0
    %2125 = vmatmul.mubr.f32.gmra.mrb[0].mxu0 %v2027
    %v2126 = vpop.f32.mrb[0].mxu0
    %v2127 = vadd.f32 0.0, %v2126
    %v2128 = vpop.f32.mrb[0].mxu0
    %2129 = vmatprep.mubr.f32.mxu0 0.0
    %2130 = vmatmul.mubr.f32.gmra.mrb[0].mxu0 %v2030
    %v2131 = vpop.f32.mrb[0].mxu0
    %v2132 = vadd.f32 0.0, %v2131
    %v2133 = vpop.f32.mrb[0].mxu0
    %2134 = vmatprep.mubr.f32.mxu0 0.0
    %2135 = vmatmul.mubr.f32.gmra.mrb[0].mxu0 %v2033
    %v2136 = vpop.f32.mrb[0].mxu0
    %v2137 = vadd.f32 0.0, %v2136
    %v2138 = vpop.f32.mrb[0].mxu0
    %2139 = vmatprep.mubr.f32.mxu0 0.0
    %2140 = vmatmul.mubr.f32.gmra.mrb[0].mxu0 %v2036
    %v2141 = vpop.f32.mrb[0].mxu0
    %v2142 = vadd.f32 0.0, %v2141
    %v2143 = vpop.f32.mrb[0].mxu0
    %2144 = vmatprep.mubr.f32.mxu0 0.0
    %2145 = vmatmul.mubr.f32.gmra.mrb[0].mxu0 %v2039
    %v2146 = vpop.f32.mrb[0].mxu0
    %v2147 = vadd.f32 0.0, %v2146
    %v2148 = vpop.f32.mrb[0].mxu0
    %2149 = vmatprep.mubr.f32.mxu0 0.0
    %2150 = vmatmul.mubr.f32.gmra.mrb[0].mxu0 %v2042
    %v2151 = vpop.f32.mrb[0].mxu0
    %v2152 = vadd.f32 0.0, %v2151
    %v2153 = vpop.f32.mrb[0].mxu0
    %2154 = vmatprep.mubr.f32.mxu0 0.0
    %2155 = vmatmul.mubr.f32.gmra.mrb[0].mxu0 %v2045
    %v2156 = vpop.f32.mrb[0].mxu0
    %v2157 = vadd.f32 0.0, %v2156
    %v2158 = vpop.f32.mrb[0].mxu0
    %2159 = vmatprep.mubr.f32.mxu0 0.0
    %2160 = vmatmul.mubr.f32.gmra.mrb[0].mxu0 %v2048
    %v2161 = vpop.f32.mrb[0].mxu0
    %v2162 = vadd.f32 0.0, %v2161
    %v2163 = vpop.f32.mrb[0].mxu0
    %2164 = vdwg.mxu0
    %v2165 = vadd.f32 %v1991, %v2117
    %v2166 = vadd.f32 %v1992, %v2122
    %v2167 = vadd.f32 %v1993, %v2127
    %v2168 = vadd.f32 %v1994, %v2132
    %v2169 = vadd.f32 %v1995, %v2137
    %v2170 = vadd.f32 %v1996, %v2142
    %v2171 = vadd.f32 %v1997, %v2147
    %v2172 = vadd.f32 %v1998, %v2152
    %v2173 = vadd.f32 %v1999, %v2157
    %v2174 = vadd.f32 %v2000, %v2162
    %v2175 = vld [vmem:[#allocation2 + $0x7] sm:$0xff]
    %v2176 = vld [vmem:[#allocation2 + $0xf] sm:$0xff]
    %v2177 = vld [vmem:[#allocation2 + $0x17] sm:$0xff]
    %v2178 = vld [vmem:[#allocation2 + $0x1f] sm:$0xff]
    %v2179 = vld [vmem:[#allocation2 + $0x27] sm:$0xff]
    %v2180 = vld [vmem:[#allocation2 + $0x2f] sm:$0xff]
    %v2181 = vld [vmem:[#allocation2 + $0x37] sm:$0xff]
    %v2182 = vld [vmem:[#allocation2 + $0x3f] sm:$0xff]
    %v2183 = vld [vmem:[#allocation2 + $0x47] sm:$0xff]
    %v2184 = vld [vmem:[#allocation2 + $0x4f] sm:$0x1]
    %s2185 = scalar_lea.vmem %s3, 512
    %v2186 = vld [vmem:[%s2185] sm:$0xff]
    %v2187 = vld [vmem:[%s2185 + $0x8] sm:$0xff]
    %v2188 = vld [vmem:[%s2185 + $0x10] sm:$0xff]
    %v2189 = vld [vmem:[%s2185 + $0x18] sm:$0xff]
    %v2190 = vld [vmem:[%s2185 + $0x20] sm:$0xff]
    %v2191 = vld [vmem:[%s2185 + $0x28] sm:$0xff]
    %v2192 = vld [vmem:[%s2185 + $0x30] sm:$0xff]
    %v2193 = vld [vmem:[%s2185 + $0x38] sm:$0xff]
    %v2195 = vsel %vm220, %v2175, 0
    %v2198 = vsel %vm220, %v2176, 0
    %v2201 = vsel %vm220, %v2177, 0
    %v2204 = vsel %vm220, %v2178, 0
    %v2207 = vsel %vm220, %v2179, 0
    %v2210 = vsel %vm220, %v2180, 0
    %v2213 = vsel %vm220, %v2181, 0
    %v2216 = vsel %vm220, %v2182, 0
    %v2219 = vsel %vm220, %v2183, 0
    %v2222 = vsel %vm220, %v2184, 0
    %2224 = vmatprep.subr.mxu0 0.0
    %2225 = vmatpush1.msra.mxu0 %v2186
    %2226 = vmatprep.subr.mxu0 0.0
    %2227 = vmatpush1.msra.mxu0 %v2187
    %2228 = vmatprep.subr.mxu0 0.0
    %2229 = vmatpush1.msra.mxu0 %v2188
    %2230 = vmatprep.subr.mxu0 0.0
    %2231 = vmatpush1.msra.mxu0 %v2189
    %2232 = vmatprep.subr.mxu0 0.0
    %2233 = vmatpush1.msra.mxu0 %v2190
    %2234 = vmatprep.subr.mxu0 0.0
    %2235 = vmatpush1.msra.mxu0 %v2191
    %2236 = vmatprep.subr.mxu0 0.0
    %2237 = vmatpush1.msra.mxu0 %v2192
    %2238 = vmatprep.subr.mxu0 0.0
    %2239 = vmatpush1.msra.mxu0 %v2193
    %2240 = vmatprep.subr.mxu0 0.0
    %2241 = vmatpush1.msra.mxu0 0.0
    %2242 = vmatprep.subr.mxu0 0.0
    %2243 = vmatpush1.msra.mxu0 0.0
    %2244 = vmatprep.subr.mxu0 0.0
    %2245 = vmatpush1.msra.mxu0 0.0
    %2246 = vmatprep.subr.mxu0 0.0
    %2247 = vmatpush1.msra.mxu0 0.0
    %2248 = vmatprep.subr.mxu0 0.0
    %2249 = vmatpush1.msra.mxu0 0.0
    %2250 = vmatprep.subr.mxu0 0.0
    %2251 = vmatpush1.msra.mxu0 0.0
    %2252 = vmatprep.subr.mxu0 0.0
    %2253 = vmatpush1.msra.mxu0 0.0
    %2254 = vmatprep.subr.mxu0 0.0
    %2255 = vmatpush1.msra.mxu0 0.0
    %2256 = vmatprep.subr.mxu0 0.0
    %2257 = vmatpush1.msra.mxu0 0.0
    %2258 = vmatprep.subr.mxu0 0.0
    %2259 = vmatpush1.msra.mxu0 0.0
    %2260 = vmatprep.subr.mxu0 0.0
    %2261 = vmatpush1.msra.mxu0 0.0
    %2262 = vmatprep.subr.mxu0 0.0
    %2263 = vmatpush1.msra.mxu0 0.0
    %2264 = vmatprep.subr.mxu0 0.0
    %2265 = vmatpush1.msra.mxu0 0.0
    %2266 = vmatprep.subr.mxu0 0.0
    %2267 = vmatpush1.msra.mxu0 0.0
    %2268 = vmatprep.subr.mxu0 0.0
    %2269 = vmatpush1.msra.mxu0 0.0
    %2270 = vmatprep.subr.mxu0 0.0
    %2271 = vmatpush1.msra.mxu0 0.0
    %2272 = vmatprep.subr.mxu0 0.0
    %2273 = vmatpush1.msra.mxu0 0.0
    %2274 = vmatprep.subr.mxu0 0.0
    %2275 = vmatpush1.msra.mxu0 0.0
    %2276 = vmatprep.subr.mxu0 0.0
    %2277 = vmatpush1.msra.mxu0 0.0
    %2278 = vmatprep.subr.mxu0 0.0
    %2279 = vmatpush1.msra.mxu0 0.0
    %2280 = vmatprep.subr.mxu0 0.0
    %2281 = vmatpush1.msra.mxu0 0.0
    %2282 = vmatprep.subr.mxu0 0.0
    %2283 = vmatpush1.msra.mxu0 0.0
    %2284 = vmatprep.subr.mxu0 0.0
    %2285 = vmatpush1.msra.mxu0 0.0
    %2286 = vmatprep.subr.mxu0 0.0
    %2287 = vmatpush1.msra.mxu0 0.0
    %2288 = vmatprep.mubr.f32.mxu0 0.0
    %2289 = vmatmul.mubr.f32.gmra.mrb[0].mxu0 %v2195
    %v2290 = vpop.f32.mrb[0].mxu0
    %v2291 = vadd.f32 0.0, %v2290
    %v2292 = vpop.f32.mrb[0].mxu0
    %2293 = vmatprep.mubr.f32.mxu0 0.0
    %2294 = vmatmul.mubr.f32.gmra.mrb[0].mxu0 %v2198
    %v2295 = vpop.f32.mrb[0].mxu0
    %v2296 = vadd.f32 0.0, %v2295
    %v2297 = vpop.f32.mrb[0].mxu0
    %2298 = vmatprep.mubr.f32.mxu0 0.0
    %2299 = vmatmul.mubr.f32.gmra.mrb[0].mxu0 %v2201
    %v2300 = vpop.f32.mrb[0].mxu0
    %v2301 = vadd.f32 0.0, %v2300
    %v2302 = vpop.f32.mrb[0].mxu0
    %2303 = vmatprep.mubr.f32.mxu0 0.0
    %2304 = vmatmul.mubr.f32.gmra.mrb[0].mxu0 %v2204
    %v2305 = vpop.f32.mrb[0].mxu0
    %v2306 = vadd.f32 0.0, %v2305
    %v2307 = vpop.f32.mrb[0].mxu0
    %2308 = vmatprep.mubr.f32.mxu0 0.0
    %2309 = vmatmul.mubr.f32.gmra.mrb[0].mxu0 %v2207
    %v2310 = vpop.f32.mrb[0].mxu0
    %v2311 = vadd.f32 0.0, %v2310
    %v2312 = vpop.f32.mrb[0].mxu0
    %2313 = vmatprep.mubr.f32.mxu0 0.0
    %2314 = vmatmul.mubr.f32.gmra.mrb[0].mxu0 %v2210
    %v2315 = vpop.f32.mrb[0].mxu0
    %v2316 = vadd.f32 0.0, %v2315
    %v2317 = vpop.f32.mrb[0].mxu0
    %2318 = vmatprep.mubr.f32.mxu0 0.0
    %2319 = vmatmul.mubr.f32.gmra.mrb[0].mxu0 %v2213
    %v2320 = vpop.f32.mrb[0].mxu0
    %v2321 = vadd.f32 0.0, %v2320
    %v2322 = vpop.f32.mrb[0].mxu0
    %2323 = vmatprep.mubr.f32.mxu0 0.0
    %2324 = vmatmul.mubr.f32.gmra.mrb[0].mxu0 %v2216
    %v2325 = vpop.f32.mrb[0].mxu0
    %v2326 = vadd.f32 0.0, %v2325
    %v2327 = vpop.f32.mrb[0].mxu0
    %2328 = vmatprep.mubr.f32.mxu0 0.0
    %2329 = vmatmul.mubr.f32.gmra.mrb[0].mxu0 %v2219
    %v2330 = vpop.f32.mrb[0].mxu0
    %v2331 = vadd.f32 0.0, %v2330
    %v2332 = vpop.f32.mrb[0].mxu0
    %2333 = vmatprep.mubr.f32.mxu0 0.0
    %2334 = vmatmul.mubr.f32.gmra.mrb[0].mxu0 %v2222
    %v2335 = vpop.f32.mrb[0].mxu0
    %v2336 = vadd.f32 0.0, %v2335
    %v2337 = vpop.f32.mrb[0].mxu0
    %2338 = vdwg.mxu0
    %v2339 = vadd.f32 %v2165, %v2291
    %v2340 = vadd.f32 %v2166, %v2296
    %v2341 = vadd.f32 %v2167, %v2301
    %v2342 = vadd.f32 %v2168, %v2306
    %v2343 = vadd.f32 %v2169, %v2311
    %v2344 = vadd.f32 %v2170, %v2316
    %v2345 = vadd.f32 %v2171, %v2321
    %v2346 = vadd.f32 %v2172, %v2326
    %v2347 = vadd.f32 %v2173, %v2331
    %v2348 = vadd.f32 %v2174, %v2336
    %v2349 = vld [vmem:[%s4] sm:$0x1]
    %v2351 = vlaneseq
    %v2352 = vshrl.u32 %v2351, 7
    %v2353 = vsub.s32 0, %v2352
    %v2354 = vrot.slane %v2349, %v2353
    %v2356 = vadd.f32 %v2339, %v2354
    %v2357 = vadd.f32 %v2340, %v2354
    %v2358 = vadd.f32 %v2341, %v2354
    %v2359 = vadd.f32 %v2342, %v2354
    %v2360 = vadd.f32 %v2343, %v2354
    %v2361 = vadd.f32 %v2344, %v2354
    %v2362 = vadd.f32 %v2345, %v2354
    %v2363 = vadd.f32 %v2346, %v2354
    %v2364 = vadd.f32 %v2347, %v2354
    %v2365 = vadd.f32 %v2348, %v2354
    %v2366 = vmax.f32 %v2356, 0.0
    %v2367 = vmax.f32 %v2357, 0.0
    %v2368 = vmax.f32 %v2358, 0.0
    %v2369 = vmax.f32 %v2359, 0.0
    %v2370 = vmax.f32 %v2360, 0.0
    %v2371 = vmax.f32 %v2361, 0.0
    %v2372 = vmax.f32 %v2362, 0.0
    %v2373 = vmax.f32 %v2363, 0.0
    %v2374 = vmax.f32 %v2364, 0.0
    %v2375 = vmax.f32 %v2365, 0.0
    %2376 = vst.msk [vmem:[#allocation3] sm:$0xff] %vm220, %v2366
    %2377 = vst.msk [vmem:[#allocation3 + $0x8] sm:$0xff] %vm220, %v2367
    %2378 = vst.msk [vmem:[#allocation3 + $0x10] sm:$0xff] %vm220, %v2368
    %2379 = vst.msk [vmem:[#allocation3 + $0x18] sm:$0xff] %vm220, %v2369
    %2380 = vst.msk [vmem:[#allocation3 + $0x20] sm:$0xff] %vm220, %v2370
    %2381 = vst.msk [vmem:[#allocation3 + $0x28] sm:$0xff] %vm220, %v2371
    %2382 = vst.msk [vmem:[#allocation3 + $0x30] sm:$0xff] %vm220, %v2372
    %2383 = vst.msk [vmem:[#allocation3 + $0x38] sm:$0xff] %vm220, %v2373
    %2384 = vst.msk [vmem:[#allocation3 + $0x40] sm:$0xff] %vm220, %v2374
    %vm2385 = vcmask 516096
    %2386 = vst.msk [vmem:[#allocation3 + $0x48] sm:$0x1] %vm2385, %v2375
    %vm2387 = vcmask 522240
    %2388 = vst.msk [vmem:[#allocation3 + $0x49] sm:$0x7f] %vm2387, 0.0
    %v2389 = vld [vmem:[#allocation3] sm:$0xff]
    %v2390 = vld [vmem:[#allocation3 + $0x8] sm:$0xff]
    %v2391 = vld [vmem:[#allocation3 + $0x10] sm:$0xff]
    %v2392 = vld [vmem:[#allocation3 + $0x18] sm:$0xff]
    %v2393 = vld [vmem:[#allocation3 + $0x20] sm:$0xff]
    %v2394 = vld [vmem:[#allocation3 + $0x28] sm:$0xff]
    %v2395 = vld [vmem:[#allocation3 + $0x30] sm:$0xff]
    %v2396 = vld [vmem:[#allocation3 + $0x38] sm:$0xff]
    %v2397 = vld [vmem:[#allocation3 + $0x40] sm:$0x3]
    %v2398 = vld [vmem:[%s5] sm:$0xff]
    %v2399 = vld [vmem:[%s5 + $0x8] sm:$0xff]
    %v2400 = vld [vmem:[%s5 + $0x10] sm:$0xff]
    %v2401 = vld [vmem:[%s5 + $0x18] sm:$0xff]
    %v2402 = vld [vmem:[%s5 + $0x20] sm:$0xff]
    %v2403 = vld [vmem:[%s5 + $0x28] sm:$0xff]
    %v2404 = vld [vmem:[%s5 + $0x30] sm:$0xff]
    %v2405 = vld [vmem:[%s5 + $0x38] sm:$0xff]
    %v2406 = vld [vmem:[#allocation3 + $0x1] sm:$0xff]
    %v2407 = vld [vmem:[#allocation3 + $0x9] sm:$0xff]
    %v2408 = vld [vmem:[#allocation3 + $0x11] sm:$0xff]
    %v2409 = vld [vmem:[#allocation3 + $0x19] sm:$0xff]
    %v2410 = vld [vmem:[#allocation3 + $0x21] sm:$0xff]
    %v2411 = vld [vmem:[#allocation3 + $0x29] sm:$0xff]
    %v2412 = vld [vmem:[#allocation3 + $0x31] sm:$0xff]
    %v2413 = vld [vmem:[#allocation3 + $0x39] sm:$0xff]
    %v2414 = vld [vmem:[#allocation3 + $0x41] sm:$0x3]
    %s2415 = scalar_lea.vmem %s5, 64
    %v2416 = vld [vmem:[%s2415] sm:$0xff]
    %v2417 = vld [vmem:[%s2415 + $0x8] sm:$0xff]
    %v2418 = vld [vmem:[%s2415 + $0x10] sm:$0xff]
    %v2419 = vld [vmem:[%s2415 + $0x18] sm:$0xff]
    %v2420 = vld [vmem:[%s2415 + $0x20] sm:$0xff]
    %v2421 = vld [vmem:[%s2415 + $0x28] sm:$0xff]
    %v2422 = vld [vmem:[%s2415 + $0x30] sm:$0xff]
    %v2423 = vld [vmem:[%s2415 + $0x38] sm:$0xff]
    %v2425 = vsel %vm220, %v2406, 0
    %v2428 = vsel %vm220, %v2407, 0
    %v2431 = vsel %vm220, %v2408, 0
    %v2434 = vsel %vm220, %v2409, 0
    %v2437 = vsel %vm220, %v2410, 0
    %v2440 = vsel %vm220, %v2411, 0
    %v2443 = vsel %vm220, %v2412, 0
    %v2446 = vsel %vm220, %v2413, 0
    %v2449 = vsel %vm220, %v2414, 0
    %2451 = vmatprep.subr.mxu0 0.0
    %2452 = vmatpush1.msra.mxu0 %v2416
    %2453 = vmatprep.subr.mxu0 0.0
    %2454 = vmatpush1.msra.mxu0 %v2417
    %2455 = vmatprep.subr.mxu0 0.0
    %2456 = vmatpush1.msra.mxu0 %v2418
    %2457 = vmatprep.subr.mxu0 0.0
    %2458 = vmatpush1.msra.mxu0 %v2419
    %2459 = vmatprep.subr.mxu0 0.0
    %2460 = vmatpush1.msra.mxu0 %v2420
    %2461 = vmatprep.subr.mxu0 0.0
    %2462 = vmatpush1.msra.mxu0 %v2421
    %2463 = vmatprep.subr.mxu0 0.0
    %2464 = vmatpush1.msra.mxu0 %v2422
    %2465 = vmatprep.subr.mxu0 0.0
    %2466 = vmatpush1.msra.mxu0 %v2423
    %2467 = vmatprep.subr.mxu0 0.0
    %2468 = vmatpush1.msra.mxu0 0.0
    %2469 = vmatprep.subr.mxu0 0.0
    %2470 = vmatpush1.msra.mxu0 0.0
    %2471 = vmatprep.subr.mxu0 0.0
    %2472 = vmatpush1.msra.mxu0 0.0
    %2473 = vmatprep.subr.mxu0 0.0
    %2474 = vmatpush1.msra.mxu0 0.0
    %2475 = vmatprep.subr.mxu0 0.0
    %2476 = vmatpush1.msra.mxu0 0.0
    %2477 = vmatprep.subr.mxu0 0.0
    %2478 = vmatpush1.msra.mxu0 0.0
    %2479 = vmatprep.subr.mxu0 0.0
    %2480 = vmatpush1.msra.mxu0 0.0
    %2481 = vmatprep.subr.mxu0 0.0
    %2482 = vmatpush1.msra.mxu0 0.0
    %2483 = vmatprep.subr.mxu0 0.0
    %2484 = vmatpush1.msra.mxu0 0.0
    %2485 = vmatprep.subr.mxu0 0.0
    %2486 = vmatpush1.msra.mxu0 0.0
    %2487 = vmatprep.subr.mxu0 0.0
    %2488 = vmatpush1.msra.mxu0 0.0
    %2489 = vmatprep.subr.mxu0 0.0
    %2490 = vmatpush1.msra.mxu0 0.0
    %2491 = vmatprep.subr.mxu0 0.0
    %2492 = vmatpush1.msra.mxu0 0.0
    %2493 = vmatprep.subr.mxu0 0.0
    %2494 = vmatpush1.msra.mxu0 0.0
    %2495 = vmatprep.subr.mxu0 0.0
    %2496 = vmatpush1.msra.mxu0 0.0
    %2497 = vmatprep.subr.mxu0 0.0
    %2498 = vmatpush1.msra.mxu0 0.0
    %2499 = vmatprep.subr.mxu0 0.0
    %2500 = vmatpush1.msra.mxu0 0.0
    %2501 = vmatprep.subr.mxu0 0.0
    %2502 = vmatpush1.msra.mxu0 0.0
    %2503 = vmatprep.subr.mxu0 0.0
    %2504 = vmatpush1.msra.mxu0 0.0
    %2505 = vmatprep.subr.mxu0 0.0
    %2506 = vmatpush1.msra.mxu0 0.0
    %2507 = vmatprep.subr.mxu0 0.0
    %2508 = vmatpush1.msra.mxu0 0.0
    %2509 = vmatprep.subr.mxu0 0.0
    %2510 = vmatpush1.msra.mxu0 0.0
    %2511 = vmatprep.subr.mxu0 0.0
    %2512 = vmatpush1.msra.mxu0 0.0
    %2513 = vmatprep.subr.mxu0 0.0
    %2514 = vmatpush1.msra.mxu0 0.0
    %2515 = vmatprep.mubr.f32.mxu0 0.0
    %2516 = vmatmul.mubr.f32.gmra.mrb[0].mxu0 %v2425
    %v2517 = vpop.f32.mrb[0].mxu0
    %v2518 = vadd.f32 0.0, %v2517
    %v2519 = vpop.f32.mrb[0].mxu0
    %2520 = vmatprep.mubr.f32.mxu0 0.0
    %2521 = vmatmul.mubr.f32.gmra.mrb[0].mxu0 %v2428
    %v2522 = vpop.f32.mrb[0].mxu0
    %v2523 = vadd.f32 0.0, %v2522
    %v2524 = vpop.f32.mrb[0].mxu0
    %2525 = vmatprep.mubr.f32.mxu0 0.0
    %2526 = vmatmul.mubr.f32.gmra.mrb[0].mxu0 %v2431
    %v2527 = vpop.f32.mrb[0].mxu0
    %v2528 = vadd.f32 0.0, %v2527
    %v2529 = vpop.f32.mrb[0].mxu0
    %2530 = vmatprep.mubr.f32.mxu0 0.0
    %2531 = vmatmul.mubr.f32.gmra.mrb[0].mxu0 %v2434
    %v2532 = vpop.f32.mrb[0].mxu0
    %v2533 = vadd.f32 0.0, %v2532
    %v2534 = vpop.f32.mrb[0].mxu0
    %2535 = vmatprep.mubr.f32.mxu0 0.0
    %2536 = vmatmul.mubr.f32.gmra.mrb[0].mxu0 %v2437
    %v2537 = vpop.f32.mrb[0].mxu0
    %v2538 = vadd.f32 0.0, %v2537
    %v2539 = vpop.f32.mrb[0].mxu0
    %2540 = vmatprep.mubr.f32.mxu0 0.0
    %2541 = vmatmul.mubr.f32.gmra.mrb[0].mxu0 %v2440
    %v2542 = vpop.f32.mrb[0].mxu0
    %v2543 = vadd.f32 0.0, %v2542
    %v2544 = vpop.f32.mrb[0].mxu0
    %2545 = vmatprep.mubr.f32.mxu0 0.0
    %2546 = vmatmul.mubr.f32.gmra.mrb[0].mxu0 %v2443
    %v2547 = vpop.f32.mrb[0].mxu0
    %v2548 = vadd.f32 0.0, %v2547
    %v2549 = vpop.f32.mrb[0].mxu0
    %2550 = vmatprep.mubr.f32.mxu0 0.0
    %2551 = vmatmul.mubr.f32.gmra.mrb[0].mxu0 %v2446
    %v2552 = vpop.f32.mrb[0].mxu0
    %v2553 = vadd.f32 0.0, %v2552
    %v2554 = vpop.f32.mrb[0].mxu0
    %2555 = vmatprep.mubr.f32.mxu0 0.0
    %2556 = vmatmul.mubr.f32.gmra.mrb[0].mxu0 %v2449
    %v2557 = vpop.f32.mrb[0].mxu0
    %v2558 = vadd.f32 0.0, %v2557
    %v2559 = vpop.f32.mrb[0].mxu0
    %2560 = vdwg.mxu0
    %v2562 = vsel %vm220, %v2389, 0
    %v2565 = vsel %vm220, %v2390, 0
    %v2568 = vsel %vm220, %v2391, 0
    %v2571 = vsel %vm220, %v2392, 0
    %v2574 = vsel %vm220, %v2393, 0
    %v2577 = vsel %vm220, %v2394, 0
    %v2580 = vsel %vm220, %v2395, 0
    %v2583 = vsel %vm220, %v2396, 0
    %v2586 = vsel %vm220, %v2397, 0
    %2588 = vmatprep.subr.mxu0 0.0
    %2589 = vmatpush1.msra.mxu0 %v2398
    %2590 = vmatprep.subr.mxu0 0.0
    %2591 = vmatpush1.msra.mxu0 %v2399
    %2592 = vmatprep.subr.mxu0 0.0
    %2593 = vmatpush1.msra.mxu0 %v2400
    %2594 = vmatprep.subr.mxu0 0.0
    %2595 = vmatpush1.msra.mxu0 %v2401
    %2596 = vmatprep.subr.mxu0 0.0
    %2597 = vmatpush1.msra.mxu0 %v2402
    %2598 = vmatprep.subr.mxu0 0.0
    %2599 = vmatpush1.msra.mxu0 %v2403
    %2600 = vmatprep.subr.mxu0 0.0
    %2601 = vmatpush1.msra.mxu0 %v2404
    %2602 = vmatprep.subr.mxu0 0.0
    %2603 = vmatpush1.msra.mxu0 %v2405
    %2604 = vmatprep.subr.mxu0 0.0
    %2605 = vmatpush1.msra.mxu0 0.0
    %2606 = vmatprep.subr.mxu0 0.0
    %2607 = vmatpush1.msra.mxu0 0.0
    %2608 = vmatprep.subr.mxu0 0.0
    %2609 = vmatpush1.msra.mxu0 0.0
    %2610 = vmatprep.subr.mxu0 0.0
    %2611 = vmatpush1.msra.mxu0 0.0
    %2612 = vmatprep.subr.mxu0 0.0
    %2613 = vmatpush1.msra.mxu0 0.0
    %2614 = vmatprep.subr.mxu0 0.0
    %2615 = vmatpush1.msra.mxu0 0.0
    %2616 = vmatprep.subr.mxu0 0.0
    %2617 = vmatpush1.msra.mxu0 0.0
    %2618 = vmatprep.subr.mxu0 0.0
    %2619 = vmatpush1.msra.mxu0 0.0
    %2620 = vmatprep.subr.mxu0 0.0
    %2621 = vmatpush1.msra.mxu0 0.0
    %2622 = vmatprep.subr.mxu0 0.0
    %2623 = vmatpush1.msra.mxu0 0.0
    %2624 = vmatprep.subr.mxu0 0.0
    %2625 = vmatpush1.msra.mxu0 0.0
    %2626 = vmatprep.subr.mxu0 0.0
    %2627 = vmatpush1.msra.mxu0 0.0
    %2628 = vmatprep.subr.mxu0 0.0
    %2629 = vmatpush1.msra.mxu0 0.0
    %2630 = vmatprep.subr.mxu0 0.0
    %2631 = vmatpush1.msra.mxu0 0.0
    %2632 = vmatprep.subr.mxu0 0.0
    %2633 = vmatpush1.msra.mxu0 0.0
    %2634 = vmatprep.subr.mxu0 0.0
    %2635 = vmatpush1.msra.mxu0 0.0
    %2636 = vmatprep.subr.mxu0 0.0
    %2637 = vmatpush1.msra.mxu0 0.0
    %2638 = vmatprep.subr.mxu0 0.0
    %2639 = vmatpush1.msra.mxu0 0.0
    %2640 = vmatprep.subr.mxu0 0.0
    %2641 = vmatpush1.msra.mxu0 0.0
    %2642 = vmatprep.subr.mxu0 0.0
    %2643 = vmatpush1.msra.mxu0 0.0
    %2644 = vmatprep.subr.mxu0 0.0
    %2645 = vmatpush1.msra.mxu0 0.0
    %2646 = vmatprep.subr.mxu0 0.0
    %2647 = vmatpush1.msra.mxu0 0.0
    %2648 = vmatprep.subr.mxu0 0.0
    %2649 = vmatpush1.msra.mxu0 0.0
    %2650 = vmatprep.subr.mxu0 0.0
    %2651 = vmatpush1.msra.mxu0 0.0
    %2652 = vmatprep.mubr.f32.mxu0 0.0
    %2653 = vmatmul.mubr.f32.gmra.mrb[0].mxu0 %v2562
    %v2654 = vpop.f32.mrb[0].mxu0
    %v2655 = vadd.f32 %v2518, %v2654
    %v2656 = vpop.f32.mrb[0].mxu0
    %2657 = vmatprep.mubr.f32.mxu0 0.0
    %2658 = vmatmul.mubr.f32.gmra.mrb[0].mxu0 %v2565
    %v2659 = vpop.f32.mrb[0].mxu0
    %v2660 = vadd.f32 %v2523, %v2659
    %v2661 = vpop.f32.mrb[0].mxu0
    %2662 = vmatprep.mubr.f32.mxu0 0.0
    %2663 = vmatmul.mubr.f32.gmra.mrb[0].mxu0 %v2568
    %v2664 = vpop.f32.mrb[0].mxu0
    %v2665 = vadd.f32 %v2528, %v2664
    %v2666 = vpop.f32.mrb[0].mxu0
    %2667 = vmatprep.mubr.f32.mxu0 0.0
    %2668 = vmatmul.mubr.f32.gmra.mrb[0].mxu0 %v2571
    %v2669 = vpop.f32.mrb[0].mxu0
    %v2670 = vadd.f32 %v2533, %v2669
    %v2671 = vpop.f32.mrb[0].mxu0
    %2672 = vmatprep.mubr.f32.mxu0 0.0
    %2673 = vmatmul.mubr.f32.gmra.mrb[0].mxu0 %v2574
    %v2674 = vpop.f32.mrb[0].mxu0
    %v2675 = vadd.f32 %v2538, %v2674
    %v2676 = vpop.f32.mrb[0].mxu0
    %2677 = vmatprep.mubr.f32.mxu0 0.0
    %2678 = vmatmul.mubr.f32.gmra.mrb[0].mxu0 %v2577
    %v2679 = vpop.f32.mrb[0].mxu0
    %v2680 = vadd.f32 %v2543, %v2679
    %v2681 = vpop.f32.mrb[0].mxu0
    %2682 = vmatprep.mubr.f32.mxu0 0.0
    %2683 = vmatmul.mubr.f32.gmra.mrb[0].mxu0 %v2580
    %v2684 = vpop.f32.mrb[0].mxu0
    %v2685 = vadd.f32 %v2548, %v2684
    %v2686 = vpop.f32.mrb[0].mxu0
    %2687 = vmatprep.mubr.f32.mxu0 0.0
    %2688 = vmatmul.mubr.f32.gmra.mrb[0].mxu0 %v2583
    %v2689 = vpop.f32.mrb[0].mxu0
    %v2690 = vadd.f32 %v2553, %v2689
    %v2691 = vpop.f32.mrb[0].mxu0
    %2692 = vmatprep.mubr.f32.mxu0 0.0
    %2693 = vmatmul.mubr.f32.gmra.mrb[0].mxu0 %v2586
    %v2694 = vpop.f32.mrb[0].mxu0
    %v2695 = vadd.f32 %v2558, %v2694
    %v2696 = vpop.f32.mrb[0].mxu0
    %2697 = vdwg.mxu0
    %v2698 = vld [vmem:[#allocation3 + $0x2] sm:$0xff]
    %v2699 = vld [vmem:[#allocation3 + $0xa] sm:$0xff]
    %v2700 = vld [vmem:[#allocation3 + $0x12] sm:$0xff]
    %v2701 = vld [vmem:[#allocation3 + $0x1a] sm:$0xff]
    %v2702 = vld [vmem:[#allocation3 + $0x22] sm:$0xff]
    %v2703 = vld [vmem:[#allocation3 + $0x2a] sm:$0xff]
    %v2704 = vld [vmem:[#allocation3 + $0x32] sm:$0xff]
    %v2705 = vld [vmem:[#allocation3 + $0x3a] sm:$0xff]
    %v2706 = vld [vmem:[#allocation3 + $0x42] sm:$0x3]
    %s2707 = scalar_lea.vmem %s5, 128
    %v2708 = vld [vmem:[%s2707] sm:$0xff]
    %v2709 = vld [vmem:[%s2707 + $0x8] sm:$0xff]
    %v2710 = vld [vmem:[%s2707 + $0x10] sm:$0xff]
    %v2711 = vld [vmem:[%s2707 + $0x18] sm:$0xff]
    %v2712 = vld [vmem:[%s2707 + $0x20] sm:$0xff]
    %v2713 = vld [vmem:[%s2707 + $0x28] sm:$0xff]
    %v2714 = vld [vmem:[%s2707 + $0x30] sm:$0xff]
    %v2715 = vld [vmem:[%s2707 + $0x38] sm:$0xff]
    %v2717 = vsel %vm220, %v2698, 0
    %v2720 = vsel %vm220, %v2699, 0
    %v2723 = vsel %vm220, %v2700, 0
    %v2726 = vsel %vm220, %v2701, 0
    %v2729 = vsel %vm220, %v2702, 0
    %v2732 = vsel %vm220, %v2703, 0
    %v2735 = vsel %vm220, %v2704, 0
    %v2738 = vsel %vm220, %v2705, 0
    %v2741 = vsel %vm220, %v2706, 0
    %2743 = vmatprep.subr.mxu0 0.0
    %2744 = vmatpush1.msra.mxu0 %v2708
    %2745 = vmatprep.subr.mxu0 0.0
    %2746 = vmatpush1.msra.mxu0 %v2709
    %2747 = vmatprep.subr.mxu0 0.0
    %2748 = vmatpush1.msra.mxu0 %v2710
    %2749 = vmatprep.subr.mxu0 0.0
    %2750 = vmatpush1.msra.mxu0 %v2711
    %2751 = vmatprep.subr.mxu0 0.0
    %2752 = vmatpush1.msra.mxu0 %v2712
    %2753 = vmatprep.subr.mxu0 0.0
    %2754 = vmatpush1.msra.mxu0 %v2713
    %2755 = vmatprep.subr.mxu0 0.0
    %2756 = vmatpush1.msra.mxu0 %v2714
    %2757 = vmatprep.subr.mxu0 0.0
    %2758 = vmatpush1.msra.mxu0 %v2715
    %2759 = vmatprep.subr.mxu0 0.0
    %2760 = vmatpush1.msra.mxu0 0.0
    %2761 = vmatprep.subr.mxu0 0.0
    %2762 = vmatpush1.msra.mxu0 0.0
    %2763 = vmatprep.subr.mxu0 0.0
    %2764 = vmatpush1.msra.mxu0 0.0
    %2765 = vmatprep.subr.mxu0 0.0
    %2766 = vmatpush1.msra.mxu0 0.0
    %2767 = vmatprep.subr.mxu0 0.0
    %2768 = vmatpush1.msra.mxu0 0.0
    %2769 = vmatprep.subr.mxu0 0.0
    %2770 = vmatpush1.msra.mxu0 0.0
    %2771 = vmatprep.subr.mxu0 0.0
    %2772 = vmatpush1.msra.mxu0 0.0
    %2773 = vmatprep.subr.mxu0 0.0
    %2774 = vmatpush1.msra.mxu0 0.0
    %2775 = vmatprep.subr.mxu0 0.0
    %2776 = vmatpush1.msra.mxu0 0.0
    %2777 = vmatprep.subr.mxu0 0.0
    %2778 = vmatpush1.msra.mxu0 0.0
    %2779 = vmatprep.subr.mxu0 0.0
    %2780 = vmatpush1.msra.mxu0 0.0
    %2781 = vmatprep.subr.mxu0 0.0
    %2782 = vmatpush1.msra.mxu0 0.0
    %2783 = vmatprep.subr.mxu0 0.0
    %2784 = vmatpush1.msra.mxu0 0.0
    %2785 = vmatprep.subr.mxu0 0.0
    %2786 = vmatpush1.msra.mxu0 0.0
    %2787 = vmatprep.subr.mxu0 0.0
    %2788 = vmatpush1.msra.mxu0 0.0
    %2789 = vmatprep.subr.mxu0 0.0
    %2790 = vmatpush1.msra.mxu0 0.0
    %2791 = vmatprep.subr.mxu0 0.0
    %2792 = vmatpush1.msra.mxu0 0.0
    %2793 = vmatprep.subr.mxu0 0.0
    %2794 = vmatpush1.msra.mxu0 0.0
    %2795 = vmatprep.subr.mxu0 0.0
    %2796 = vmatpush1.msra.mxu0 0.0
    %2797 = vmatprep.subr.mxu0 0.0
    %2798 = vmatpush1.msra.mxu0 0.0
    %2799 = vmatprep.subr.mxu0 0.0
    %2800 = vmatpush1.msra.mxu0 0.0
    %2801 = vmatprep.subr.mxu0 0.0
    %2802 = vmatpush1.msra.mxu0 0.0
    %2803 = vmatprep.subr.mxu0 0.0
    %2804 = vmatpush1.msra.mxu0 0.0
    %2805 = vmatprep.subr.mxu0 0.0
    %2806 = vmatpush1.msra.mxu0 0.0
    %2807 = vmatprep.mubr.f32.mxu0 0.0
    %2808 = vmatmul.mubr.f32.gmra.mrb[0].mxu0 %v2717
    %v2809 = vpop.f32.mrb[0].mxu0
    %v2810 = vadd.f32 0.0, %v2809
    %v2811 = vpop.f32.mrb[0].mxu0
    %2812 = vmatprep.mubr.f32.mxu0 0.0
    %2813 = vmatmul.mubr.f32.gmra.mrb[0].mxu0 %v2720
    %v2814 = vpop.f32.mrb[0].mxu0
    %v2815 = vadd.f32 0.0, %v2814
    %v2816 = vpop.f32.mrb[0].mxu0
    %2817 = vmatprep.mubr.f32.mxu0 0.0
    %2818 = vmatmul.mubr.f32.gmra.mrb[0].mxu0 %v2723
    %v2819 = vpop.f32.mrb[0].mxu0
    %v2820 = vadd.f32 0.0, %v2819
    %v2821 = vpop.f32.mrb[0].mxu0
    %2822 = vmatprep.mubr.f32.mxu0 0.0
    %2823 = vmatmul.mubr.f32.gmra.mrb[0].mxu0 %v2726
    %v2824 = vpop.f32.mrb[0].mxu0
    %v2825 = vadd.f32 0.0, %v2824
    %v2826 = vpop.f32.mrb[0].mxu0
    %2827 = vmatprep.mubr.f32.mxu0 0.0
    %2828 = vmatmul.mubr.f32.gmra.mrb[0].mxu0 %v2729
    %v2829 = vpop.f32.mrb[0].mxu0
    %v2830 = vadd.f32 0.0, %v2829
    %v2831 = vpop.f32.mrb[0].mxu0
    %2832 = vmatprep.mubr.f32.mxu0 0.0
    %2833 = vmatmul.mubr.f32.gmra.mrb[0].mxu0 %v2732
    %v2834 = vpop.f32.mrb[0].mxu0
    %v2835 = vadd.f32 0.0, %v2834
    %v2836 = vpop.f32.mrb[0].mxu0
    %2837 = vmatprep.mubr.f32.mxu0 0.0
    %2838 = vmatmul.mubr.f32.gmra.mrb[0].mxu0 %v2735
    %v2839 = vpop.f32.mrb[0].mxu0
    %v2840 = vadd.f32 0.0, %v2839
    %v2841 = vpop.f32.mrb[0].mxu0
    %2842 = vmatprep.mubr.f32.mxu0 0.0
    %2843 = vmatmul.mubr.f32.gmra.mrb[0].mxu0 %v2738
    %v2844 = vpop.f32.mrb[0].mxu0
    %v2845 = vadd.f32 0.0, %v2844
    %v2846 = vpop.f32.mrb[0].mxu0
    %2847 = vmatprep.mubr.f32.mxu0 0.0
    %2848 = vmatmul.mubr.f32.gmra.mrb[0].mxu0 %v2741
    %v2849 = vpop.f32.mrb[0].mxu0
    %v2850 = vadd.f32 0.0, %v2849
    %v2851 = vpop.f32.mrb[0].mxu0
    %2852 = vdwg.mxu0
    %v2853 = vadd.f32 %v2655, %v2810
    %v2854 = vadd.f32 %v2660, %v2815
    %v2855 = vadd.f32 %v2665, %v2820
    %v2856 = vadd.f32 %v2670, %v2825
    %v2857 = vadd.f32 %v2675, %v2830
    %v2858 = vadd.f32 %v2680, %v2835
    %v2859 = vadd.f32 %v2685, %v2840
    %v2860 = vadd.f32 %v2690, %v2845
    %v2861 = vadd.f32 %v2695, %v2850
    %v2862 = vld [vmem:[#allocation3 + $0x6] sm:$0xff]
    %v2863 = vld [vmem:[#allocation3 + $0xe] sm:$0xff]
    %v2864 = vld [vmem:[#allocation3 + $0x16] sm:$0xff]
    %v2865 = vld [vmem:[#allocation3 + $0x1e] sm:$0xff]
    %v2866 = vld [vmem:[#allocation3 + $0x26] sm:$0xff]
    %v2867 = vld [vmem:[#allocation3 + $0x2e] sm:$0xff]
    %v2868 = vld [vmem:[#allocation3 + $0x36] sm:$0xff]
    %v2869 = vld [vmem:[#allocation3 + $0x3e] sm:$0xff]
    %v2870 = vld [vmem:[#allocation3 + $0x46] sm:$0x3]
    %s2871 = scalar_lea.vmem %s5, 192
    %v2872 = vld [vmem:[%s2871] sm:$0xff]
    %v2873 = vld [vmem:[%s2871 + $0x8] sm:$0xff]
    %v2874 = vld [vmem:[%s2871 + $0x10] sm:$0xff]
    %v2875 = vld [vmem:[%s2871 + $0x18] sm:$0xff]
    %v2876 = vld [vmem:[%s2871 + $0x20] sm:$0xff]
    %v2877 = vld [vmem:[%s2871 + $0x28] sm:$0xff]
    %v2878 = vld [vmem:[%s2871 + $0x30] sm:$0xff]
    %v2879 = vld [vmem:[%s2871 + $0x38] sm:$0xff]
    %v2881 = vsel %vm220, %v2862, 0
    %v2884 = vsel %vm220, %v2863, 0
    %v2887 = vsel %vm220, %v2864, 0
    %v2890 = vsel %vm220, %v2865, 0
    %v2893 = vsel %vm220, %v2866, 0
    %v2896 = vsel %vm220, %v2867, 0
    %v2899 = vsel %vm220, %v2868, 0
    %v2902 = vsel %vm220, %v2869, 0
    %v2905 = vsel %vm220, %v2870, 0
    %2907 = vmatprep.subr.mxu0 0.0
    %2908 = vmatpush1.msra.mxu0 %v2872
    %2909 = vmatprep.subr.mxu0 0.0
    %2910 = vmatpush1.msra.mxu0 %v2873
    %2911 = vmatprep.subr.mxu0 0.0
    %2912 = vmatpush1.msra.mxu0 %v2874
    %2913 = vmatprep.subr.mxu0 0.0
    %2914 = vmatpush1.msra.mxu0 %v2875
    %2915 = vmatprep.subr.mxu0 0.0
    %2916 = vmatpush1.msra.mxu0 %v2876
    %2917 = vmatprep.subr.mxu0 0.0
    %2918 = vmatpush1.msra.mxu0 %v2877
    %2919 = vmatprep.subr.mxu0 0.0
    %2920 = vmatpush1.msra.mxu0 %v2878
    %2921 = vmatprep.subr.mxu0 0.0
    %2922 = vmatpush1.msra.mxu0 %v2879
    %2923 = vmatprep.subr.mxu0 0.0
    %2924 = vmatpush1.msra.mxu0 0.0
    %2925 = vmatprep.subr.mxu0 0.0
    %2926 = vmatpush1.msra.mxu0 0.0
    %2927 = vmatprep.subr.mxu0 0.0
    %2928 = vmatpush1.msra.mxu0 0.0
    %2929 = vmatprep.subr.mxu0 0.0
    %2930 = vmatpush1.msra.mxu0 0.0
    %2931 = vmatprep.subr.mxu0 0.0
    %2932 = vmatpush1.msra.mxu0 0.0
    %2933 = vmatprep.subr.mxu0 0.0
    %2934 = vmatpush1.msra.mxu0 0.0
    %2935 = vmatprep.subr.mxu0 0.0
    %2936 = vmatpush1.msra.mxu0 0.0
    %2937 = vmatprep.subr.mxu0 0.0
    %2938 = vmatpush1.msra.mxu0 0.0
    %2939 = vmatprep.subr.mxu0 0.0
    %2940 = vmatpush1.msra.mxu0 0.0
    %2941 = vmatprep.subr.mxu0 0.0
    %2942 = vmatpush1.msra.mxu0 0.0
    %2943 = vmatprep.subr.mxu0 0.0
    %2944 = vmatpush1.msra.mxu0 0.0
    %2945 = vmatprep.subr.mxu0 0.0
    %2946 = vmatpush1.msra.mxu0 0.0
    %2947 = vmatprep.subr.mxu0 0.0
    %2948 = vmatpush1.msra.mxu0 0.0
    %2949 = vmatprep.subr.mxu0 0.0
    %2950 = vmatpush1.msra.mxu0 0.0
    %2951 = vmatprep.subr.mxu0 0.0
    %2952 = vmatpush1.msra.mxu0 0.0
    %2953 = vmatprep.subr.mxu0 0.0
    %2954 = vmatpush1.msra.mxu0 0.0
    %2955 = vmatprep.subr.mxu0 0.0
    %2956 = vmatpush1.msra.mxu0 0.0
    %2957 = vmatprep.subr.mxu0 0.0
    %2958 = vmatpush1.msra.mxu0 0.0
    %2959 = vmatprep.subr.mxu0 0.0
    %2960 = vmatpush1.msra.mxu0 0.0
    %2961 = vmatprep.subr.mxu0 0.0
    %2962 = vmatpush1.msra.mxu0 0.0
    %2963 = vmatprep.subr.mxu0 0.0
    %2964 = vmatpush1.msra.mxu0 0.0
    %2965 = vmatprep.subr.mxu0 0.0
    %2966 = vmatpush1.msra.mxu0 0.0
    %2967 = vmatprep.subr.mxu0 0.0
    %2968 = vmatpush1.msra.mxu0 0.0
    %2969 = vmatprep.subr.mxu0 0.0
    %2970 = vmatpush1.msra.mxu0 0.0
    %2971 = vmatprep.mubr.f32.mxu0 0.0
    %2972 = vmatmul.mubr.f32.gmra.mrb[0].mxu0 %v2881
    %v2973 = vpop.f32.mrb[0].mxu0
    %v2974 = vadd.f32 0.0, %v2973
    %v2975 = vpop.f32.mrb[0].mxu0
    %2976 = vmatprep.mubr.f32.mxu0 0.0
    %2977 = vmatmul.mubr.f32.gmra.mrb[0].mxu0 %v2884
    %v2978 = vpop.f32.mrb[0].mxu0
    %v2979 = vadd.f32 0.0, %v2978
    %v2980 = vpop.f32.mrb[0].mxu0
    %2981 = vmatprep.mubr.f32.mxu0 0.0
    %2982 = vmatmul.mubr.f32.gmra.mrb[0].mxu0 %v2887
    %v2983 = vpop.f32.mrb[0].mxu0
    %v2984 = vadd.f32 0.0, %v2983
    %v2985 = vpop.f32.mrb[0].mxu0
    %2986 = vmatprep.mubr.f32.mxu0 0.0
    %2987 = vmatmul.mubr.f32.gmra.mrb[0].mxu0 %v2890
    %v2988 = vpop.f32.mrb[0].mxu0
    %v2989 = vadd.f32 0.0, %v2988
    %v2990 = vpop.f32.mrb[0].mxu0
    %2991 = vmatprep.mubr.f32.mxu0 0.0
    %2992 = vmatmul.mubr.f32.gmra.mrb[0].mxu0 %v2893
    %v2993 = vpop.f32.mrb[0].mxu0
    %v2994 = vadd.f32 0.0, %v2993
    %v2995 = vpop.f32.mrb[0].mxu0
    %2996 = vmatprep.mubr.f32.mxu0 0.0
    %2997 = vmatmul.mubr.f32.gmra.mrb[0].mxu0 %v2896
    %v2998 = vpop.f32.mrb[0].mxu0
    %v2999 = vadd.f32 0.0, %v2998
    %v3000 = vpop.f32.mrb[0].mxu0
    %3001 = vmatprep.mubr.f32.mxu0 0.0
    %3002 = vmatmul.mubr.f32.gmra.mrb[0].mxu0 %v2899
    %v3003 = vpop.f32.mrb[0].mxu0
    %v3004 = vadd.f32 0.0, %v3003
    %v3005 = vpop.f32.mrb[0].mxu0
    %3006 = vmatprep.mubr.f32.mxu0 0.0
    %3007 = vmatmul.mubr.f32.gmra.mrb[0].mxu0 %v2902
    %v3008 = vpop.f32.mrb[0].mxu0
    %v3009 = vadd.f32 0.0, %v3008
    %v3010 = vpop.f32.mrb[0].mxu0
    %3011 = vmatprep.mubr.f32.mxu0 0.0
    %3012 = vmatmul.mubr.f32.gmra.mrb[0].mxu0 %v2905
    %v3013 = vpop.f32.mrb[0].mxu0
    %v3014 = vadd.f32 0.0, %v3013
    %v3015 = vpop.f32.mrb[0].mxu0
    %3016 = vdwg.mxu0
    %v3017 = vadd.f32 %v2853, %v2974
    %v3018 = vadd.f32 %v2854, %v2979
    %v3019 = vadd.f32 %v2855, %v2984
    %v3020 = vadd.f32 %v2856, %v2989
    %v3021 = vadd.f32 %v2857, %v2994
    %v3022 = vadd.f32 %v2858, %v2999
    %v3023 = vadd.f32 %v2859, %v3004
    %v3024 = vadd.f32 %v2860, %v3009
    %v3025 = vadd.f32 %v2861, %v3014
    %v3026 = vld [vmem:[#allocation3 + $0x7] sm:$0xff]
    %v3027 = vld [vmem:[#allocation3 + $0xf] sm:$0xff]
    %v3028 = vld [vmem:[#allocation3 + $0x17] sm:$0xff]
    %v3029 = vld [vmem:[#allocation3 + $0x1f] sm:$0xff]
    %v3030 = vld [vmem:[#allocation3 + $0x27] sm:$0xff]
    %v3031 = vld [vmem:[#allocation3 + $0x2f] sm:$0xff]
    %v3032 = vld [vmem:[#allocation3 + $0x37] sm:$0xff]
    %v3033 = vld [vmem:[#allocation3 + $0x3f] sm:$0xff]
    %v3034 = vld [vmem:[#allocation3 + $0x47] sm:$0x3]
    %s3035 = scalar_lea.vmem %s5, 256
    %v3036 = vld [vmem:[%s3035] sm:$0xff]
    %v3037 = vld [vmem:[%s3035 + $0x8] sm:$0xff]
    %v3038 = vld [vmem:[%s3035 + $0x10] sm:$0xff]
    %v3039 = vld [vmem:[%s3035 + $0x18] sm:$0xff]
    %v3040 = vld [vmem:[%s3035 + $0x20] sm:$0xff]
    %v3041 = vld [vmem:[%s3035 + $0x28] sm:$0xff]
    %v3042 = vld [vmem:[%s3035 + $0x30] sm:$0xff]
    %v3043 = vld [vmem:[%s3035 + $0x38] sm:$0xff]
    %v3045 = vsel %vm220, %v3026, 0
    %v3048 = vsel %vm220, %v3027, 0
    %v3051 = vsel %vm220, %v3028, 0
    %v3054 = vsel %vm220, %v3029, 0
    %v3057 = vsel %vm220, %v3030, 0
    %v3060 = vsel %vm220, %v3031, 0
    %v3063 = vsel %vm220, %v3032, 0
    %v3066 = vsel %vm220, %v3033, 0
    %v3069 = vsel %vm220, %v3034, 0
    %3071 = vmatprep.subr.mxu0 0.0
    %3072 = vmatpush1.msra.mxu0 %v3036
    %3073 = vmatprep.subr.mxu0 0.0
    %3074 = vmatpush1.msra.mxu0 %v3037
    %3075 = vmatprep.subr.mxu0 0.0
    %3076 = vmatpush1.msra.mxu0 %v3038
    %3077 = vmatprep.subr.mxu0 0.0
    %3078 = vmatpush1.msra.mxu0 %v3039
    %3079 = vmatprep.subr.mxu0 0.0
    %3080 = vmatpush1.msra.mxu0 %v3040
    %3081 = vmatprep.subr.mxu0 0.0
    %3082 = vmatpush1.msra.mxu0 %v3041
    %3083 = vmatprep.subr.mxu0 0.0
    %3084 = vmatpush1.msra.mxu0 %v3042
    %3085 = vmatprep.subr.mxu0 0.0
    %3086 = vmatpush1.msra.mxu0 %v3043
    %3087 = vmatprep.subr.mxu0 0.0
    %3088 = vmatpush1.msra.mxu0 0.0
    %3089 = vmatprep.subr.mxu0 0.0
    %3090 = vmatpush1.msra.mxu0 0.0
    %3091 = vmatprep.subr.mxu0 0.0
    %3092 = vmatpush1.msra.mxu0 0.0
    %3093 = vmatprep.subr.mxu0 0.0
    %3094 = vmatpush1.msra.mxu0 0.0
    %3095 = vmatprep.subr.mxu0 0.0
    %3096 = vmatpush1.msra.mxu0 0.0
    %3097 = vmatprep.subr.mxu0 0.0
    %3098 = vmatpush1.msra.mxu0 0.0
    %3099 = vmatprep.subr.mxu0 0.0
    %3100 = vmatpush1.msra.mxu0 0.0
    %3101 = vmatprep.subr.mxu0 0.0
    %3102 = vmatpush1.msra.mxu0 0.0
    %3103 = vmatprep.subr.mxu0 0.0
    %3104 = vmatpush1.msra.mxu0 0.0
    %3105 = vmatprep.subr.mxu0 0.0
    %3106 = vmatpush1.msra.mxu0 0.0
    %3107 = vmatprep.subr.mxu0 0.0
    %3108 = vmatpush1.msra.mxu0 0.0
    %3109 = vmatprep.subr.mxu0 0.0
    %3110 = vmatpush1.msra.mxu0 0.0
    %3111 = vmatprep.subr.mxu0 0.0
    %3112 = vmatpush1.msra.mxu0 0.0
    %3113 = vmatprep.subr.mxu0 0.0
    %3114 = vmatpush1.msra.mxu0 0.0
    %3115 = vmatprep.subr.mxu0 0.0
    %3116 = vmatpush1.msra.mxu0 0.0
    %3117 = vmatprep.subr.mxu0 0.0
    %3118 = vmatpush1.msra.mxu0 0.0
    %3119 = vmatprep.subr.mxu0 0.0
    %3120 = vmatpush1.msra.mxu0 0.0
    %3121 = vmatprep.subr.mxu0 0.0
    %3122 = vmatpush1.msra.mxu0 0.0
    %3123 = vmatprep.subr.mxu0 0.0
    %3124 = vmatpush1.msra.mxu0 0.0
    %3125 = vmatprep.subr.mxu0 0.0
    %3126 = vmatpush1.msra.mxu0 0.0
    %3127 = vmatprep.subr.mxu0 0.0
    %3128 = vmatpush1.msra.mxu0 0.0
    %3129 = vmatprep.subr.mxu0 0.0
    %3130 = vmatpush1.msra.mxu0 0.0
    %3131 = vmatprep.subr.mxu0 0.0
    %3132 = vmatpush1.msra.mxu0 0.0
    %3133 = vmatprep.subr.mxu0 0.0
    %3134 = vmatpush1.msra.mxu0 0.0
    %3135 = vmatprep.mubr.f32.mxu0 0.0
    %3136 = vmatmul.mubr.f32.gmra.mrb[0].mxu0 %v3045
    %v3137 = vpop.f32.mrb[0].mxu0
    %v3138 = vadd.f32 0.0, %v3137
    %v3139 = vpop.f32.mrb[0].mxu0
    %3140 = vmatprep.mubr.f32.mxu0 0.0
    %3141 = vmatmul.mubr.f32.gmra.mrb[0].mxu0 %v3048
    %v3142 = vpop.f32.mrb[0].mxu0
    %v3143 = vadd.f32 0.0, %v3142
    %v3144 = vpop.f32.mrb[0].mxu0
    %3145 = vmatprep.mubr.f32.mxu0 0.0
    %3146 = vmatmul.mubr.f32.gmra.mrb[0].mxu0 %v3051
    %v3147 = vpop.f32.mrb[0].mxu0
    %v3148 = vadd.f32 0.0, %v3147
    %v3149 = vpop.f32.mrb[0].mxu0
    %3150 = vmatprep.mubr.f32.mxu0 0.0
    %3151 = vmatmul.mubr.f32.gmra.mrb[0].mxu0 %v3054
    %v3152 = vpop.f32.mrb[0].mxu0
    %v3153 = vadd.f32 0.0, %v3152
    %v3154 = vpop.f32.mrb[0].mxu0
    %3155 = vmatprep.mubr.f32.mxu0 0.0
    %3156 = vmatmul.mubr.f32.gmra.mrb[0].mxu0 %v3057
    %v3157 = vpop.f32.mrb[0].mxu0
    %v3158 = vadd.f32 0.0, %v3157
    %v3159 = vpop.f32.mrb[0].mxu0
    %3160 = vmatprep.mubr.f32.mxu0 0.0
    %3161 = vmatmul.mubr.f32.gmra.mrb[0].mxu0 %v3060
    %v3162 = vpop.f32.mrb[0].mxu0
    %v3163 = vadd.f32 0.0, %v3162
    %v3164 = vpop.f32.mrb[0].mxu0
    %3165 = vmatprep.mubr.f32.mxu0 0.0
    %3166 = vmatmul.mubr.f32.gmra.mrb[0].mxu0 %v3063
    %v3167 = vpop.f32.mrb[0].mxu0
    %v3168 = vadd.f32 0.0, %v3167
    %v3169 = vpop.f32.mrb[0].mxu0
    %3170 = vmatprep.mubr.f32.mxu0 0.0
    %3171 = vmatmul.mubr.f32.gmra.mrb[0].mxu0 %v3066
    %v3172 = vpop.f32.mrb[0].mxu0
    %v3173 = vadd.f32 0.0, %v3172
    %v3174 = vpop.f32.mrb[0].mxu0
    %3175 = vmatprep.mubr.f32.mxu0 0.0
    %3176 = vmatmul.mubr.f32.gmra.mrb[0].mxu0 %v3069
    %v3177 = vpop.f32.mrb[0].mxu0
    %v3178 = vadd.f32 0.0, %v3177
    %v3179 = vpop.f32.mrb[0].mxu0
    %3180 = vdwg.mxu0
    %v3181 = vadd.f32 %v3017, %v3138
    %v3182 = vadd.f32 %v3018, %v3143
    %v3183 = vadd.f32 %v3019, %v3148
    %v3184 = vadd.f32 %v3020, %v3153
    %v3185 = vadd.f32 %v3021, %v3158
    %v3186 = vadd.f32 %v3022, %v3163
    %v3187 = vadd.f32 %v3023, %v3168
    %v3188 = vadd.f32 %v3024, %v3173
    %v3189 = vadd.f32 %v3025, %v3178
    %v3190 = vld [vmem:[#allocation3 + $0x8] sm:$0xff]
    %v3191 = vld [vmem:[#allocation3 + $0x10] sm:$0xff]
    %v3192 = vld [vmem:[#allocation3 + $0x18] sm:$0xff]
    %v3193 = vld [vmem:[#allocation3 + $0x20] sm:$0xff]
    %v3194 = vld [vmem:[#allocation3 + $0x28] sm:$0xff]
    %v3195 = vld [vmem:[#allocation3 + $0x30] sm:$0xff]
    %v3196 = vld [vmem:[#allocation3 + $0x38] sm:$0xff]
    %v3197 = vld [vmem:[#allocation3 + $0x40] sm:$0xff]
    %v3198 = vld [vmem:[#allocation3 + $0x48] sm:$0x3]
    %s3199 = scalar_lea.vmem %s5, 320
    %v3200 = vld [vmem:[%s3199] sm:$0xff]
    %v3201 = vld [vmem:[%s3199 + $0x8] sm:$0xff]
    %v3202 = vld [vmem:[%s3199 + $0x10] sm:$0xff]
    %v3203 = vld [vmem:[%s3199 + $0x18] sm:$0xff]
    %v3204 = vld [vmem:[%s3199 + $0x20] sm:$0xff]
    %v3205 = vld [vmem:[%s3199 + $0x28] sm:$0xff]
    %v3206 = vld [vmem:[%s3199 + $0x30] sm:$0xff]
    %v3207 = vld [vmem:[%s3199 + $0x38] sm:$0xff]
    %v3209 = vsel %vm220, %v3190, 0
    %v3212 = vsel %vm220, %v3191, 0
    %v3215 = vsel %vm220, %v3192, 0
    %v3218 = vsel %vm220, %v3193, 0
    %v3221 = vsel %vm220, %v3194, 0
    %v3224 = vsel %vm220, %v3195, 0
    %v3227 = vsel %vm220, %v3196, 0
    %v3230 = vsel %vm220, %v3197, 0
    %v3233 = vsel %vm220, %v3198, 0
    %3235 = vmatprep.subr.mxu0 0.0
    %3236 = vmatpush1.msra.mxu0 %v3200
    %3237 = vmatprep.subr.mxu0 0.0
    %3238 = vmatpush1.msra.mxu0 %v3201
    %3239 = vmatprep.subr.mxu0 0.0
    %3240 = vmatpush1.msra.mxu0 %v3202
    %3241 = vmatprep.subr.mxu0 0.0
    %3242 = vmatpush1.msra.mxu0 %v3203
    %3243 = vmatprep.subr.mxu0 0.0
    %3244 = vmatpush1.msra.mxu0 %v3204
    %3245 = vmatprep.subr.mxu0 0.0
    %3246 = vmatpush1.msra.mxu0 %v3205
    %3247 = vmatprep.subr.mxu0 0.0
    %3248 = vmatpush1.msra.mxu0 %v3206
    %3249 = vmatprep.subr.mxu0 0.0
    %3250 = vmatpush1.msra.mxu0 %v3207
    %3251 = vmatprep.subr.mxu0 0.0
    %3252 = vmatpush1.msra.mxu0 0.0
    %3253 = vmatprep.subr.mxu0 0.0
    %3254 = vmatpush1.msra.mxu0 0.0
    %3255 = vmatprep.subr.mxu0 0.0
    %3256 = vmatpush1.msra.mxu0 0.0
    %3257 = vmatprep.subr.mxu0 0.0
    %3258 = vmatpush1.msra.mxu0 0.0
    %3259 = vmatprep.subr.mxu0 0.0
    %3260 = vmatpush1.msra.mxu0 0.0
    %3261 = vmatprep.subr.mxu0 0.0
    %3262 = vmatpush1.msra.mxu0 0.0
    %3263 = vmatprep.subr.mxu0 0.0
    %3264 = vmatpush1.msra.mxu0 0.0
    %3265 = vmatprep.subr.mxu0 0.0
    %3266 = vmatpush1.msra.mxu0 0.0
    %3267 = vmatprep.subr.mxu0 0.0
    %3268 = vmatpush1.msra.mxu0 0.0
    %3269 = vmatprep.subr.mxu0 0.0
    %3270 = vmatpush1.msra.mxu0 0.0
    %3271 = vmatprep.subr.mxu0 0.0
    %3272 = vmatpush1.msra.mxu0 0.0
    %3273 = vmatprep.subr.mxu0 0.0
    %3274 = vmatpush1.msra.mxu0 0.0
    %3275 = vmatprep.subr.mxu0 0.0
    %3276 = vmatpush1.msra.mxu0 0.0
    %3277 = vmatprep.subr.mxu0 0.0
    %3278 = vmatpush1.msra.mxu0 0.0
    %3279 = vmatprep.subr.mxu0 0.0
    %3280 = vmatpush1.msra.mxu0 0.0
    %3281 = vmatprep.subr.mxu0 0.0
    %3282 = vmatpush1.msra.mxu0 0.0
    %3283 = vmatprep.subr.mxu0 0.0
    %3284 = vmatpush1.msra.mxu0 0.0
    %3285 = vmatprep.subr.mxu0 0.0
    %3286 = vmatpush1.msra.mxu0 0.0
    %3287 = vmatprep.subr.mxu0 0.0
    %3288 = vmatpush1.msra.mxu0 0.0
    %3289 = vmatprep.subr.mxu0 0.0
    %3290 = vmatpush1.msra.mxu0 0.0
    %3291 = vmatprep.subr.mxu0 0.0
    %3292 = vmatpush1.msra.mxu0 0.0
    %3293 = vmatprep.subr.mxu0 0.0
    %3294 = vmatpush1.msra.mxu0 0.0
    %3295 = vmatprep.subr.mxu0 0.0
    %3296 = vmatpush1.msra.mxu0 0.0
    %3297 = vmatprep.subr.mxu0 0.0
    %3298 = vmatpush1.msra.mxu0 0.0
    %3299 = vmatprep.mubr.f32.mxu0 0.0
    %3300 = vmatmul.mubr.f32.gmra.mrb[0].mxu0 %v3209
    %v3301 = vpop.f32.mrb[0].mxu0
    %v3302 = vadd.f32 0.0, %v3301
    %v3303 = vpop.f32.mrb[0].mxu0
    %3304 = vmatprep.mubr.f32.mxu0 0.0
    %3305 = vmatmul.mubr.f32.gmra.mrb[0].mxu0 %v3212
    %v3306 = vpop.f32.mrb[0].mxu0
    %v3307 = vadd.f32 0.0, %v3306
    %v3308 = vpop.f32.mrb[0].mxu0
    %3309 = vmatprep.mubr.f32.mxu0 0.0
    %3310 = vmatmul.mubr.f32.gmra.mrb[0].mxu0 %v3215
    %v3311 = vpop.f32.mrb[0].mxu0
    %v3312 = vadd.f32 0.0, %v3311
    %v3313 = vpop.f32.mrb[0].mxu0
    %3314 = vmatprep.mubr.f32.mxu0 0.0
    %3315 = vmatmul.mubr.f32.gmra.mrb[0].mxu0 %v3218
    %v3316 = vpop.f32.mrb[0].mxu0
    %v3317 = vadd.f32 0.0, %v3316
    %v3318 = vpop.f32.mrb[0].mxu0
    %3319 = vmatprep.mubr.f32.mxu0 0.0
    %3320 = vmatmul.mubr.f32.gmra.mrb[0].mxu0 %v3221
    %v3321 = vpop.f32.mrb[0].mxu0
    %v3322 = vadd.f32 0.0, %v3321
    %v3323 = vpop.f32.mrb[0].mxu0
    %3324 = vmatprep.mubr.f32.mxu0 0.0
    %3325 = vmatmul.mubr.f32.gmra.mrb[0].mxu0 %v3224
    %v3326 = vpop.f32.mrb[0].mxu0
    %v3327 = vadd.f32 0.0, %v3326
    %v3328 = vpop.f32.mrb[0].mxu0
    %3329 = vmatprep.mubr.f32.mxu0 0.0
    %3330 = vmatmul.mubr.f32.gmra.mrb[0].mxu0 %v3227
    %v3331 = vpop.f32.mrb[0].mxu0
    %v3332 = vadd.f32 0.0, %v3331
    %v3333 = vpop.f32.mrb[0].mxu0
    %3334 = vmatprep.mubr.f32.mxu0 0.0
    %3335 = vmatmul.mubr.f32.gmra.mrb[0].mxu0 %v3230
    %v3336 = vpop.f32.mrb[0].mxu0
    %v3337 = vadd.f32 0.0, %v3336
    %v3338 = vpop.f32.mrb[0].mxu0
    %3339 = vmatprep.mubr.f32.mxu0 0.0
    %3340 = vmatmul.mubr.f32.gmra.mrb[0].mxu0 %v3233
    %v3341 = vpop.f32.mrb[0].mxu0
    %v3342 = vadd.f32 0.0, %v3341
    %v3343 = vpop.f32.mrb[0].mxu0
    %3344 = vdwg.mxu0
    %v3345 = vadd.f32 %v3181, %v3302
    %v3346 = vadd.f32 %v3182, %v3307
    %v3347 = vadd.f32 %v3183, %v3312
    %v3348 = vadd.f32 %v3184, %v3317
    %v3349 = vadd.f32 %v3185, %v3322
    %v3350 = vadd.f32 %v3186, %v3327
    %v3351 = vadd.f32 %v3187, %v3332
    %v3352 = vadd.f32 %v3188, %v3337
    %v3353 = vadd.f32 %v3189, %v3342
    %v3354 = vld [vmem:[#allocation3 + $0xc] sm:$0xff]
    %v3355 = vld [vmem:[#allocation3 + $0x14] sm:$0xff]
    %v3356 = vld [vmem:[#allocation3 + $0x1c] sm:$0xff]
    %v3357 = vld [vmem:[#allocation3 + $0x24] sm:$0xff]
    %v3358 = vld [vmem:[#allocation3 + $0x2c] sm:$0xff]
    %v3359 = vld [vmem:[#allocation3 + $0x34] sm:$0xff]
    %v3360 = vld [vmem:[#allocation3 + $0x3c] sm:$0xff]
    %v3361 = vld [vmem:[#allocation3 + $0x44] sm:$0xff]
    %v3362 = vld [vmem:[#allocation3 + $0x4c] sm:$0x3]
    %s3363 = scalar_lea.vmem %s5, 384
    %v3364 = vld [vmem:[%s3363] sm:$0xff]
    %v3365 = vld [vmem:[%s3363 + $0x8] sm:$0xff]
    %v3366 = vld [vmem:[%s3363 + $0x10] sm:$0xff]
    %v3367 = vld [vmem:[%s3363 + $0x18] sm:$0xff]
    %v3368 = vld [vmem:[%s3363 + $0x20] sm:$0xff]
    %v3369 = vld [vmem:[%s3363 + $0x28] sm:$0xff]
    %v3370 = vld [vmem:[%s3363 + $0x30] sm:$0xff]
    %v3371 = vld [vmem:[%s3363 + $0x38] sm:$0xff]
    %v3373 = vsel %vm220, %v3354, 0
    %v3376 = vsel %vm220, %v3355, 0
    %v3379 = vsel %vm220, %v3356, 0
    %v3382 = vsel %vm220, %v3357, 0
    %v3385 = vsel %vm220, %v3358, 0
    %v3388 = vsel %vm220, %v3359, 0
    %v3391 = vsel %vm220, %v3360, 0
    %v3394 = vsel %vm220, %v3361, 0
    %v3397 = vsel %vm220, %v3362, 0
    %3399 = vmatprep.subr.mxu0 0.0
    %3400 = vmatpush1.msra.mxu0 %v3364
    %3401 = vmatprep.subr.mxu0 0.0
    %3402 = vmatpush1.msra.mxu0 %v3365
    %3403 = vmatprep.subr.mxu0 0.0
    %3404 = vmatpush1.msra.mxu0 %v3366
    %3405 = vmatprep.subr.mxu0 0.0
    %3406 = vmatpush1.msra.mxu0 %v3367
    %3407 = vmatprep.subr.mxu0 0.0
    %3408 = vmatpush1.msra.mxu0 %v3368
    %3409 = vmatprep.subr.mxu0 0.0
    %3410 = vmatpush1.msra.mxu0 %v3369
    %3411 = vmatprep.subr.mxu0 0.0
    %3412 = vmatpush1.msra.mxu0 %v3370
    %3413 = vmatprep.subr.mxu0 0.0
    %3414 = vmatpush1.msra.mxu0 %v3371
    %3415 = vmatprep.subr.mxu0 0.0
    %3416 = vmatpush1.msra.mxu0 0.0
    %3417 = vmatprep.subr.mxu0 0.0
    %3418 = vmatpush1.msra.mxu0 0.0
    %3419 = vmatprep.subr.mxu0 0.0
    %3420 = vmatpush1.msra.mxu0 0.0
    %3421 = vmatprep.subr.mxu0 0.0
    %3422 = vmatpush1.msra.mxu0 0.0
    %3423 = vmatprep.subr.mxu0 0.0
    %3424 = vmatpush1.msra.mxu0 0.0
    %3425 = vmatprep.subr.mxu0 0.0
    %3426 = vmatpush1.msra.mxu0 0.0
    %3427 = vmatprep.subr.mxu0 0.0
    %3428 = vmatpush1.msra.mxu0 0.0
    %3429 = vmatprep.subr.mxu0 0.0
    %3430 = vmatpush1.msra.mxu0 0.0
    %3431 = vmatprep.subr.mxu0 0.0
    %3432 = vmatpush1.msra.mxu0 0.0
    %3433 = vmatprep.subr.mxu0 0.0
    %3434 = vmatpush1.msra.mxu0 0.0
    %3435 = vmatprep.subr.mxu0 0.0
    %3436 = vmatpush1.msra.mxu0 0.0
    %3437 = vmatprep.subr.mxu0 0.0
    %3438 = vmatpush1.msra.mxu0 0.0
    %3439 = vmatprep.subr.mxu0 0.0
    %3440 = vmatpush1.msra.mxu0 0.0
    %3441 = vmatprep.subr.mxu0 0.0
    %3442 = vmatpush1.msra.mxu0 0.0
    %3443 = vmatprep.subr.mxu0 0.0
    %3444 = vmatpush1.msra.mxu0 0.0
    %3445 = vmatprep.subr.mxu0 0.0
    %3446 = vmatpush1.msra.mxu0 0.0
    %3447 = vmatprep.subr.mxu0 0.0
    %3448 = vmatpush1.msra.mxu0 0.0
    %3449 = vmatprep.subr.mxu0 0.0
    %3450 = vmatpush1.msra.mxu0 0.0
    %3451 = vmatprep.subr.mxu0 0.0
    %3452 = vmatpush1.msra.mxu0 0.0
    %3453 = vmatprep.subr.mxu0 0.0
    %3454 = vmatpush1.msra.mxu0 0.0
    %3455 = vmatprep.subr.mxu0 0.0
    %3456 = vmatpush1.msra.mxu0 0.0
    %3457 = vmatprep.subr.mxu0 0.0
    %3458 = vmatpush1.msra.mxu0 0.0
    %3459 = vmatprep.subr.mxu0 0.0
    %3460 = vmatpush1.msra.mxu0 0.0
    %3461 = vmatprep.subr.mxu0 0.0
    %3462 = vmatpush1.msra.mxu0 0.0
    %3463 = vmatprep.mubr.f32.mxu0 0.0
    %3464 = vmatmul.mubr.f32.gmra.mrb[0].mxu0 %v3373
    %v3465 = vpop.f32.mrb[0].mxu0
    %v3466 = vadd.f32 0.0, %v3465
    %v3467 = vpop.f32.mrb[0].mxu0
    %3468 = vmatprep.mubr.f32.mxu0 0.0
    %3469 = vmatmul.mubr.f32.gmra.mrb[0].mxu0 %v3376
    %v3470 = vpop.f32.mrb[0].mxu0
    %v3471 = vadd.f32 0.0, %v3470
    %v3472 = vpop.f32.mrb[0].mxu0
    %3473 = vmatprep.mubr.f32.mxu0 0.0
    %3474 = vmatmul.mubr.f32.gmra.mrb[0].mxu0 %v3379
    %v3475 = vpop.f32.mrb[0].mxu0
    %v3476 = vadd.f32 0.0, %v3475
    %v3477 = vpop.f32.mrb[0].mxu0
    %3478 = vmatprep.mubr.f32.mxu0 0.0
    %3479 = vmatmul.mubr.f32.gmra.mrb[0].mxu0 %v3382
    %v3480 = vpop.f32.mrb[0].mxu0
    %v3481 = vadd.f32 0.0, %v3480
    %v3482 = vpop.f32.mrb[0].mxu0
    %3483 = vmatprep.mubr.f32.mxu0 0.0
    %3484 = vmatmul.mubr.f32.gmra.mrb[0].mxu0 %v3385
    %v3485 = vpop.f32.mrb[0].mxu0
    %v3486 = vadd.f32 0.0, %v3485
    %v3487 = vpop.f32.mrb[0].mxu0
    %3488 = vmatprep.mubr.f32.mxu0 0.0
    %3489 = vmatmul.mubr.f32.gmra.mrb[0].mxu0 %v3388
    %v3490 = vpop.f32.mrb[0].mxu0
    %v3491 = vadd.f32 0.0, %v3490
    %v3492 = vpop.f32.mrb[0].mxu0
    %3493 = vmatprep.mubr.f32.mxu0 0.0
    %3494 = vmatmul.mubr.f32.gmra.mrb[0].mxu0 %v3391
    %v3495 = vpop.f32.mrb[0].mxu0
    %v3496 = vadd.f32 0.0, %v3495
    %v3497 = vpop.f32.mrb[0].mxu0
    %3498 = vmatprep.mubr.f32.mxu0 0.0
    %3499 = vmatmul.mubr.f32.gmra.mrb[0].mxu0 %v3394
    %v3500 = vpop.f32.mrb[0].mxu0
    %v3501 = vadd.f32 0.0, %v3500
    %v3502 = vpop.f32.mrb[0].mxu0
    %3503 = vmatprep.mubr.f32.mxu0 0.0
    %3504 = vmatmul.mubr.f32.gmra.mrb[0].mxu0 %v3397
    %v3505 = vpop.f32.mrb[0].mxu0
    %v3506 = vadd.f32 0.0, %v3505
    %v3507 = vpop.f32.mrb[0].mxu0
    %3508 = vdwg.mxu0
    %v3509 = vadd.f32 %v3345, %v3466
    %v3510 = vadd.f32 %v3346, %v3471
    %v3511 = vadd.f32 %v3347, %v3476
    %v3512 = vadd.f32 %v3348, %v3481
    %v3513 = vadd.f32 %v3349, %v3486
    %v3514 = vadd.f32 %v3350, %v3491
    %v3515 = vadd.f32 %v3351, %v3496
    %v3516 = vadd.f32 %v3352, %v3501
    %v3517 = vadd.f32 %v3353, %v3506
    %v3518 = vld [vmem:[#allocation3 + $0xd] sm:$0xff]
    %v3519 = vld [vmem:[#allocation3 + $0x15] sm:$0xff]
    %v3520 = vld [vmem:[#allocation3 + $0x1d] sm:$0xff]
    %v3521 = vld [vmem:[#allocation3 + $0x25] sm:$0xff]
    %v3522 = vld [vmem:[#allocation3 + $0x2d] sm:$0xff]
    %v3523 = vld [vmem:[#allocation3 + $0x35] sm:$0xff]
    %v3524 = vld [vmem:[#allocation3 + $0x3d] sm:$0xff]
    %v3525 = vld [vmem:[#allocation3 + $0x45] sm:$0xff]
    %v3526 = vld [vmem:[#allocation3 + $0x4d] sm:$0x3]
    %s3527 = scalar_lea.vmem %s5, 448
    %v3528 = vld [vmem:[%s3527] sm:$0xff]
    %v3529 = vld [vmem:[%s3527 + $0x8] sm:$0xff]
    %v3530 = vld [vmem:[%s3527 + $0x10] sm:$0xff]
    %v3531 = vld [vmem:[%s3527 + $0x18] sm:$0xff]
    %v3532 = vld [vmem:[%s3527 + $0x20] sm:$0xff]
    %v3533 = vld [vmem:[%s3527 + $0x28] sm:$0xff]
    %v3534 = vld [vmem:[%s3527 + $0x30] sm:$0xff]
    %v3535 = vld [vmem:[%s3527 + $0x38] sm:$0xff]
    %v3537 = vsel %vm220, %v3518, 0
    %v3540 = vsel %vm220, %v3519, 0
    %v3543 = vsel %vm220, %v3520, 0
    %v3546 = vsel %vm220, %v3521, 0
    %v3549 = vsel %vm220, %v3522, 0
    %v3552 = vsel %vm220, %v3523, 0
    %v3555 = vsel %vm220, %v3524, 0
    %v3558 = vsel %vm220, %v3525, 0
    %v3561 = vsel %vm220, %v3526, 0
    %3563 = vmatprep.subr.mxu0 0.0
    %3564 = vmatpush1.msra.mxu0 %v3528
    %3565 = vmatprep.subr.mxu0 0.0
    %3566 = vmatpush1.msra.mxu0 %v3529
    %3567 = vmatprep.subr.mxu0 0.0
    %3568 = vmatpush1.msra.mxu0 %v3530
    %3569 = vmatprep.subr.mxu0 0.0
    %3570 = vmatpush1.msra.mxu0 %v3531
    %3571 = vmatprep.subr.mxu0 0.0
    %3572 = vmatpush1.msra.mxu0 %v3532
    %3573 = vmatprep.subr.mxu0 0.0
    %3574 = vmatpush1.msra.mxu0 %v3533
    %3575 = vmatprep.subr.mxu0 0.0
    %3576 = vmatpush1.msra.mxu0 %v3534
    %3577 = vmatprep.subr.mxu0 0.0
    %3578 = vmatpush1.msra.mxu0 %v3535
    %3579 = vmatprep.subr.mxu0 0.0
    %3580 = vmatpush1.msra.mxu0 0.0
    %3581 = vmatprep.subr.mxu0 0.0
    %3582 = vmatpush1.msra.mxu0 0.0
    %3583 = vmatprep.subr.mxu0 0.0
    %3584 = vmatpush1.msra.mxu0 0.0
    %3585 = vmatprep.subr.mxu0 0.0
    %3586 = vmatpush1.msra.mxu0 0.0
    %3587 = vmatprep.subr.mxu0 0.0
    %3588 = vmatpush1.msra.mxu0 0.0
    %3589 = vmatprep.subr.mxu0 0.0
    %3590 = vmatpush1.msra.mxu0 0.0
    %3591 = vmatprep.subr.mxu0 0.0
    %3592 = vmatpush1.msra.mxu0 0.0
    %3593 = vmatprep.subr.mxu0 0.0
    %3594 = vmatpush1.msra.mxu0 0.0
    %3595 = vmatprep.subr.mxu0 0.0
    %3596 = vmatpush1.msra.mxu0 0.0
    %3597 = vmatprep.subr.mxu0 0.0
    %3598 = vmatpush1.msra.mxu0 0.0
    %3599 = vmatprep.subr.mxu0 0.0
    %3600 = vmatpush1.msra.mxu0 0.0
    %3601 = vmatprep.subr.mxu0 0.0
    %3602 = vmatpush1.msra.mxu0 0.0
    %3603 = vmatprep.subr.mxu0 0.0
    %3604 = vmatpush1.msra.mxu0 0.0
    %3605 = vmatprep.subr.mxu0 0.0
    %3606 = vmatpush1.msra.mxu0 0.0
    %3607 = vmatprep.subr.mxu0 0.0
    %3608 = vmatpush1.msra.mxu0 0.0
    %3609 = vmatprep.subr.mxu0 0.0
    %3610 = vmatpush1.msra.mxu0 0.0
    %3611 = vmatprep.subr.mxu0 0.0
    %3612 = vmatpush1.msra.mxu0 0.0
    %3613 = vmatprep.subr.mxu0 0.0
    %3614 = vmatpush1.msra.mxu0 0.0
    %3615 = vmatprep.subr.mxu0 0.0
    %3616 = vmatpush1.msra.mxu0 0.0
    %3617 = vmatprep.subr.mxu0 0.0
    %3618 = vmatpush1.msra.mxu0 0.0
    %3619 = vmatprep.subr.mxu0 0.0
    %3620 = vmatpush1.msra.mxu0 0.0
    %3621 = vmatprep.subr.mxu0 0.0
    %3622 = vmatpush1.msra.mxu0 0.0
    %3623 = vmatprep.subr.mxu0 0.0
    %3624 = vmatpush1.msra.mxu0 0.0
    %3625 = vmatprep.subr.mxu0 0.0
    %3626 = vmatpush1.msra.mxu0 0.0
    %3627 = vmatprep.mubr.f32.mxu0 0.0
    %3628 = vmatmul.mubr.f32.gmra.mrb[0].mxu0 %v3537
    %v3629 = vpop.f32.mrb[0].mxu0
    %v3630 = vadd.f32 0.0, %v3629
    %v3631 = vpop.f32.mrb[0].mxu0
    %3632 = vmatprep.mubr.f32.mxu0 0.0
    %3633 = vmatmul.mubr.f32.gmra.mrb[0].mxu0 %v3540
    %v3634 = vpop.f32.mrb[0].mxu0
    %v3635 = vadd.f32 0.0, %v3634
    %v3636 = vpop.f32.mrb[0].mxu0
    %3637 = vmatprep.mubr.f32.mxu0 0.0
    %3638 = vmatmul.mubr.f32.gmra.mrb[0].mxu0 %v3543
    %v3639 = vpop.f32.mrb[0].mxu0
    %v3640 = vadd.f32 0.0, %v3639
    %v3641 = vpop.f32.mrb[0].mxu0
    %3642 = vmatprep.mubr.f32.mxu0 0.0
    %3643 = vmatmul.mubr.f32.gmra.mrb[0].mxu0 %v3546
    %v3644 = vpop.f32.mrb[0].mxu0
    %v3645 = vadd.f32 0.0, %v3644
    %v3646 = vpop.f32.mrb[0].mxu0
    %3647 = vmatprep.mubr.f32.mxu0 0.0
    %3648 = vmatmul.mubr.f32.gmra.mrb[0].mxu0 %v3549
    %v3649 = vpop.f32.mrb[0].mxu0
    %v3650 = vadd.f32 0.0, %v3649
    %v3651 = vpop.f32.mrb[0].mxu0
    %3652 = vmatprep.mubr.f32.mxu0 0.0
    %3653 = vmatmul.mubr.f32.gmra.mrb[0].mxu0 %v3552
    %v3654 = vpop.f32.mrb[0].mxu0
    %v3655 = vadd.f32 0.0, %v3654
    %v3656 = vpop.f32.mrb[0].mxu0
    %3657 = vmatprep.mubr.f32.mxu0 0.0
    %3658 = vmatmul.mubr.f32.gmra.mrb[0].mxu0 %v3555
    %v3659 = vpop.f32.mrb[0].mxu0
    %v3660 = vadd.f32 0.0, %v3659
    %v3661 = vpop.f32.mrb[0].mxu0
    %3662 = vmatprep.mubr.f32.mxu0 0.0
    %3663 = vmatmul.mubr.f32.gmra.mrb[0].mxu0 %v3558
    %v3664 = vpop.f32.mrb[0].mxu0
    %v3665 = vadd.f32 0.0, %v3664
    %v3666 = vpop.f32.mrb[0].mxu0
    %3667 = vmatprep.mubr.f32.mxu0 0.0
    %3668 = vmatmul.mubr.f32.gmra.mrb[0].mxu0 %v3561
    %v3669 = vpop.f32.mrb[0].mxu0
    %v3670 = vadd.f32 0.0, %v3669
    %v3671 = vpop.f32.mrb[0].mxu0
    %3672 = vdwg.mxu0
    %v3673 = vadd.f32 %v3509, %v3630
    %v3674 = vadd.f32 %v3510, %v3635
    %v3675 = vadd.f32 %v3511, %v3640
    %v3676 = vadd.f32 %v3512, %v3645
    %v3677 = vadd.f32 %v3513, %v3650
    %v3678 = vadd.f32 %v3514, %v3655
    %v3679 = vadd.f32 %v3515, %v3660
    %v3680 = vadd.f32 %v3516, %v3665
    %v3681 = vadd.f32 %v3517, %v3670
    %v3682 = vld [vmem:[#allocation3 + $0xe] sm:$0xff]
    %v3683 = vld [vmem:[#allocation3 + $0x16] sm:$0xff]
    %v3684 = vld [vmem:[#allocation3 + $0x1e] sm:$0xff]
    %v3685 = vld [vmem:[#allocation3 + $0x26] sm:$0xff]
    %v3686 = vld [vmem:[#allocation3 + $0x2e] sm:$0xff]
    %v3687 = vld [vmem:[#allocation3 + $0x36] sm:$0xff]
    %v3688 = vld [vmem:[#allocation3 + $0x3e] sm:$0xff]
    %v3689 = vld [vmem:[#allocation3 + $0x46] sm:$0xff]
    %v3690 = vld [vmem:[#allocation3 + $0x4e] sm:$0x3]
    %s3691 = scalar_lea.vmem %s5, 512
    %v3692 = vld [vmem:[%s3691] sm:$0xff]
    %v3693 = vld [vmem:[%s3691 + $0x8] sm:$0xff]
    %v3694 = vld [vmem:[%s3691 + $0x10] sm:$0xff]
    %v3695 = vld [vmem:[%s3691 + $0x18] sm:$0xff]
    %v3696 = vld [vmem:[%s3691 + $0x20] sm:$0xff]
    %v3697 = vld [vmem:[%s3691 + $0x28] sm:$0xff]
    %v3698 = vld [vmem:[%s3691 + $0x30] sm:$0xff]
    %v3699 = vld [vmem:[%s3691 + $0x38] sm:$0xff]
    %v3701 = vsel %vm220, %v3682, 0
    %v3704 = vsel %vm220, %v3683, 0
    %v3707 = vsel %vm220, %v3684, 0
    %v3710 = vsel %vm220, %v3685, 0
    %v3713 = vsel %vm220, %v3686, 0
    %v3716 = vsel %vm220, %v3687, 0
    %v3719 = vsel %vm220, %v3688, 0
    %v3722 = vsel %vm220, %v3689, 0
    %v3725 = vsel %vm220, %v3690, 0
    %3727 = vmatprep.subr.mxu0 0.0
    %3728 = vmatpush1.msra.mxu0 %v3692
    %3729 = vmatprep.subr.mxu0 0.0
    %3730 = vmatpush1.msra.mxu0 %v3693
    %3731 = vmatprep.subr.mxu0 0.0
    %3732 = vmatpush1.msra.mxu0 %v3694
    %3733 = vmatprep.subr.mxu0 0.0
    %3734 = vmatpush1.msra.mxu0 %v3695
    %3735 = vmatprep.subr.mxu0 0.0
    %3736 = vmatpush1.msra.mxu0 %v3696
    %3737 = vmatprep.subr.mxu0 0.0
    %3738 = vmatpush1.msra.mxu0 %v3697
    %3739 = vmatprep.subr.mxu0 0.0
    %3740 = vmatpush1.msra.mxu0 %v3698
    %3741 = vmatprep.subr.mxu0 0.0
    %3742 = vmatpush1.msra.mxu0 %v3699
    %3743 = vmatprep.subr.mxu0 0.0
    %3744 = vmatpush1.msra.mxu0 0.0
    %3745 = vmatprep.subr.mxu0 0.0
    %3746 = vmatpush1.msra.mxu0 0.0
    %3747 = vmatprep.subr.mxu0 0.0
    %3748 = vmatpush1.msra.mxu0 0.0
    %3749 = vmatprep.subr.mxu0 0.0
    %3750 = vmatpush1.msra.mxu0 0.0
    %3751 = vmatprep.subr.mxu0 0.0
    %3752 = vmatpush1.msra.mxu0 0.0
    %3753 = vmatprep.subr.mxu0 0.0
    %3754 = vmatpush1.msra.mxu0 0.0
    %3755 = vmatprep.subr.mxu0 0.0
    %3756 = vmatpush1.msra.mxu0 0.0
    %3757 = vmatprep.subr.mxu0 0.0
    %3758 = vmatpush1.msra.mxu0 0.0
    %3759 = vmatprep.subr.mxu0 0.0
    %3760 = vmatpush1.msra.mxu0 0.0
    %3761 = vmatprep.subr.mxu0 0.0
    %3762 = vmatpush1.msra.mxu0 0.0
    %3763 = vmatprep.subr.mxu0 0.0
    %3764 = vmatpush1.msra.mxu0 0.0
    %3765 = vmatprep.subr.mxu0 0.0
    %3766 = vmatpush1.msra.mxu0 0.0
    %3767 = vmatprep.subr.mxu0 0.0
    %3768 = vmatpush1.msra.mxu0 0.0
    %3769 = vmatprep.subr.mxu0 0.0
    %3770 = vmatpush1.msra.mxu0 0.0
    %3771 = vmatprep.subr.mxu0 0.0
    %3772 = vmatpush1.msra.mxu0 0.0
    %3773 = vmatprep.subr.mxu0 0.0
    %3774 = vmatpush1.msra.mxu0 0.0
    %3775 = vmatprep.subr.mxu0 0.0
    %3776 = vmatpush1.msra.mxu0 0.0
    %3777 = vmatprep.subr.mxu0 0.0
    %3778 = vmatpush1.msra.mxu0 0.0
    %3779 = vmatprep.subr.mxu0 0.0
    %3780 = vmatpush1.msra.mxu0 0.0
    %3781 = vmatprep.subr.mxu0 0.0
    %3782 = vmatpush1.msra.mxu0 0.0
    %3783 = vmatprep.subr.mxu0 0.0
    %3784 = vmatpush1.msra.mxu0 0.0
    %3785 = vmatprep.subr.mxu0 0.0
    %3786 = vmatpush1.msra.mxu0 0.0
    %3787 = vmatprep.subr.mxu0 0.0
    %3788 = vmatpush1.msra.mxu0 0.0
    %3789 = vmatprep.subr.mxu0 0.0
    %3790 = vmatpush1.msra.mxu0 0.0
    %3791 = vmatprep.mubr.f32.mxu0 0.0
    %3792 = vmatmul.mubr.f32.gmra.mrb[0].mxu0 %v3701
    %v3793 = vpop.f32.mrb[0].mxu0
    %v3794 = vadd.f32 0.0, %v3793
    %v3795 = vpop.f32.mrb[0].mxu0
    %3796 = vmatprep.mubr.f32.mxu0 0.0
    %3797 = vmatmul.mubr.f32.gmra.mrb[0].mxu0 %v3704
    %v3798 = vpop.f32.mrb[0].mxu0
    %v3799 = vadd.f32 0.0, %v3798
    %v3800 = vpop.f32.mrb[0].mxu0
    %3801 = vmatprep.mubr.f32.mxu0 0.0
    %3802 = vmatmul.mubr.f32.gmra.mrb[0].mxu0 %v3707
    %v3803 = vpop.f32.mrb[0].mxu0
    %v3804 = vadd.f32 0.0, %v3803
    %v3805 = vpop.f32.mrb[0].mxu0
    %3806 = vmatprep.mubr.f32.mxu0 0.0
    %3807 = vmatmul.mubr.f32.gmra.mrb[0].mxu0 %v3710
    %v3808 = vpop.f32.mrb[0].mxu0
    %v3809 = vadd.f32 0.0, %v3808
    %v3810 = vpop.f32.mrb[0].mxu0
    %3811 = vmatprep.mubr.f32.mxu0 0.0
    %3812 = vmatmul.mubr.f32.gmra.mrb[0].mxu0 %v3713
    %v3813 = vpop.f32.mrb[0].mxu0
    %v3814 = vadd.f32 0.0, %v3813
    %v3815 = vpop.f32.mrb[0].mxu0
    %3816 = vmatprep.mubr.f32.mxu0 0.0
    %3817 = vmatmul.mubr.f32.gmra.mrb[0].mxu0 %v3716
    %v3818 = vpop.f32.mrb[0].mxu0
    %v3819 = vadd.f32 0.0, %v3818
    %v3820 = vpop.f32.mrb[0].mxu0
    %3821 = vmatprep.mubr.f32.mxu0 0.0
    %3822 = vmatmul.mubr.f32.gmra.mrb[0].mxu0 %v3719
    %v3823 = vpop.f32.mrb[0].mxu0
    %v3824 = vadd.f32 0.0, %v3823
    %v3825 = vpop.f32.mrb[0].mxu0
    %3826 = vmatprep.mubr.f32.mxu0 0.0
    %3827 = vmatmul.mubr.f32.gmra.mrb[0].mxu0 %v3722
    %v3828 = vpop.f32.mrb[0].mxu0
    %v3829 = vadd.f32 0.0, %v3828
    %v3830 = vpop.f32.mrb[0].mxu0
    %3831 = vmatprep.mubr.f32.mxu0 0.0
    %3832 = vmatmul.mubr.f32.gmra.mrb[0].mxu0 %v3725
    %v3833 = vpop.f32.mrb[0].mxu0
    %v3834 = vadd.f32 0.0, %v3833
    %v3835 = vpop.f32.mrb[0].mxu0
    %3836 = vdwg.mxu0
    %v3837 = vadd.f32 %v3673, %v3794
    %v3838 = vadd.f32 %v3674, %v3799
    %v3839 = vadd.f32 %v3675, %v3804
    %v3840 = vadd.f32 %v3676, %v3809
    %v3841 = vadd.f32 %v3677, %v3814
    %v3842 = vadd.f32 %v3678, %v3819
    %v3843 = vadd.f32 %v3679, %v3824
    %v3844 = vadd.f32 %v3680, %v3829
    %v3845 = vadd.f32 %v3681, %v3834
    %v3846 = vld [vmem:[%s6] sm:$0x1]
    %v3848 = vlaneseq
    %v3849 = vshrl.u32 %v3848, 7
    %v3850 = vsub.s32 0, %v3849
    %v3851 = vrot.slane %v3846, %v3850
    %v3853 = vadd.f32 %v3837, %v3851
    %v3854 = vadd.f32 %v3838, %v3851
    %v3855 = vadd.f32 %v3839, %v3851
    %v3856 = vadd.f32 %v3840, %v3851
    %v3857 = vadd.f32 %v3841, %v3851
    %v3858 = vadd.f32 %v3842, %v3851
    %v3859 = vadd.f32 %v3843, %v3851
    %v3860 = vadd.f32 %v3844, %v3851
    %v3861 = vadd.f32 %v3845, %v3851
    %v3862 = vmax.f32 %v3853, 0.0
    %v3863 = vmax.f32 %v3854, 0.0
    %v3864 = vmax.f32 %v3855, 0.0
    %v3865 = vmax.f32 %v3856, 0.0
    %v3866 = vmax.f32 %v3857, 0.0
    %v3867 = vmax.f32 %v3858, 0.0
    %v3868 = vmax.f32 %v3859, 0.0
    %v3869 = vmax.f32 %v3860, 0.0
    %v3870 = vmax.f32 %v3861, 0.0
    %3871 = vst.msk [vmem:[#allocation4] sm:$0xff] %vm220, %v3862
    %3872 = vst.msk [vmem:[#allocation4 + $0x8] sm:$0xff] %vm220, %v3863
    %3873 = vst.msk [vmem:[#allocation4 + $0x10] sm:$0xff] %vm220, %v3864
    %3874 = vst.msk [vmem:[#allocation4 + $0x18] sm:$0xff] %vm220, %v3865
    %3875 = vst.msk [vmem:[#allocation4 + $0x20] sm:$0xff] %vm220, %v3866
    %3876 = vst.msk [vmem:[#allocation4 + $0x28] sm:$0xff] %vm220, %v3867
    %3877 = vst.msk [vmem:[#allocation4 + $0x30] sm:$0xff] %vm220, %v3868
    %3878 = vst.msk [vmem:[#allocation4 + $0x38] sm:$0xff] %vm220, %v3869
    %vm3879 = vcmask 517120
    %3880 = vst.msk [vmem:[#allocation4 + $0x40] sm:$0x3] %vm3879, %v3870
    %v3881 = vld [vmem:[#allocation4] ss:$40 sm:$0x3]
    %v3882 = vld [vmem:[%s7] sm:$0xff]
    %v3883 = vld [vmem:[%s7 + $0x8] sm:$0xff]
    %v3884 = vld [vmem:[%s7 + $0x10] sm:$0xff]
    %v3885 = vld [vmem:[%s7 + $0x18] sm:$0xff]
    %v3886 = vld [vmem:[%s7 + $0x20] sm:$0xff]
    %v3887 = vld [vmem:[%s7 + $0x28] sm:$0xff]
    %v3888 = vld [vmem:[%s7 + $0x30] sm:$0xff]
    %v3889 = vld [vmem:[%s7 + $0x38] sm:$0xff]
    %s3890 = scalar_lea.vmem [#allocation4], 1
    %v3891 = vld [vmem:[%s3890] ss:$40 sm:$0x3]
    %s3892 = scalar_lea.vmem %s7, 64
    %v3893 = vld [vmem:[%s3892] sm:$0xff]
    %v3894 = vld [vmem:[%s3892 + $0x8] sm:$0xff]
    %v3895 = vld [vmem:[%s3892 + $0x10] sm:$0xff]
    %v3896 = vld [vmem:[%s3892 + $0x18] sm:$0xff]
    %v3897 = vld [vmem:[%s3892 + $0x20] sm:$0xff]
    %v3898 = vld [vmem:[%s3892 + $0x28] sm:$0xff]
    %v3899 = vld [vmem:[%s3892 + $0x30] sm:$0xff]
    %v3900 = vld [vmem:[%s3892 + $0x38] sm:$0xff]
    %v3902 = vsel %vm220, %v3891, 0
    %3904 = vmatprep.subr.mxu0 0.0
    %3905 = vmatpush1.msra.mxu0 %v3893
    %3906 = vmatprep.subr.mxu0 0.0
    %3907 = vmatpush1.msra.mxu0 %v3894
    %3908 = vmatprep.subr.mxu0 0.0
    %3909 = vmatpush1.msra.mxu0 %v3895
    %3910 = vmatprep.subr.mxu0 0.0
    %3911 = vmatpush1.msra.mxu0 %v3896
    %3912 = vmatprep.subr.mxu0 0.0
    %3913 = vmatpush1.msra.mxu0 %v3897
    %3914 = vmatprep.subr.mxu0 0.0
    %3915 = vmatpush1.msra.mxu0 %v3898
    %3916 = vmatprep.subr.mxu0 0.0
    %3917 = vmatpush1.msra.mxu0 %v3899
    %3918 = vmatprep.subr.mxu0 0.0
    %3919 = vmatpush1.msra.mxu0 %v3900
    %3920 = vmatprep.subr.mxu0 0.0
    %3921 = vmatpush1.msra.mxu0 0.0
    %3922 = vmatprep.subr.mxu0 0.0
    %3923 = vmatpush1.msra.mxu0 0.0
    %3924 = vmatprep.subr.mxu0 0.0
    %3925 = vmatpush1.msra.mxu0 0.0
    %3926 = vmatprep.subr.mxu0 0.0
    %3927 = vmatpush1.msra.mxu0 0.0
    %3928 = vmatprep.subr.mxu0 0.0
    %3929 = vmatpush1.msra.mxu0 0.0
    %3930 = vmatprep.subr.mxu0 0.0
    %3931 = vmatpush1.msra.mxu0 0.0
    %3932 = vmatprep.subr.mxu0 0.0
    %3933 = vmatpush1.msra.mxu0 0.0
    %3934 = vmatprep.subr.mxu0 0.0
    %3935 = vmatpush1.msra.mxu0 0.0
    %3936 = vmatprep.subr.mxu0 0.0
    %3937 = vmatpush1.msra.mxu0 0.0
    %3938 = vmatprep.subr.mxu0 0.0
    %3939 = vmatpush1.msra.mxu0 0.0
    %3940 = vmatprep.subr.mxu0 0.0
    %3941 = vmatpush1.msra.mxu0 0.0
    %3942 = vmatprep.subr.mxu0 0.0
    %3943 = vmatpush1.msra.mxu0 0.0
    %3944 = vmatprep.subr.mxu0 0.0
    %3945 = vmatpush1.msra.mxu0 0.0
    %3946 = vmatprep.subr.mxu0 0.0
    %3947 = vmatpush1.msra.mxu0 0.0
    %3948 = vmatprep.subr.mxu0 0.0
    %3949 = vmatpush1.msra.mxu0 0.0
    %3950 = vmatprep.subr.mxu0 0.0
    %3951 = vmatpush1.msra.mxu0 0.0
    %3952 = vmatprep.subr.mxu0 0.0
    %3953 = vmatpush1.msra.mxu0 0.0
    %3954 = vmatprep.subr.mxu0 0.0
    %3955 = vmatpush1.msra.mxu0 0.0
    %3956 = vmatprep.subr.mxu0 0.0
    %3957 = vmatpush1.msra.mxu0 0.0
    %3958 = vmatprep.subr.mxu0 0.0
    %3959 = vmatpush1.msra.mxu0 0.0
    %3960 = vmatprep.subr.mxu0 0.0
    %3961 = vmatpush1.msra.mxu0 0.0
    %3962 = vmatprep.subr.mxu0 0.0
    %3963 = vmatpush1.msra.mxu0 0.0
    %3964 = vmatprep.subr.mxu0 0.0
    %3965 = vmatpush1.msra.mxu0 0.0
    %3966 = vmatprep.subr.mxu0 0.0
    %3967 = vmatpush1.msra.mxu0 0.0
    %3968 = vmatprep.mubr.f32.mxu0 0.0
    %3969 = vmatmul.mubr.f32.gmra.mrb[0].mxu0 %v3902
    %v3970 = vpop.f32.mrb[0].mxu0
    %v3971 = vadd.f32 0.0, %v3970
    %v3972 = vpop.f32.mrb[0].mxu0
    %3973 = vdwg.mxu0
    %v3975 = vsel %vm220, %v3881, 0
    %3977 = vmatprep.subr.mxu0 0.0
    %3978 = vmatpush1.msra.mxu0 %v3882
    %3979 = vmatprep.subr.mxu0 0.0
    %3980 = vmatpush1.msra.mxu0 %v3883
    %3981 = vmatprep.subr.mxu0 0.0
    %3982 = vmatpush1.msra.mxu0 %v3884
    %3983 = vmatprep.subr.mxu0 0.0
    %3984 = vmatpush1.msra.mxu0 %v3885
    %3985 = vmatprep.subr.mxu0 0.0
    %3986 = vmatpush1.msra.mxu0 %v3886
    %3987 = vmatprep.subr.mxu0 0.0
    %3988 = vmatpush1.msra.mxu0 %v3887
    %3989 = vmatprep.subr.mxu0 0.0
    %3990 = vmatpush1.msra.mxu0 %v3888
    %3991 = vmatprep.subr.mxu0 0.0
    %3992 = vmatpush1.msra.mxu0 %v3889
    %3993 = vmatprep.subr.mxu0 0.0
    %3994 = vmatpush1.msra.mxu0 0.0
    %3995 = vmatprep.subr.mxu0 0.0
    %3996 = vmatpush1.msra.mxu0 0.0
    %3997 = vmatprep.subr.mxu0 0.0
    %3998 = vmatpush1.msra.mxu0 0.0
    %3999 = vmatprep.subr.mxu0 0.0
    %4000 = vmatpush1.msra.mxu0 0.0
    %4001 = vmatprep.subr.mxu0 0.0
    %4002 = vmatpush1.msra.mxu0 0.0
    %4003 = vmatprep.subr.mxu0 0.0
    %4004 = vmatpush1.msra.mxu0 0.0
    %4005 = vmatprep.subr.mxu0 0.0
    %4006 = vmatpush1.msra.mxu0 0.0
    %4007 = vmatprep.subr.mxu0 0.0
    %4008 = vmatpush1.msra.mxu0 0.0
    %4009 = vmatprep.subr.mxu0 0.0
    %4010 = vmatpush1.msra.mxu0 0.0
    %4011 = vmatprep.subr.mxu0 0.0
    %4012 = vmatpush1.msra.mxu0 0.0
    %4013 = vmatprep.subr.mxu0 0.0
    %4014 = vmatpush1.msra.mxu0 0.0
    %4015 = vmatprep.subr.mxu0 0.0
    %4016 = vmatpush1.msra.mxu0 0.0
    %4017 = vmatprep.subr.mxu0 0.0
    %4018 = vmatpush1.msra.mxu0 0.0
    %4019 = vmatprep.subr.mxu0 0.0
    %4020 = vmatpush1.msra.mxu0 0.0
    %4021 = vmatprep.subr.mxu0 0.0
    %4022 = vmatpush1.msra.mxu0 0.0
    %4023 = vmatprep.subr.mxu0 0.0
    %4024 = vmatpush1.msra.mxu0 0.0
    %4025 = vmatprep.subr.mxu0 0.0
    %4026 = vmatpush1.msra.mxu0 0.0
    %4027 = vmatprep.subr.mxu0 0.0
    %4028 = vmatpush1.msra.mxu0 0.0
    %4029 = vmatprep.subr.mxu0 0.0
    %4030 = vmatpush1.msra.mxu0 0.0
    %4031 = vmatprep.subr.mxu0 0.0
    %4032 = vmatpush1.msra.mxu0 0.0
    %4033 = vmatprep.subr.mxu0 0.0
    %4034 = vmatpush1.msra.mxu0 0.0
    %4035 = vmatprep.subr.mxu0 0.0
    %4036 = vmatpush1.msra.mxu0 0.0
    %4037 = vmatprep.subr.mxu0 0.0
    %4038 = vmatpush1.msra.mxu0 0.0
    %4039 = vmatprep.subr.mxu0 0.0
    %4040 = vmatpush1.msra.mxu0 0.0
    %4041 = vmatprep.mubr.f32.mxu0 0.0
    %4042 = vmatmul.mubr.f32.gmra.mrb[0].mxu0 %v3975
    %v4043 = vpop.f32.mrb[0].mxu0
    %v4044 = vadd.f32 %v3971, %v4043
    %v4045 = vpop.f32.mrb[0].mxu0
    %4046 = vdwg.mxu0
    %s4047 = scalar_lea.vmem [#allocation4], 2
    %v4048 = vld [vmem:[%s4047] ss:$40 sm:$0x3]
    %s4049 = scalar_lea.vmem %s7, 128
    %v4050 = vld [vmem:[%s4049] sm:$0xff]
    %v4051 = vld [vmem:[%s4049 + $0x8] sm:$0xff]
    %v4052 = vld [vmem:[%s4049 + $0x10] sm:$0xff]
    %v4053 = vld [vmem:[%s4049 + $0x18] sm:$0xff]
    %v4054 = vld [vmem:[%s4049 + $0x20] sm:$0xff]
    %v4055 = vld [vmem:[%s4049 + $0x28] sm:$0xff]
    %v4056 = vld [vmem:[%s4049 + $0x30] sm:$0xff]
    %v4057 = vld [vmem:[%s4049 + $0x38] sm:$0xff]
    %v4059 = vsel %vm220, %v4048, 0
    %4061 = vmatprep.subr.mxu0 0.0
    %4062 = vmatpush1.msra.mxu0 %v4050
    %4063 = vmatprep.subr.mxu0 0.0
    %4064 = vmatpush1.msra.mxu0 %v4051
    %4065 = vmatprep.subr.mxu0 0.0
    %4066 = vmatpush1.msra.mxu0 %v4052
    %4067 = vmatprep.subr.mxu0 0.0
    %4068 = vmatpush1.msra.mxu0 %v4053
    %4069 = vmatprep.subr.mxu0 0.0
    %4070 = vmatpush1.msra.mxu0 %v4054
    %4071 = vmatprep.subr.mxu0 0.0
    %4072 = vmatpush1.msra.mxu0 %v4055
    %4073 = vmatprep.subr.mxu0 0.0
    %4074 = vmatpush1.msra.mxu0 %v4056
    %4075 = vmatprep.subr.mxu0 0.0
    %4076 = vmatpush1.msra.mxu0 %v4057
    %4077 = vmatprep.subr.mxu0 0.0
    %4078 = vmatpush1.msra.mxu0 0.0
    %4079 = vmatprep.subr.mxu0 0.0
    %4080 = vmatpush1.msra.mxu0 0.0
    %4081 = vmatprep.subr.mxu0 0.0
    %4082 = vmatpush1.msra.mxu0 0.0
    %4083 = vmatprep.subr.mxu0 0.0
    %4084 = vmatpush1.msra.mxu0 0.0
    %4085 = vmatprep.subr.mxu0 0.0
    %4086 = vmatpush1.msra.mxu0 0.0
    %4087 = vmatprep.subr.mxu0 0.0
    %4088 = vmatpush1.msra.mxu0 0.0
    %4089 = vmatprep.subr.mxu0 0.0
    %4090 = vmatpush1.msra.mxu0 0.0
    %4091 = vmatprep.subr.mxu0 0.0
    %4092 = vmatpush1.msra.mxu0 0.0
    %4093 = vmatprep.subr.mxu0 0.0
    %4094 = vmatpush1.msra.mxu0 0.0
    %4095 = vmatprep.subr.mxu0 0.0
    %4096 = vmatpush1.msra.mxu0 0.0
    %4097 = vmatprep.subr.mxu0 0.0
    %4098 = vmatpush1.msra.mxu0 0.0
    %4099 = vmatprep.subr.mxu0 0.0
    %4100 = vmatpush1.msra.mxu0 0.0
    %4101 = vmatprep.subr.mxu0 0.0
    %4102 = vmatpush1.msra.mxu0 0.0
    %4103 = vmatprep.subr.mxu0 0.0
    %4104 = vmatpush1.msra.mxu0 0.0
    %4105 = vmatprep.subr.mxu0 0.0
    %4106 = vmatpush1.msra.mxu0 0.0
    %4107 = vmatprep.subr.mxu0 0.0
    %4108 = vmatpush1.msra.mxu0 0.0
    %4109 = vmatprep.subr.mxu0 0.0
    %4110 = vmatpush1.msra.mxu0 0.0
    %4111 = vmatprep.subr.mxu0 0.0
    %4112 = vmatpush1.msra.mxu0 0.0
    %4113 = vmatprep.subr.mxu0 0.0
    %4114 = vmatpush1.msra.mxu0 0.0
    %4115 = vmatprep.subr.mxu0 0.0
    %4116 = vmatpush1.msra.mxu0 0.0
    %4117 = vmatprep.subr.mxu0 0.0
    %4118 = vmatpush1.msra.mxu0 0.0
    %4119 = vmatprep.subr.mxu0 0.0
    %4120 = vmatpush1.msra.mxu0 0.0
    %4121 = vmatprep.subr.mxu0 0.0
    %4122 = vmatpush1.msra.mxu0 0.0
    %4123 = vmatprep.subr.mxu0 0.0
    %4124 = vmatpush1.msra.mxu0 0.0
    %4125 = vmatprep.mubr.f32.mxu0 0.0
    %4126 = vmatmul.mubr.f32.gmra.mrb[0].mxu0 %v4059
    %v4127 = vpop.f32.mrb[0].mxu0
    %v4128 = vadd.f32 0.0, %v4127
    %v4129 = vpop.f32.mrb[0].mxu0
    %4130 = vdwg.mxu0
    %v4131 = vadd.f32 %v4044, %v4128
    %s4132 = scalar_lea.vmem [#allocation4], 6
    %v4133 = vld [vmem:[%s4132] ss:$40 sm:$0x3]
    %s4134 = scalar_lea.vmem %s7, 192
    %v4135 = vld [vmem:[%s4134] sm:$0xff]
    %v4136 = vld [vmem:[%s4134 + $0x8] sm:$0xff]
    %v4137 = vld [vmem:[%s4134 + $0x10] sm:$0xff]
    %v4138 = vld [vmem:[%s4134 + $0x18] sm:$0xff]
    %v4139 = vld [vmem:[%s4134 + $0x20] sm:$0xff]
    %v4140 = vld [vmem:[%s4134 + $0x28] sm:$0xff]
    %v4141 = vld [vmem:[%s4134 + $0x30] sm:$0xff]
    %v4142 = vld [vmem:[%s4134 + $0x38] sm:$0xff]
    %v4144 = vsel %vm220, %v4133, 0
    %4146 = vmatprep.subr.mxu0 0.0
    %4147 = vmatpush1.msra.mxu0 %v4135
    %4148 = vmatprep.subr.mxu0 0.0
    %4149 = vmatpush1.msra.mxu0 %v4136
    %4150 = vmatprep.subr.mxu0 0.0
    %4151 = vmatpush1.msra.mxu0 %v4137
    %4152 = vmatprep.subr.mxu0 0.0
    %4153 = vmatpush1.msra.mxu0 %v4138
    %4154 = vmatprep.subr.mxu0 0.0
    %4155 = vmatpush1.msra.mxu0 %v4139
    %4156 = vmatprep.subr.mxu0 0.0
    %4157 = vmatpush1.msra.mxu0 %v4140
    %4158 = vmatprep.subr.mxu0 0.0
    %4159 = vmatpush1.msra.mxu0 %v4141
    %4160 = vmatprep.subr.mxu0 0.0
    %4161 = vmatpush1.msra.mxu0 %v4142
    %4162 = vmatprep.subr.mxu0 0.0
    %4163 = vmatpush1.msra.mxu0 0.0
    %4164 = vmatprep.subr.mxu0 0.0
    %4165 = vmatpush1.msra.mxu0 0.0
    %4166 = vmatprep.subr.mxu0 0.0
    %4167 = vmatpush1.msra.mxu0 0.0
    %4168 = vmatprep.subr.mxu0 0.0
    %4169 = vmatpush1.msra.mxu0 0.0
    %4170 = vmatprep.subr.mxu0 0.0
    %4171 = vmatpush1.msra.mxu0 0.0
    %4172 = vmatprep.subr.mxu0 0.0
    %4173 = vmatpush1.msra.mxu0 0.0
    %4174 = vmatprep.subr.mxu0 0.0
    %4175 = vmatpush1.msra.mxu0 0.0
    %4176 = vmatprep.subr.mxu0 0.0
    %4177 = vmatpush1.msra.mxu0 0.0
    %4178 = vmatprep.subr.mxu0 0.0
    %4179 = vmatpush1.msra.mxu0 0.0
    %4180 = vmatprep.subr.mxu0 0.0
    %4181 = vmatpush1.msra.mxu0 0.0
    %4182 = vmatprep.subr.mxu0 0.0
    %4183 = vmatpush1.msra.mxu0 0.0
    %4184 = vmatprep.subr.mxu0 0.0
    %4185 = vmatpush1.msra.mxu0 0.0
    %4186 = vmatprep.subr.mxu0 0.0
    %4187 = vmatpush1.msra.mxu0 0.0
    %4188 = vmatprep.subr.mxu0 0.0
    %4189 = vmatpush1.msra.mxu0 0.0
    %4190 = vmatprep.subr.mxu0 0.0
    %4191 = vmatpush1.msra.mxu0 0.0
    %4192 = vmatprep.subr.mxu0 0.0
    %4193 = vmatpush1.msra.mxu0 0.0
    %4194 = vmatprep.subr.mxu0 0.0
    %4195 = vmatpush1.msra.mxu0 0.0
    %4196 = vmatprep.subr.mxu0 0.0
    %4197 = vmatpush1.msra.mxu0 0.0
    %4198 = vmatprep.subr.mxu0 0.0
    %4199 = vmatpush1.msra.mxu0 0.0
    %4200 = vmatprep.subr.mxu0 0.0
    %4201 = vmatpush1.msra.mxu0 0.0
    %4202 = vmatprep.subr.mxu0 0.0
    %4203 = vmatpush1.msra.mxu0 0.0
    %4204 = vmatprep.subr.mxu0 0.0
    %4205 = vmatpush1.msra.mxu0 0.0
    %4206 = vmatprep.subr.mxu0 0.0
    %4207 = vmatpush1.msra.mxu0 0.0
    %4208 = vmatprep.subr.mxu0 0.0
    %4209 = vmatpush1.msra.mxu0 0.0
    %4210 = vmatprep.mubr.f32.mxu0 0.0
    %4211 = vmatmul.mubr.f32.gmra.mrb[0].mxu0 %v4144
    %v4212 = vpop.f32.mrb[0].mxu0
    %v4213 = vadd.f32 0.0, %v4212
    %v4214 = vpop.f32.mrb[0].mxu0
    %4215 = vdwg.mxu0
    %v4216 = vadd.f32 %v4131, %v4213
    %s4217 = scalar_lea.vmem [#allocation4], 7
    %v4218 = vld [vmem:[%s4217] ss:$40 sm:$0x3]
    %s4219 = scalar_lea.vmem %s7, 256
    %v4220 = vld [vmem:[%s4219] sm:$0xff]
    %v4221 = vld [vmem:[%s4219 + $0x8] sm:$0xff]
    %v4222 = vld [vmem:[%s4219 + $0x10] sm:$0xff]
    %v4223 = vld [vmem:[%s4219 + $0x18] sm:$0xff]
    %v4224 = vld [vmem:[%s4219 + $0x20] sm:$0xff]
    %v4225 = vld [vmem:[%s4219 + $0x28] sm:$0xff]
    %v4226 = vld [vmem:[%s4219 + $0x30] sm:$0xff]
    %v4227 = vld [vmem:[%s4219 + $0x38] sm:$0xff]
    %v4229 = vsel %vm220, %v4218, 0
    %4231 = vmatprep.subr.mxu0 0.0
    %4232 = vmatpush1.msra.mxu0 %v4220
    %4233 = vmatprep.subr.mxu0 0.0
    %4234 = vmatpush1.msra.mxu0 %v4221
    %4235 = vmatprep.subr.mxu0 0.0
    %4236 = vmatpush1.msra.mxu0 %v4222
    %4237 = vmatprep.subr.mxu0 0.0
    %4238 = vmatpush1.msra.mxu0 %v4223
    %4239 = vmatprep.subr.mxu0 0.0
    %4240 = vmatpush1.msra.mxu0 %v4224
    %4241 = vmatprep.subr.mxu0 0.0
    %4242 = vmatpush1.msra.mxu0 %v4225
    %4243 = vmatprep.subr.mxu0 0.0
    %4244 = vmatpush1.msra.mxu0 %v4226
    %4245 = vmatprep.subr.mxu0 0.0
    %4246 = vmatpush1.msra.mxu0 %v4227
    %4247 = vmatprep.subr.mxu0 0.0
    %4248 = vmatpush1.msra.mxu0 0.0
    %4249 = vmatprep.subr.mxu0 0.0
    %4250 = vmatpush1.msra.mxu0 0.0
    %4251 = vmatprep.subr.mxu0 0.0
    %4252 = vmatpush1.msra.mxu0 0.0
    %4253 = vmatprep.subr.mxu0 0.0
    %4254 = vmatpush1.msra.mxu0 0.0
    %4255 = vmatprep.subr.mxu0 0.0
    %4256 = vmatpush1.msra.mxu0 0.0
    %4257 = vmatprep.subr.mxu0 0.0
    %4258 = vmatpush1.msra.mxu0 0.0
    %4259 = vmatprep.subr.mxu0 0.0
    %4260 = vmatpush1.msra.mxu0 0.0
    %4261 = vmatprep.subr.mxu0 0.0
    %4262 = vmatpush1.msra.mxu0 0.0
    %4263 = vmatprep.subr.mxu0 0.0
    %4264 = vmatpush1.msra.mxu0 0.0
    %4265 = vmatprep.subr.mxu0 0.0
    %4266 = vmatpush1.msra.mxu0 0.0
    %4267 = vmatprep.subr.mxu0 0.0
    %4268 = vmatpush1.msra.mxu0 0.0
    %4269 = vmatprep.subr.mxu0 0.0
    %4270 = vmatpush1.msra.mxu0 0.0
    %4271 = vmatprep.subr.mxu0 0.0
    %4272 = vmatpush1.msra.mxu0 0.0
    %4273 = vmatprep.subr.mxu0 0.0
    %4274 = vmatpush1.msra.mxu0 0.0
    %4275 = vmatprep.subr.mxu0 0.0
    %4276 = vmatpush1.msra.mxu0 0.0
    %4277 = vmatprep.subr.mxu0 0.0
    %4278 = vmatpush1.msra.mxu0 0.0
    %4279 = vmatprep.subr.mxu0 0.0
    %4280 = vmatpush1.msra.mxu0 0.0
    %4281 = vmatprep.subr.mxu0 0.0
    %4282 = vmatpush1.msra.mxu0 0.0
    %4283 = vmatprep.subr.mxu0 0.0
    %4284 = vmatpush1.msra.mxu0 0.0
    %4285 = vmatprep.subr.mxu0 0.0
    %4286 = vmatpush1.msra.mxu0 0.0
    %4287 = vmatprep.subr.mxu0 0.0
    %4288 = vmatpush1.msra.mxu0 0.0
    %4289 = vmatprep.subr.mxu0 0.0
    %4290 = vmatpush1.msra.mxu0 0.0
    %4291 = vmatprep.subr.mxu0 0.0
    %4292 = vmatpush1.msra.mxu0 0.0
    %4293 = vmatprep.subr.mxu0 0.0
    %4294 = vmatpush1.msra.mxu0 0.0
    %4295 = vmatprep.mubr.f32.mxu0 0.0
    %4296 = vmatmul.mubr.f32.gmra.mrb[0].mxu0 %v4229
    %v4297 = vpop.f32.mrb[0].mxu0
    %v4298 = vadd.f32 0.0, %v4297
    %v4299 = vpop.f32.mrb[0].mxu0
    %4300 = vdwg.mxu0
    %v4301 = vadd.f32 %v4216, %v4298
    %s4302 = scalar_lea.vmem [#allocation4], 8
    %v4303 = vld [vmem:[%s4302] ss:$40 sm:$0x3]
    %s4304 = scalar_lea.vmem %s7, 320
    %v4305 = vld [vmem:[%s4304] sm:$0xff]
    %v4306 = vld [vmem:[%s4304 + $0x8] sm:$0xff]
    %v4307 = vld [vmem:[%s4304 + $0x10] sm:$0xff]
    %v4308 = vld [vmem:[%s4304 + $0x18] sm:$0xff]
    %v4309 = vld [vmem:[%s4304 + $0x20] sm:$0xff]
    %v4310 = vld [vmem:[%s4304 + $0x28] sm:$0xff]
    %v4311 = vld [vmem:[%s4304 + $0x30] sm:$0xff]
    %v4312 = vld [vmem:[%s4304 + $0x38] sm:$0xff]
    %v4314 = vsel %vm220, %v4303, 0
    %4316 = vmatprep.subr.mxu0 0.0
    %4317 = vmatpush1.msra.mxu0 %v4305
    %4318 = vmatprep.subr.mxu0 0.0
    %4319 = vmatpush1.msra.mxu0 %v4306
    %4320 = vmatprep.subr.mxu0 0.0
    %4321 = vmatpush1.msra.mxu0 %v4307
    %4322 = vmatprep.subr.mxu0 0.0
    %4323 = vmatpush1.msra.mxu0 %v4308
    %4324 = vmatprep.subr.mxu0 0.0
    %4325 = vmatpush1.msra.mxu0 %v4309
    %4326 = vmatprep.subr.mxu0 0.0
    %4327 = vmatpush1.msra.mxu0 %v4310
    %4328 = vmatprep.subr.mxu0 0.0
    %4329 = vmatpush1.msra.mxu0 %v4311
    %4330 = vmatprep.subr.mxu0 0.0
    %4331 = vmatpush1.msra.mxu0 %v4312
    %4332 = vmatprep.subr.mxu0 0.0
    %4333 = vmatpush1.msra.mxu0 0.0
    %4334 = vmatprep.subr.mxu0 0.0
    %4335 = vmatpush1.msra.mxu0 0.0
    %4336 = vmatprep.subr.mxu0 0.0
    %4337 = vmatpush1.msra.mxu0 0.0
    %4338 = vmatprep.subr.mxu0 0.0
    %4339 = vmatpush1.msra.mxu0 0.0
    %4340 = vmatprep.subr.mxu0 0.0
    %4341 = vmatpush1.msra.mxu0 0.0
    %4342 = vmatprep.subr.mxu0 0.0
    %4343 = vmatpush1.msra.mxu0 0.0
    %4344 = vmatprep.subr.mxu0 0.0
    %4345 = vmatpush1.msra.mxu0 0.0
    %4346 = vmatprep.subr.mxu0 0.0
    %4347 = vmatpush1.msra.mxu0 0.0
    %4348 = vmatprep.subr.mxu0 0.0
    %4349 = vmatpush1.msra.mxu0 0.0
    %4350 = vmatprep.subr.mxu0 0.0
    %4351 = vmatpush1.msra.mxu0 0.0
    %4352 = vmatprep.subr.mxu0 0.0
    %4353 = vmatpush1.msra.mxu0 0.0
    %4354 = vmatprep.subr.mxu0 0.0
    %4355 = vmatpush1.msra.mxu0 0.0
    %4356 = vmatprep.subr.mxu0 0.0
    %4357 = vmatpush1.msra.mxu0 0.0
    %4358 = vmatprep.subr.mxu0 0.0
    %4359 = vmatpush1.msra.mxu0 0.0
    %4360 = vmatprep.subr.mxu0 0.0
    %4361 = vmatpush1.msra.mxu0 0.0
    %4362 = vmatprep.subr.mxu0 0.0
    %4363 = vmatpush1.msra.mxu0 0.0
    %4364 = vmatprep.subr.mxu0 0.0
    %4365 = vmatpush1.msra.mxu0 0.0
    %4366 = vmatprep.subr.mxu0 0.0
    %4367 = vmatpush1.msra.mxu0 0.0
    %4368 = vmatprep.subr.mxu0 0.0
    %4369 = vmatpush1.msra.mxu0 0.0
    %4370 = vmatprep.subr.mxu0 0.0
    %4371 = vmatpush1.msra.mxu0 0.0
    %4372 = vmatprep.subr.mxu0 0.0
    %4373 = vmatpush1.msra.mxu0 0.0
    %4374 = vmatprep.subr.mxu0 0.0
    %4375 = vmatpush1.msra.mxu0 0.0
    %4376 = vmatprep.subr.mxu0 0.0
    %4377 = vmatpush1.msra.mxu0 0.0
    %4378 = vmatprep.subr.mxu0 0.0
    %4379 = vmatpush1.msra.mxu0 0.0
    %4380 = vmatprep.mubr.f32.mxu0 0.0
    %4381 = vmatmul.mubr.f32.gmra.mrb[0].mxu0 %v4314
    %v4382 = vpop.f32.mrb[0].mxu0
    %v4383 = vadd.f32 0.0, %v4382
    %v4384 = vpop.f32.mrb[0].mxu0
    %4385 = vdwg.mxu0
    %v4386 = vadd.f32 %v4301, %v4383
    %s4387 = scalar_lea.vmem [#allocation4], 12
    %v4388 = vld [vmem:[%s4387] ss:$40 sm:$0x3]
    %s4389 = scalar_lea.vmem %s7, 384
    %v4390 = vld [vmem:[%s4389] sm:$0xff]
    %v4391 = vld [vmem:[%s4389 + $0x8] sm:$0xff]
    %v4392 = vld [vmem:[%s4389 + $0x10] sm:$0xff]
    %v4393 = vld [vmem:[%s4389 + $0x18] sm:$0xff]
    %v4394 = vld [vmem:[%s4389 + $0x20] sm:$0xff]
    %v4395 = vld [vmem:[%s4389 + $0x28] sm:$0xff]
    %v4396 = vld [vmem:[%s4389 + $0x30] sm:$0xff]
    %v4397 = vld [vmem:[%s4389 + $0x38] sm:$0xff]
    %v4399 = vsel %vm220, %v4388, 0
    %4401 = vmatprep.subr.mxu0 0.0
    %4402 = vmatpush1.msra.mxu0 %v4390
    %4403 = vmatprep.subr.mxu0 0.0
    %4404 = vmatpush1.msra.mxu0 %v4391
    %4405 = vmatprep.subr.mxu0 0.0
    %4406 = vmatpush1.msra.mxu0 %v4392
    %4407 = vmatprep.subr.mxu0 0.0
    %4408 = vmatpush1.msra.mxu0 %v4393
    %4409 = vmatprep.subr.mxu0 0.0
    %4410 = vmatpush1.msra.mxu0 %v4394
    %4411 = vmatprep.subr.mxu0 0.0
    %4412 = vmatpush1.msra.mxu0 %v4395
    %4413 = vmatprep.subr.mxu0 0.0
    %4414 = vmatpush1.msra.mxu0 %v4396
    %4415 = vmatprep.subr.mxu0 0.0
    %4416 = vmatpush1.msra.mxu0 %v4397
    %4417 = vmatprep.subr.mxu0 0.0
    %4418 = vmatpush1.msra.mxu0 0.0
    %4419 = vmatprep.subr.mxu0 0.0
    %4420 = vmatpush1.msra.mxu0 0.0
    %4421 = vmatprep.subr.mxu0 0.0
    %4422 = vmatpush1.msra.mxu0 0.0
    %4423 = vmatprep.subr.mxu0 0.0
    %4424 = vmatpush1.msra.mxu0 0.0
    %4425 = vmatprep.subr.mxu0 0.0
    %4426 = vmatpush1.msra.mxu0 0.0
    %4427 = vmatprep.subr.mxu0 0.0
    %4428 = vmatpush1.msra.mxu0 0.0
    %4429 = vmatprep.subr.mxu0 0.0
    %4430 = vmatpush1.msra.mxu0 0.0
    %4431 = vmatprep.subr.mxu0 0.0
    %4432 = vmatpush1.msra.mxu0 0.0
    %4433 = vmatprep.subr.mxu0 0.0
    %4434 = vmatpush1.msra.mxu0 0.0
    %4435 = vmatprep.subr.mxu0 0.0
    %4436 = vmatpush1.msra.mxu0 0.0
    %4437 = vmatprep.subr.mxu0 0.0
    %4438 = vmatpush1.msra.mxu0 0.0
    %4439 = vmatprep.subr.mxu0 0.0
    %4440 = vmatpush1.msra.mxu0 0.0
    %4441 = vmatprep.subr.mxu0 0.0
    %4442 = vmatpush1.msra.mxu0 0.0
    %4443 = vmatprep.subr.mxu0 0.0
    %4444 = vmatpush1.msra.mxu0 0.0
    %4445 = vmatprep.subr.mxu0 0.0
    %4446 = vmatpush1.msra.mxu0 0.0
    %4447 = vmatprep.subr.mxu0 0.0
    %4448 = vmatpush1.msra.mxu0 0.0
    %4449 = vmatprep.subr.mxu0 0.0
    %4450 = vmatpush1.msra.mxu0 0.0
    %4451 = vmatprep.subr.mxu0 0.0
    %4452 = vmatpush1.msra.mxu0 0.0
    %4453 = vmatprep.subr.mxu0 0.0
    %4454 = vmatpush1.msra.mxu0 0.0
    %4455 = vmatprep.subr.mxu0 0.0
    %4456 = vmatpush1.msra.mxu0 0.0
    %4457 = vmatprep.subr.mxu0 0.0
    %4458 = vmatpush1.msra.mxu0 0.0
    %4459 = vmatprep.subr.mxu0 0.0
    %4460 = vmatpush1.msra.mxu0 0.0
    %4461 = vmatprep.subr.mxu0 0.0
    %4462 = vmatpush1.msra.mxu0 0.0
    %4463 = vmatprep.subr.mxu0 0.0
    %4464 = vmatpush1.msra.mxu0 0.0
    %4465 = vmatprep.mubr.f32.mxu0 0.0
    %4466 = vmatmul.mubr.f32.gmra.mrb[0].mxu0 %v4399
    %v4467 = vpop.f32.mrb[0].mxu0
    %v4468 = vadd.f32 0.0, %v4467
    %v4469 = vpop.f32.mrb[0].mxu0
    %4470 = vdwg.mxu0
    %v4471 = vadd.f32 %v4386, %v4468
    %s4472 = scalar_lea.vmem [#allocation4], 13
    %v4473 = vld [vmem:[%s4472] ss:$40 sm:$0x3]
    %s4474 = scalar_lea.vmem %s7, 448
    %v4475 = vld [vmem:[%s4474] sm:$0xff]
    %v4476 = vld [vmem:[%s4474 + $0x8] sm:$0xff]
    %v4477 = vld [vmem:[%s4474 + $0x10] sm:$0xff]
    %v4478 = vld [vmem:[%s4474 + $0x18] sm:$0xff]
    %v4479 = vld [vmem:[%s4474 + $0x20] sm:$0xff]
    %v4480 = vld [vmem:[%s4474 + $0x28] sm:$0xff]
    %v4481 = vld [vmem:[%s4474 + $0x30] sm:$0xff]
    %v4482 = vld [vmem:[%s4474 + $0x38] sm:$0xff]
    %v4484 = vsel %vm220, %v4473, 0
    %4486 = vmatprep.subr.mxu0 0.0
    %4487 = vmatpush1.msra.mxu0 %v4475
    %4488 = vmatprep.subr.mxu0 0.0
    %4489 = vmatpush1.msra.mxu0 %v4476
    %4490 = vmatprep.subr.mxu0 0.0
    %4491 = vmatpush1.msra.mxu0 %v4477
    %4492 = vmatprep.subr.mxu0 0.0
    %4493 = vmatpush1.msra.mxu0 %v4478
    %4494 = vmatprep.subr.mxu0 0.0
    %4495 = vmatpush1.msra.mxu0 %v4479
    %4496 = vmatprep.subr.mxu0 0.0
    %4497 = vmatpush1.msra.mxu0 %v4480
    %4498 = vmatprep.subr.mxu0 0.0
    %4499 = vmatpush1.msra.mxu0 %v4481
    %4500 = vmatprep.subr.mxu0 0.0
    %4501 = vmatpush1.msra.mxu0 %v4482
    %4502 = vmatprep.subr.mxu0 0.0
    %4503 = vmatpush1.msra.mxu0 0.0
    %4504 = vmatprep.subr.mxu0 0.0
    %4505 = vmatpush1.msra.mxu0 0.0
    %4506 = vmatprep.subr.mxu0 0.0
    %4507 = vmatpush1.msra.mxu0 0.0
    %4508 = vmatprep.subr.mxu0 0.0
    %4509 = vmatpush1.msra.mxu0 0.0
    %4510 = vmatprep.subr.mxu0 0.0
    %4511 = vmatpush1.msra.mxu0 0.0
    %4512 = vmatprep.subr.mxu0 0.0
    %4513 = vmatpush1.msra.mxu0 0.0
    %4514 = vmatprep.subr.mxu0 0.0
    %4515 = vmatpush1.msra.mxu0 0.0
    %4516 = vmatprep.subr.mxu0 0.0
    %4517 = vmatpush1.msra.mxu0 0.0
    %4518 = vmatprep.subr.mxu0 0.0
    %4519 = vmatpush1.msra.mxu0 0.0
    %4520 = vmatprep.subr.mxu0 0.0
    %4521 = vmatpush1.msra.mxu0 0.0
    %4522 = vmatprep.subr.mxu0 0.0
    %4523 = vmatpush1.msra.mxu0 0.0
    %4524 = vmatprep.subr.mxu0 0.0
    %4525 = vmatpush1.msra.mxu0 0.0
    %4526 = vmatprep.subr.mxu0 0.0
    %4527 = vmatpush1.msra.mxu0 0.0
    %4528 = vmatprep.subr.mxu0 0.0
    %4529 = vmatpush1.msra.mxu0 0.0
    %4530 = vmatprep.subr.mxu0 0.0
    %4531 = vmatpush1.msra.mxu0 0.0
    %4532 = vmatprep.subr.mxu0 0.0
    %4533 = vmatpush1.msra.mxu0 0.0
    %4534 = vmatprep.subr.mxu0 0.0
    %4535 = vmatpush1.msra.mxu0 0.0
    %4536 = vmatprep.subr.mxu0 0.0
    %4537 = vmatpush1.msra.mxu0 0.0
    %4538 = vmatprep.subr.mxu0 0.0
    %4539 = vmatpush1.msra.mxu0 0.0
    %4540 = vmatprep.subr.mxu0 0.0
    %4541 = vmatpush1.msra.mxu0 0.0
    %4542 = vmatprep.subr.mxu0 0.0
    %4543 = vmatpush1.msra.mxu0 0.0
    %4544 = vmatprep.subr.mxu0 0.0
    %4545 = vmatpush1.msra.mxu0 0.0
    %4546 = vmatprep.subr.mxu0 0.0
    %4547 = vmatpush1.msra.mxu0 0.0
    %4548 = vmatprep.subr.mxu0 0.0
    %4549 = vmatpush1.msra.mxu0 0.0
    %4550 = vmatprep.mubr.f32.mxu0 0.0
    %4551 = vmatmul.mubr.f32.gmra.mrb[0].mxu0 %v4484
    %v4552 = vpop.f32.mrb[0].mxu0
    %v4553 = vadd.f32 0.0, %v4552
    %v4554 = vpop.f32.mrb[0].mxu0
    %4555 = vdwg.mxu0
    %v4556 = vadd.f32 %v4471, %v4553
    %s4557 = scalar_lea.vmem [#allocation4], 14
    %v4558 = vld [vmem:[%s4557] ss:$40 sm:$0x3]
    %s4559 = scalar_lea.vmem %s7, 512
    %v4560 = vld [vmem:[%s4559] sm:$0xff]
    %v4561 = vld [vmem:[%s4559 + $0x8] sm:$0xff]
    %v4562 = vld [vmem:[%s4559 + $0x10] sm:$0xff]
    %v4563 = vld [vmem:[%s4559 + $0x18] sm:$0xff]
    %v4564 = vld [vmem:[%s4559 + $0x20] sm:$0xff]
    %v4565 = vld [vmem:[%s4559 + $0x28] sm:$0xff]
    %v4566 = vld [vmem:[%s4559 + $0x30] sm:$0xff]
    %v4567 = vld [vmem:[%s4559 + $0x38] sm:$0xff]
    %v4569 = vsel %vm220, %v4558, 0
    %4571 = vmatprep.subr.mxu0 0.0
    %4572 = vmatpush1.msra.mxu0 %v4560
    %4573 = vmatprep.subr.mxu0 0.0
    %4574 = vmatpush1.msra.mxu0 %v4561
    %4575 = vmatprep.subr.mxu0 0.0
    %4576 = vmatpush1.msra.mxu0 %v4562
    %4577 = vmatprep.subr.mxu0 0.0
    %4578 = vmatpush1.msra.mxu0 %v4563
    %4579 = vmatprep.subr.mxu0 0.0
    %4580 = vmatpush1.msra.mxu0 %v4564
    %4581 = vmatprep.subr.mxu0 0.0
    %4582 = vmatpush1.msra.mxu0 %v4565
    %4583 = vmatprep.subr.mxu0 0.0
    %4584 = vmatpush1.msra.mxu0 %v4566
    %4585 = vmatprep.subr.mxu0 0.0
    %4586 = vmatpush1.msra.mxu0 %v4567
    %4587 = vmatprep.subr.mxu0 0.0
    %4588 = vmatpush1.msra.mxu0 0.0
    %4589 = vmatprep.subr.mxu0 0.0
    %4590 = vmatpush1.msra.mxu0 0.0
    %4591 = vmatprep.subr.mxu0 0.0
    %4592 = vmatpush1.msra.mxu0 0.0
    %4593 = vmatprep.subr.mxu0 0.0
    %4594 = vmatpush1.msra.mxu0 0.0
    %4595 = vmatprep.subr.mxu0 0.0
    %4596 = vmatpush1.msra.mxu0 0.0
    %4597 = vmatprep.subr.mxu0 0.0
    %4598 = vmatpush1.msra.mxu0 0.0
    %4599 = vmatprep.subr.mxu0 0.0
    %4600 = vmatpush1.msra.mxu0 0.0
    %4601 = vmatprep.subr.mxu0 0.0
    %4602 = vmatpush1.msra.mxu0 0.0
    %4603 = vmatprep.subr.mxu0 0.0
    %4604 = vmatpush1.msra.mxu0 0.0
    %4605 = vmatprep.subr.mxu0 0.0
    %4606 = vmatpush1.msra.mxu0 0.0
    %4607 = vmatprep.subr.mxu0 0.0
    %4608 = vmatpush1.msra.mxu0 0.0
    %4609 = vmatprep.subr.mxu0 0.0
    %4610 = vmatpush1.msra.mxu0 0.0
    %4611 = vmatprep.subr.mxu0 0.0
    %4612 = vmatpush1.msra.mxu0 0.0
    %4613 = vmatprep.subr.mxu0 0.0
    %4614 = vmatpush1.msra.mxu0 0.0
    %4615 = vmatprep.subr.mxu0 0.0
    %4616 = vmatpush1.msra.mxu0 0.0
    %4617 = vmatprep.subr.mxu0 0.0
    %4618 = vmatpush1.msra.mxu0 0.0
    %4619 = vmatprep.subr.mxu0 0.0
    %4620 = vmatpush1.msra.mxu0 0.0
    %4621 = vmatprep.subr.mxu0 0.0
    %4622 = vmatpush1.msra.mxu0 0.0
    %4623 = vmatprep.subr.mxu0 0.0
    %4624 = vmatpush1.msra.mxu0 0.0
    %4625 = vmatprep.subr.mxu0 0.0
    %4626 = vmatpush1.msra.mxu0 0.0
    %4627 = vmatprep.subr.mxu0 0.0
    %4628 = vmatpush1.msra.mxu0 0.0
    %4629 = vmatprep.subr.mxu0 0.0
    %4630 = vmatpush1.msra.mxu0 0.0
    %4631 = vmatprep.subr.mxu0 0.0
    %4632 = vmatpush1.msra.mxu0 0.0
    %4633 = vmatprep.subr.mxu0 0.0
    %4634 = vmatpush1.msra.mxu0 0.0
    %4635 = vmatprep.mubr.f32.mxu0 0.0
    %4636 = vmatmul.mubr.f32.gmra.mrb[0].mxu0 %v4569
    %v4637 = vpop.f32.mrb[0].mxu0
    %v4638 = vadd.f32 0.0, %v4637
    %v4639 = vpop.f32.mrb[0].mxu0
    %4640 = vdwg.mxu0
    %v4641 = vadd.f32 %v4556, %v4638
    %v4642 = vld [vmem:[%s8] sm:$0x1]
    %v4644 = vlaneseq
    %v4645 = vshrl.u32 %v4644, 7
    %v4646 = vsub.s32 0, %v4645
    %v4647 = vrot.slane %v4642, %v4646
    %v4649 = vadd.f32 %v4641, %v4647
    %v4650 = vmax.f32 %v4649, 0.0
    %v4651 = vld [vmem:[%s9] sm:$0xff]
    %v4652 = vld [vmem:[%s9 + $0x8] sm:$0xff]
    %v4653 = vld [vmem:[%s9 + $0x10] sm:$0xff]
    %v4654 = vld [vmem:[%s9 + $0x18] sm:$0xff]
    %v4655 = vld [vmem:[%s10] sm:$0x1]
    %v4657 = vlaneseq
    %v4658 = vshrl.u32 %v4657, 7
    %v4659 = vsub.s32 0, %v4658
    %v4660 = vrot.slane %v4655, %v4659
    %vm4662 = vcmask 261120
    %v4664 = vsel %vm4662, %v4650, 0
    %4666 = vmatprep.subr.mxu0 0.0
    %4667 = vmatpush1.msra.mxu0 %v4651
    %4668 = vmatprep.subr.mxu0 0.0
    %4669 = vmatpush1.msra.mxu0 %v4652
    %4670 = vmatprep.subr.mxu0 0.0
    %4671 = vmatpush1.msra.mxu0 %v4653
    %4672 = vmatprep.subr.mxu0 0.0
    %4673 = vmatpush1.msra.mxu0 %v4654
    %4674 = vmatprep.subr.mxu0 0.0
    %4675 = vmatpush1.msra.mxu0 0.0
    %4676 = vmatprep.subr.mxu0 0.0
    %4677 = vmatpush1.msra.mxu0 0.0
    %4678 = vmatprep.subr.mxu0 0.0
    %4679 = vmatpush1.msra.mxu0 0.0
    %4680 = vmatprep.subr.mxu0 0.0
    %4681 = vmatpush1.msra.mxu0 0.0
    %4682 = vmatprep.subr.mxu0 0.0
    %4683 = vmatpush1.msra.mxu0 0.0
    %4684 = vmatprep.subr.mxu0 0.0
    %4685 = vmatpush1.msra.mxu0 0.0
    %4686 = vmatprep.subr.mxu0 0.0
    %4687 = vmatpush1.msra.mxu0 0.0
    %4688 = vmatprep.subr.mxu0 0.0
    %4689 = vmatpush1.msra.mxu0 0.0
    %4690 = vmatprep.subr.mxu0 0.0
    %4691 = vmatpush1.msra.mxu0 0.0
    %4692 = vmatprep.subr.mxu0 0.0
    %4693 = vmatpush1.msra.mxu0 0.0
    %4694 = vmatprep.subr.mxu0 0.0
    %4695 = vmatpush1.msra.mxu0 0.0
    %4696 = vmatprep.subr.mxu0 0.0
    %4697 = vmatpush1.msra.mxu0 0.0
    %4698 = vmatprep.subr.mxu0 0.0
    %4699 = vmatpush1.msra.mxu0 0.0
    %4700 = vmatprep.subr.mxu0 0.0
    %4701 = vmatpush1.msra.mxu0 0.0
    %4702 = vmatprep.subr.mxu0 0.0
    %4703 = vmatpush1.msra.mxu0 0.0
    %4704 = vmatprep.subr.mxu0 0.0
    %4705 = vmatpush1.msra.mxu0 0.0
    %4706 = vmatprep.subr.mxu0 0.0
    %4707 = vmatpush1.msra.mxu0 0.0
    %4708 = vmatprep.subr.mxu0 0.0
    %4709 = vmatpush1.msra.mxu0 0.0
    %4710 = vmatprep.subr.mxu0 0.0
    %4711 = vmatpush1.msra.mxu0 0.0
    %4712 = vmatprep.subr.mxu0 0.0
    %4713 = vmatpush1.msra.mxu0 0.0
    %4714 = vmatprep.subr.mxu0 0.0
    %4715 = vmatpush1.msra.mxu0 0.0
    %4716 = vmatprep.subr.mxu0 0.0
    %4717 = vmatpush1.msra.mxu0 0.0
    %4718 = vmatprep.subr.mxu0 0.0
    %4719 = vmatpush1.msra.mxu0 0.0
    %4720 = vmatprep.subr.mxu0 0.0
    %4721 = vmatpush1.msra.mxu0 0.0
    %4722 = vmatprep.subr.mxu0 0.0
    %4723 = vmatpush1.msra.mxu0 0.0
    %4724 = vmatprep.subr.mxu0 0.0
    %4725 = vmatpush1.msra.mxu0 0.0
    %4726 = vmatprep.subr.mxu0 0.0
    %4727 = vmatpush1.msra.mxu0 0.0
    %4728 = vmatprep.subr.mxu0 0.0
    %4729 = vmatpush1.msra.mxu0 0.0
    %4730 = vmatprep.mubr.f32.mxu0 0.0
    %4731 = vmatmul.mubr.f32.gmra.mrb[0].mxu0 %v4664
    %v4732 = vpop.f32.mrb[0].mxu0
    %v4733 = vadd.f32 %v4660, %v4732
    %v4734 = vpop.f32.mrb[0].mxu0
    %4735 = vdwg.mxu0
    %vm4736 = vcmask 74752
    %4737 = vst.msk [vmem:[#allocation5] sm:$0x3] %vm4736, %v4733
    // Predicated region
    $region46: #{cnn_mnist_forward.1} parent=1 // pred_check
      _
    $region47: #{cnn_mnist_forward.1} parent=1 // pred_check_branch
      %4739 = sbr.rel (0) target = $region49
    $region48: #{cnn_mnist_forward.1} parent=1 // pred_region
      %s4741 = ssub.s32 32, 32
      %4742 = vsyncadd [#allocation6], %s4741
      %s4744 = sshll.u32 [#allocation5], 4
      %s4745 = int_to_ptr.vmem [resolvable:$true] %s4744
      %4747 = dma.vmem_to_hbm [thread:$0]  %s4745, 32, %s11, [#allocation6]
    $region49: #{cnn_mnist_forward.1} parent=1 // pred_fallthru
      _
    // Predicated region
    $region50: #{cnn_mnist_forward.1} parent=1 // pred_check
      _
    $region51: #{cnn_mnist_forward.1} parent=1 // pred_check_branch
      %4749 = sbr.rel (0) target = $region53
    $region52: #{cnn_mnist_forward.1} parent=1 // pred_region
      %4750 = dma.done [#allocation6], 32
    $region53: #{cnn_mnist_forward.1} parent=1 // pred_fallthru
      _
    %4751 = vsyncpa [#allocation6], 1

</llo_original>
